<compile_context>
chip_gen: v7x
topology: tpu7x:2x2x1
jax: 0.10.0
libtpu: 0.0.40
codegen_flags: <defaults>
</compile_context>

<pallas_src>
import jax
import jax.numpy as jnp
from jax.experimental import pallas as pl
from jax.experimental.pallas import tpu as pltpu

D_IN = 1280
DIMS = [D_IN, 1024, 512, 128, 16, 1]
H4_PAD = 128           # layer-4 output (== layer-5 input) padded 16 -> 128
OUT_PAD = 128          # layer-5 output padded 1 -> 128 (lane-dense store)
TB_MAX = 512           # batch rows per grid step


def _round_up(x, m):
    return ((x + m - 1) // m) * m


def mlp_kernel(x_ref,
               w1, b1, w2, b2, w3, b3, w4, b4, w5, b5,
               o_ref):
    # Pair split + elementwise multiply (bf16 VPU).
    h = x_ref[:, :D_IN] * x_ref[:, D_IN:]

    # Layers 1..4: bf16 MXU matmuls with f32 accumulation, f32 bias + ReLU.
    h = jnp.dot(h, w1[...], preferred_element_type=jnp.float32) + b1[...]
    h = jnp.maximum(h, 0.0).astype(jnp.bfloat16)
    h = jnp.dot(h, w2[...], preferred_element_type=jnp.float32) + b2[...]
    h = jnp.maximum(h, 0.0).astype(jnp.bfloat16)
    h = jnp.dot(h, w3[...], preferred_element_type=jnp.float32) + b3[...]
    h = jnp.maximum(h, 0.0).astype(jnp.bfloat16)
    h = jnp.dot(h, w4[...], preferred_element_type=jnp.float32) + b4[...]
    h = jnp.maximum(h, 0.0).astype(jnp.bfloat16)

    # Layer 5 (padded 16->128 in, 1->128 out) + sigmoid; lane-dense bf16 store.
    h = jnp.dot(h, w5[...], preferred_element_type=jnp.float32) + b5[...]
    o_ref[...] = jax.nn.sigmoid(h).astype(o_ref.dtype)


@jax.jit
def mlp_forward(x, params):
    """x: (B, 2, 1280) float (bf16 preferred). params: [(W, b)], W:(in,out), b:(1,out)."""
    B = x.shape[0]
    assert x.shape[1] == 2 and x.shape[2] == D_IN

    # Contiguous (B, 2560) bf16 view (no-op cast when the producer already emits bf16).
    x2d = x.reshape(B, 2 * D_IN).astype(jnp.bfloat16)

    # Ragged batch tiling: no jnp.pad of the input (that would cost a full extra
    # HBM read+write pass). The last tile may overhang B; overhang rows are garbage
    # and their output rows are masked / sliced away.
    tb = min(TB_MAX, _round_up(B, 16))
    grid = (pl.cdiv(B, tb),)

    # Lane-dense padding of the narrow tail layers (identical math).
    (w1, b1), (w2, b2), (w3, b3), (w4, b4), (w5, b5) = params
    w4 = jnp.pad(w4, ((0, 0), (0, H4_PAD - DIMS[4])))
    b4 = jnp.pad(b4, ((0, 0), (0, H4_PAD - DIMS[4])))
    w5 = jnp.pad(w5, ((0, H4_PAD - DIMS[4]), (0, OUT_PAD - DIMS[5])))
    b5 = jnp.pad(b5, ((0, 0), (0, OUT_PAD - DIMS[5])))

    flat_params = []
    param_specs = []
    for w, b in ((w1, b1), (w2, b2), (w3, b3), (w4, b4), (w5, b5)):
        w = w.astype(jnp.bfloat16)      # MXU-native
        b = b.astype(jnp.float32)       # bias added to the f32 accumulator
        flat_params += [w, b]
        # Full-block, constant index_map: fetched once and held resident across the
        # whole grid; a single pipeline buffer avoids wasting VMEM on a second copy.
        param_specs.append(pl.BlockSpec(w.shape, lambda i: (0, 0),
                                        pipeline_mode=pl.Buffered(1)))
        param_specs.append(pl.BlockSpec(b.shape, lambda i: (0, 0),
                                        pipeline_mode=pl.Buffered(1)))

    x_spec = pl.BlockSpec((tb, 2 * D_IN), lambda i: (i, 0))
    o_spec = pl.BlockSpec((tb, OUT_PAD), lambda i: (i, 0))

    # Advisory cost estimate for the XLA scheduler around the custom call.
    matmul_macs = (DIMS[0] * DIMS[1] + DIMS[1] * DIMS[2] + DIMS[2] * DIMS[3]
                   + DIMS[3] * H4_PAD + H4_PAD * OUT_PAD)
    cost = pl.CostEstimate(
        flops=2 * B * matmul_macs + B * 2 * D_IN,
        transcendentals=B * OUT_PAD,
        bytes_accessed=B * 2 * D_IN * 2 + 2 * matmul_macs + B * OUT_PAD * 2,
    )

    out = pl.pallas_call(
        mlp_kernel,
        out_shape=jax.ShapeDtypeStruct((B, OUT_PAD), jnp.bfloat16),
        grid_spec=pltpu.PrefetchScalarGridSpec(
            num_scalar_prefetch=0,
            grid=grid,
            in_specs=[x_spec] + param_specs,
            out_specs=o_spec,
        ),
        compiler_params=pltpu.CompilerParams(
            dimension_semantics=("parallel",),     # distinct output block per tile
            vmem_limit_bytes=32 * 1024 * 1024,     # valid on v5e / v6e / v7x
        ),
        cost_estimate=cost,
    )(x2d, *flat_params)

    # Drop the 127 padded output lanes; return f32 like the PyTorch module.
    return out[:B, :1].astype(jnp.float32)


def init_params(key):
    """Deterministic init mirroring nn.Linear's U(-1/sqrt(fan_in), 1/sqrt(fan_in))."""
    params = []
    for i in range(len(DIMS) - 1):
        fan_in, fan_out = DIMS[i], DIMS[i + 1]
        key, kw, kb = jax.random.split(key, 3)
        bound = 1.0 / jnp.sqrt(fan_in)
        w = jax.random.uniform(kw, (fan_in, fan_out), jnp.float32, -bound, bound)
        b = jax.random.uniform(kb, (1, fan_out), jnp.float32, -bound, bound)
        params.append((w, b))
    return params


def reference_forward(x, params):
    """Pure-JAX f32 reference for sanity checking."""
    h = x[:, 0, :] * x[:, 1, :]
    for i, (w, b) in enumerate(params):
        h = h @ w + b
        h = jnp.maximum(h, 0.0) if i < len(params) - 1 else jax.nn.sigmoid(h)
    return h


if __name__ == "__main__":
    key = jax.random.PRNGKey(0)
    kx, kp = jax.random.split(key)

    B = 12  # deliberately not a multiple of the tile: exercises the ragged-tile path
    # Cast at the producer: the kernel's per-row HBM read is bf16.
    x = jax.random.normal(kx, (B, 2, D_IN), jnp.float32).astype(jnp.bfloat16)
    params = init_params(kp)

    out = jax.block_until_ready(mlp_forward(x, params))
    ref = reference_forward(x.astype(jnp.float32), params)

    assert out.shape == (B, 1)
    # bf16 input product + bf16 matmuls + bf16 store -> loosened tolerance vs f32 ref.
    max_err = float(jnp.max(jnp.abs(out - ref)))
    assert jnp.allclose(out, ref, atol=3e-2, rtol=3e-2), \
        f"mismatch vs reference (max abs err {max_err})"

    print("KERNEL_OK")
</pallas_src>

<mosaic_0001>
module attributes {stable_mosaic.version = 11 : i64} {
  func.func @mlp_kernel(%arg0: i32, %arg1: memref<16x2560xbf16, #tpu.memory_space<vmem>>, %arg2: memref<1280x1024xbf16, #tpu.memory_space<vmem>>, %arg3: memref<1x1024xf32, #tpu.memory_space<vmem>>, %arg4: memref<1024x512xbf16, #tpu.memory_space<vmem>>, %arg5: memref<1x512xf32, #tpu.memory_space<vmem>>, %arg6: memref<512x128xbf16, #tpu.memory_space<vmem>>, %arg7: memref<1x128xf32, #tpu.memory_space<vmem>>, %arg8: memref<128x128xbf16, #tpu.memory_space<vmem>>, %arg9: memref<1x128xf32, #tpu.memory_space<vmem>>, %arg10: memref<128x128xbf16, #tpu.memory_space<vmem>>, %arg11: memref<1x128xf32, #tpu.memory_space<vmem>>, %arg12: memref<16x128xbf16, #tpu.memory_space<vmem>>) attributes {dimension_semantics = [#tpu.dimension_semantics<parallel>], iteration_bounds = array<i64: 1>, scalar_prefetch = 0 : i64, scratch_operands = 0 : i64, tpu.core_type = #tpu.core_type<tc>, window_params = [{transform_indices = @transform_0, window_bounds = array<i64: 16, 2560>}, {pipeline_mode = #tpu.pipeline_mode<synchronous>, transform_indices = @transform_1, window_bounds = array<i64: 1280, 1024>}, {pipeline_mode = #tpu.pipeline_mode<synchronous>, transform_indices = @transform_2, window_bounds = array<i64: 1, 1024>}, {pipeline_mode = #tpu.pipeline_mode<synchronous>, transform_indices = @transform_3, window_bounds = array<i64: 1024, 512>}, {pipeline_mode = #tpu.pipeline_mode<synchronous>, transform_indices = @transform_4, window_bounds = array<i64: 1, 512>}, {pipeline_mode = #tpu.pipeline_mode<synchronous>, transform_indices = @transform_5, window_bounds = array<i64: 512, 128>}, {pipeline_mode = #tpu.pipeline_mode<synchronous>, transform_indices = @transform_6, window_bounds = array<i64: 1, 128>}, {pipeline_mode = #tpu.pipeline_mode<synchronous>, transform_indices = @transform_7, window_bounds = array<i64: 128, 128>}, {pipeline_mode = #tpu.pipeline_mode<synchronous>, transform_indices = @transform_8, window_bounds = array<i64: 1, 128>}, {pipeline_mode = #tpu.pipeline_mode<synchronous>, transform_indices = @transform_9, window_bounds = array<i64: 128, 128>}, {pipeline_mode = #tpu.pipeline_mode<synchronous>, transform_indices = @transform_10, window_bounds = array<i64: 1, 128>}, {transform_indices = @transform_11, window_bounds = array<i64: 16, 128>}]} {
    %c0 = arith.constant 0 : index
    %c0_0 = arith.constant 0 : index
    %0 = vector.load %arg1[%c0, %c0_0] : memref<16x2560xbf16, #tpu.memory_space<vmem>>, vector<16x1280xbf16>
    %c0_1 = arith.constant 0 : index
    %c1280 = arith.constant 1280 : index
    %1 = vector.load %arg1[%c0_1, %c1280] : memref<16x2560xbf16, #tpu.memory_space<vmem>>, vector<16x1280xbf16>
    %2 = arith.mulf %0, %1 : vector<16x1280xbf16>
    %c0_2 = arith.constant 0 : index
    %c0_3 = arith.constant 0 : index
    %3 = vector.load %arg2[%c0_2, %c0_3] : memref<1280x1024xbf16, #tpu.memory_space<vmem>>, vector<1280x1024xbf16>
    %cst = arith.constant dense<0.000000e+00> : vector<16x1024xf32>
    %4 = tpu.matmul %2, %3, %cst {dimension_numbers = #tpu.dot_dimension_numbers<[1], [0], [0], [1], [0, 0, 1, 1], [], []>} : vector<16x1280xbf16>, vector<1280x1024xbf16>, vector<16x1024xf32> -> vector<16x1024xf32>
    %c0_4 = arith.constant 0 : index
    %c0_5 = arith.constant 0 : index
    %5 = vector.load %arg3[%c0_4, %c0_5] : memref<1x1024xf32, #tpu.memory_space<vmem>>, vector<1x1024xf32>
    %6 = vector.broadcast %5 : vector<1x1024xf32> to vector<16x1024xf32>
    %7 = arith.addf %4, %6 : vector<16x1024xf32>
    %cst_6 = arith.constant 0.000000e+00 : f32
    %8 = vector.broadcast %cst_6 : f32 to vector<16x1024xf32>
    %9 = arith.maximumf %7, %8 : vector<16x1024xf32>
    %10 = arith.truncf %9 : vector<16x1024xf32> to vector<16x1024xbf16>
    %c0_7 = arith.constant 0 : index
    %c0_8 = arith.constant 0 : index
    %11 = vector.load %arg4[%c0_7, %c0_8] : memref<1024x512xbf16, #tpu.memory_space<vmem>>, vector<1024x512xbf16>
    %cst_9 = arith.constant dense<0.000000e+00> : vector<16x512xf32>
    %12 = tpu.matmul %10, %11, %cst_9 {dimension_numbers = #tpu.dot_dimension_numbers<[1], [0], [0], [1], [0, 0, 1, 1], [], []>} : vector<16x1024xbf16>, vector<1024x512xbf16>, vector<16x512xf32> -> vector<16x512xf32>
    %c0_10 = arith.constant 0 : index
    %c0_11 = arith.constant 0 : index
    %13 = vector.load %arg5[%c0_10, %c0_11] : memref<1x512xf32, #tpu.memory_space<vmem>>, vector<1x512xf32>
    %14 = vector.broadcast %13 : vector<1x512xf32> to vector<16x512xf32>
    %15 = arith.addf %12, %14 : vector<16x512xf32>
    %cst_12 = arith.constant 0.000000e+00 : f32
    %16 = vector.broadcast %cst_12 : f32 to vector<16x512xf32>
    %17 = arith.maximumf %15, %16 : vector<16x512xf32>
    %18 = arith.truncf %17 : vector<16x512xf32> to vector<16x512xbf16>
    %c0_13 = arith.constant 0 : index
    %c0_14 = arith.constant 0 : index
    %19 = vector.load %arg6[%c0_13, %c0_14] : memref<512x128xbf16, #tpu.memory_space<vmem>>, vector<512x128xbf16>
    %cst_15 = arith.constant dense<0.000000e+00> : vector<16x128xf32>
    %20 = tpu.matmul %18, %19, %cst_15 {dimension_numbers = #tpu.dot_dimension_numbers<[1], [0], [0], [1], [0, 0, 1, 1], [], []>} : vector<16x512xbf16>, vector<512x128xbf16>, vector<16x128xf32> -> vector<16x128xf32>
    %c0_16 = arith.constant 0 : index
    %c0_17 = arith.constant 0 : index
    %21 = vector.load %arg7[%c0_16, %c0_17] : memref<1x128xf32, #tpu.memory_space<vmem>>, vector<1x128xf32>
    %22 = vector.broadcast %21 : vector<1x128xf32> to vector<16x128xf32>
    %23 = arith.addf %20, %22 : vector<16x128xf32>
    %cst_18 = arith.constant 0.000000e+00 : f32
    %24 = vector.broadcast %cst_18 : f32 to vector<16x128xf32>
    %25 = arith.maximumf %23, %24 : vector<16x128xf32>
    %26 = arith.truncf %25 : vector<16x128xf32> to vector<16x128xbf16>
    %c0_19 = arith.constant 0 : index
    %c0_20 = arith.constant 0 : index
    %27 = vector.load %arg8[%c0_19, %c0_20] : memref<128x128xbf16, #tpu.memory_space<vmem>>, vector<128x128xbf16>
    %cst_21 = arith.constant dense<0.000000e+00> : vector<16x128xf32>
    %28 = tpu.matmul %26, %27, %cst_21 {dimension_numbers = #tpu.dot_dimension_numbers<[1], [0], [0], [1], [0, 0, 1, 1], [], []>} : vector<16x128xbf16>, vector<128x128xbf16>, vector<16x128xf32> -> vector<16x128xf32>
    %c0_22 = arith.constant 0 : index
    %c0_23 = arith.constant 0 : index
    %29 = vector.load %arg9[%c0_22, %c0_23] : memref<1x128xf32, #tpu.memory_space<vmem>>, vector<1x128xf32>
    %30 = vector.broadcast %29 : vector<1x128xf32> to vector<16x128xf32>
    %31 = arith.addf %28, %30 : vector<16x128xf32>
    %cst_24 = arith.constant 0.000000e+00 : f32
    %32 = vector.broadcast %cst_24 : f32 to vector<16x128xf32>
    %33 = arith.maximumf %31, %32 : vector<16x128xf32>
    %34 = arith.truncf %33 : vector<16x128xf32> to vector<16x128xbf16>
    %c0_25 = arith.constant 0 : index
    %c0_26 = arith.constant 0 : index
    %35 = vector.load %arg10[%c0_25, %c0_26] : memref<128x128xbf16, #tpu.memory_space<vmem>>, vector<128x128xbf16>
    %cst_27 = arith.constant dense<0.000000e+00> : vector<16x128xf32>
    %36 = tpu.matmul %34, %35, %cst_27 {dimension_numbers = #tpu.dot_dimension_numbers<[1], [0], [0], [1], [0, 0, 1, 1], [], []>} : vector<16x128xbf16>, vector<128x128xbf16>, vector<16x128xf32> -> vector<16x128xf32>
    %c0_28 = arith.constant 0 : index
    %c0_29 = arith.constant 0 : index
    %37 = vector.load %arg11[%c0_28, %c0_29] : memref<1x128xf32, #tpu.memory_space<vmem>>, vector<1x128xf32>
    %38 = vector.broadcast %37 : vector<1x128xf32> to vector<16x128xf32>
    %39 = arith.addf %36, %38 : vector<16x128xf32>
    %40 = arith.negf %39 : vector<16x128xf32>
    %41 = math.exp %40 : vector<16x128xf32>
    %cst_30 = arith.constant 1.000000e+00 : f32
    %42 = vector.broadcast %cst_30 : f32 to vector<16x128xf32>
    %43 = arith.addf %42, %41 : vector<16x128xf32>
    %44 = arith.divf %42, %43 : vector<16x128xf32>
    %45 = arith.truncf %44 : vector<16x128xf32> to vector<16x128xbf16>
    %c0_31 = arith.constant 0 : index
    %c0_32 = arith.constant 0 : index
    %46 = vector.load %arg12[%c0_31, %c0_32] : memref<16x128xbf16, #tpu.memory_space<vmem>>, vector<16x128xbf16>
    tpu.vector_store %arg12[%c0_31, %c0_32], %45 {strides = array<i32>} : memref<16x128xbf16, #tpu.memory_space<vmem>>, vector<16x128xbf16>,
    return
  }
  func.func @transform_0(%arg0: i32) -> (i32, i32) {
    %c0_i32 = arith.constant 0 : i32
    %c0_i32_0 = arith.constant 0 : i32
    return %arg0, %c0_i32 : i32, i32
  }
  func.func @transform_1(%arg0: i32) -> (i32, i32) {
    %c0_i32 = arith.constant 0 : i32
    %c0_i32_0 = arith.constant 0 : i32
    %c0_i32_1 = arith.constant 0 : i32
    return %c0_i32, %c0_i32_0 : i32, i32
  }
  func.func @transform_2(%arg0: i32) -> (i32, i32) {
    %c0_i32 = arith.constant 0 : i32
    %c0_i32_0 = arith.constant 0 : i32
    %c0_i32_1 = arith.constant 0 : i32
    return %c0_i32, %c0_i32_0 : i32, i32
  }
  func.func @transform_3(%arg0: i32) -> (i32, i32) {
    %c0_i32 = arith.constant 0 : i32
    %c0_i32_0 = arith.constant 0 : i32
    %c0_i32_1 = arith.constant 0 : i32
    return %c0_i32, %c0_i32_0 : i32, i32
  }
  func.func @transform_4(%arg0: i32) -> (i32, i32) {
    %c0_i32 = arith.constant 0 : i32
    %c0_i32_0 = arith.constant 0 : i32
    %c0_i32_1 = arith.constant 0 : i32
    return %c0_i32, %c0_i32_0 : i32, i32
  }
  func.func @transform_5(%arg0: i32) -> (i32, i32) {
    %c0_i32 = arith.constant 0 : i32
    %c0_i32_0 = arith.constant 0 : i32
    %c0_i32_1 = arith.constant 0 : i32
    return %c0_i32, %c0_i32_0 : i32, i32
  }
  func.func @transform_6(%arg0: i32) -> (i32, i32) {
    %c0_i32 = arith.constant 0 : i32
    %c0_i32_0 = arith.constant 0 : i32
    %c0_i32_1 = arith.constant 0 : i32
    return %c0_i32, %c0_i32_0 : i32, i32
  }
  func.func @transform_7(%arg0: i32) -> (i32, i32) {
    %c0_i32 = arith.constant 0 : i32
    %c0_i32_0 = arith.constant 0 : i32
    %c0_i32_1 = arith.constant 0 : i32
    return %c0_i32, %c0_i32_0 : i32, i32
  }
  func.func @transform_8(%arg0: i32) -> (i32, i32) {
    %c0_i32 = arith.constant 0 : i32
    %c0_i32_0 = arith.constant 0 : i32
    %c0_i32_1 = arith.constant 0 : i32
    return %c0_i32, %c0_i32_0 : i32, i32
  }
  func.func @transform_9(%arg0: i32) -> (i32, i32) {
    %c0_i32 = arith.constant 0 : i32
    %c0_i32_0 = arith.constant 0 : i32
    %c0_i32_1 = arith.constant 0 : i32
    return %c0_i32, %c0_i32_0 : i32, i32
  }
  func.func @transform_10(%arg0: i32) -> (i32, i32) {
    %c0_i32 = arith.constant 0 : i32
    %c0_i32_0 = arith.constant 0 : i32
    %c0_i32_1 = arith.constant 0 : i32
    return %c0_i32, %c0_i32_0 : i32, i32
  }
  func.func @transform_11(%arg0: i32) -> (i32, i32) {
    %c0_i32 = arith.constant 0 : i32
    %c0_i32_0 = arith.constant 0 : i32
    return %arg0, %c0_i32 : i32, i32
  }
}

</mosaic_0001>

<llo_original>
// kernel: mlp_forward.1
$region0: #{mlp_forward.1}
  #allocation0 [shape = 'u32[]', space=smem, size = 0x4, offset = 0x4, fixed_abs, tag = 'smem constant byte address 0x4 - core index']
  #allocation1 [shape = 'u32[144,128]{1,0:T(1,128)}', space=vmem, size = 0x12000, scoped, tag = 'internal scratch']
  %s0 = inlined_call_operand.vmem [shape: bf16[12,2560], index: 0, kind: input, shape index: {}]
  %s1 = inlined_call_operand.vmem [shape: bf16[1280,1024], index: 1, kind: input, shape index: {}]
  %s2 = inlined_call_operand.vmem [shape: f32[1,1024], index: 2, kind: input, shape index: {}]
  %s3 = inlined_call_operand.vmem [shape: bf16[1024,512], index: 3, kind: input, shape index: {}]
  %s4 = inlined_call_operand.vmem [shape: f32[1,512], index: 4, kind: input, shape index: {}]
  %s5 = inlined_call_operand.vmem [shape: bf16[512,128], index: 5, kind: input, shape index: {}]
  %s6 = inlined_call_operand.vmem [shape: f32[1,128], index: 6, kind: input, shape index: {}]
  %s7 = inlined_call_operand.vmem [shape: bf16[128,128], index: 7, kind: input, shape index: {}]
  %s8 = inlined_call_operand.vmem [shape: f32[1,128], index: 8, kind: input, shape index: {}]
  %s9 = inlined_call_operand.vmem [shape: bf16[128,128], index: 9, kind: input, shape index: {}]
  %s10 = inlined_call_operand.vmem [shape: f32[1,128], index: 10, kind: input, shape index: {}]
  %s11 = inlined_call_operand.vmem [shape: bf16[12,128], index: 11, kind: output, shape index: {}]
  %s12 = sld [smem:[#allocation0]]
  $region54: #{mlp_forward.1} parent=0
    _
  %s14 = ssub.s32 1, %s12
  %s15 = scalar_select 0, %s14, %s12
  // Predicated region
  $region2: #{mlp_forward.1} parent=0 // pred_check
    _
  $region3: #{mlp_forward.1} parent=0 // pred_check_branch
    %17 = sbr.rel (0) target = $region5
  $region4: #{mlp_forward.1} parent=0 // pred_region
    _
  $region5: #{mlp_forward.1} parent=0 // pred_fallthru
    _
  // Predicated region
  $region6: #{mlp_forward.1} parent=0 // pred_check
    _
  $region7: #{mlp_forward.1} parent=0 // pred_check_branch
    %19 = sbr.rel (0) target = $region9
  $region8: #{mlp_forward.1} parent=0 // pred_region
    _
  $region9: #{mlp_forward.1} parent=0 // pred_fallthru
    _
  // Predicated region
  $region10: #{mlp_forward.1} parent=0 // pred_check
    _
  $region11: #{mlp_forward.1} parent=0 // pred_check_branch
    %21 = sbr.rel (0) target = $region13
  $region12: #{mlp_forward.1} parent=0 // pred_region
    _
  $region13: #{mlp_forward.1} parent=0 // pred_fallthru
    _
  // Predicated region
  $region14: #{mlp_forward.1} parent=0 // pred_check
    _
  $region15: #{mlp_forward.1} parent=0 // pred_check_branch
    %23 = sbr.rel (0) target = $region17
  $region16: #{mlp_forward.1} parent=0 // pred_region
    _
  $region17: #{mlp_forward.1} parent=0 // pred_fallthru
    _
  // Predicated region
  $region18: #{mlp_forward.1} parent=0 // pred_check
    _
  $region19: #{mlp_forward.1} parent=0 // pred_check_branch
    %25 = sbr.rel (0) target = $region21
  $region20: #{mlp_forward.1} parent=0 // pred_region
    _
  $region21: #{mlp_forward.1} parent=0 // pred_fallthru
    _
  // Predicated region
  $region22: #{mlp_forward.1} parent=0 // pred_check
    _
  $region23: #{mlp_forward.1} parent=0 // pred_check_branch
    %27 = sbr.rel (0) target = $region25
  $region24: #{mlp_forward.1} parent=0 // pred_region
    _
  $region25: #{mlp_forward.1} parent=0 // pred_fallthru
    _
  // Predicated region
  $region26: #{mlp_forward.1} parent=0 // pred_check
    _
  $region27: #{mlp_forward.1} parent=0 // pred_check_branch
    %29 = sbr.rel (0) target = $region29
  $region28: #{mlp_forward.1} parent=0 // pred_region
    _
  $region29: #{mlp_forward.1} parent=0 // pred_fallthru
    _
  // Predicated region
  $region30: #{mlp_forward.1} parent=0 // pred_check
    _
  $region31: #{mlp_forward.1} parent=0 // pred_check_branch
    %31 = sbr.rel (0) target = $region33
  $region32: #{mlp_forward.1} parent=0 // pred_region
    _
  $region33: #{mlp_forward.1} parent=0 // pred_fallthru
    _
  // Predicated region
  $region34: #{mlp_forward.1} parent=0 // pred_check
    _
  $region35: #{mlp_forward.1} parent=0 // pred_check_branch
    %33 = sbr.rel (0) target = $region37
  $region36: #{mlp_forward.1} parent=0 // pred_region
    _
  $region37: #{mlp_forward.1} parent=0 // pred_fallthru
    _
  // Predicated region
  $region38: #{mlp_forward.1} parent=0 // pred_check
    _
  $region39: #{mlp_forward.1} parent=0 // pred_check_branch
    %35 = sbr.rel (0) target = $region41
  $region40: #{mlp_forward.1} parent=0 // pred_region
    _
  $region41: #{mlp_forward.1} parent=0 // pred_fallthru
    _
  // Predicated region
  $region42: #{mlp_forward.1} parent=0 // pred_check
    _
  $region43: #{mlp_forward.1} parent=0 // pred_check_branch
    %37 = sbr.rel (0) target = $region45
  $region44: #{mlp_forward.1} parent=0 // pred_region
    _
  $region45: #{mlp_forward.1} parent=0 // pred_fallthru
    _
  %v39 = vld [vmem:[%s0] sm:$0xff]
  %v40 = vld [vmem:[%s0 + $0x8] sm:$0xff]
  %v41 = vld [vmem:[%s0 + $0x10] sm:$0xff]
  %v42 = vld [vmem:[%s0 + $0x18] sm:$0xff]
  %v43 = vld [vmem:[%s0 + $0x20] sm:$0xff]
  %v44 = vld [vmem:[%s0 + $0x50] sm:$0xff]
  %v45 = vld [vmem:[%s0 + $0x58] sm:$0xff]
  %v46 = vld [vmem:[%s0 + $0x60] sm:$0xff]
  %v47 = vld [vmem:[%s0 + $0x68] sm:$0xff]
  %v48 = vld [vmem:[%s0 + $0x70] sm:$0xff]
  %v49 = vld [vmem:[%s0 + $0x28] sm:$0xff]
  %v50 = vld [vmem:[%s0 + $0x30] sm:$0xff]
  %v51 = vld [vmem:[%s0 + $0x38] sm:$0xff]
  %v52 = vld [vmem:[%s0 + $0x40] sm:$0xff]
  %v53 = vld [vmem:[%s0 + $0x48] sm:$0xff]
  %v54 = vld [vmem:[%s0 + $0x78] sm:$0xff]
  %v55 = vld [vmem:[%s0 + $0x80] sm:$0xff]
  %v56 = vld [vmem:[%s0 + $0x88] sm:$0xff]
  %v57 = vld [vmem:[%s0 + $0x90] sm:$0xff]
  %v58 = vld [vmem:[%s0 + $0x98] sm:$0xff]
  %v59 = vmul.bf16 %v39, %v49
  %v60 = vmul.bf16 %v40, %v50
  %v61 = vmul.bf16 %v41, %v51
  %v62 = vmul.bf16 %v42, %v52
  %v63 = vmul.bf16 %v43, %v53
  %v64 = vmul.bf16 %v44, %v54
  %v65 = vmul.bf16 %v45, %v55
  %v66 = vmul.bf16 %v46, %v56
  %v67 = vmul.bf16 %v47, %v57
  %v68 = vmul.bf16 %v48, %v58
  %v69 = vld [vmem:[%s1] sm:$0xff]
  %v70 = vld [vmem:[%s1 + $0x8] sm:$0xff]
  %v71 = vld [vmem:[%s1 + $0x10] sm:$0xff]
  %v72 = vld [vmem:[%s1 + $0x18] sm:$0xff]
  %v73 = vld [vmem:[%s1 + $0x20] sm:$0xff]
  %v74 = vld [vmem:[%s1 + $0x28] sm:$0xff]
  %v75 = vld [vmem:[%s1 + $0x30] sm:$0xff]
  %v76 = vld [vmem:[%s1 + $0x38] sm:$0xff]
  %v77 = vld [vmem:[%s1 + $0x40] sm:$0xff]
  %v78 = vld [vmem:[%s1 + $0x48] sm:$0xff]
  %v79 = vld [vmem:[%s1 + $0x50] sm:$0xff]
  %v80 = vld [vmem:[%s1 + $0x58] sm:$0xff]
  %v81 = vld [vmem:[%s1 + $0x60] sm:$0xff]
  %v82 = vld [vmem:[%s1 + $0x68] sm:$0xff]
  %v83 = vld [vmem:[%s1 + $0x70] sm:$0xff]
  %v84 = vld [vmem:[%s1 + $0x78] sm:$0xff]
  %v85 = vld [vmem:[%s1 + $0x80] sm:$0xff]
  %v86 = vld [vmem:[%s1 + $0x88] sm:$0xff]
  %v87 = vld [vmem:[%s1 + $0x90] sm:$0xff]
  %v88 = vld [vmem:[%s1 + $0x98] sm:$0xff]
  %v89 = vld [vmem:[%s1 + $0xa0] sm:$0xff]
  %v90 = vld [vmem:[%s1 + $0xa8] sm:$0xff]
  %v91 = vld [vmem:[%s1 + $0xb0] sm:$0xff]
  %v92 = vld [vmem:[%s1 + $0xb8] sm:$0xff]
  %v93 = vld [vmem:[%s1 + $0xc0] sm:$0xff]
  %v94 = vld [vmem:[%s1 + $0xc8] sm:$0xff]
  %v95 = vld [vmem:[%s1 + $0xd0] sm:$0xff]
  %v96 = vld [vmem:[%s1 + $0xd8] sm:$0xff]
  %v97 = vld [vmem:[%s1 + $0xe0] sm:$0xff]
  %v98 = vld [vmem:[%s1 + $0xe8] sm:$0xff]
  %v99 = vld [vmem:[%s1 + $0xf0] sm:$0xff]
  %v100 = vld [vmem:[%s1 + $0xf8] sm:$0xff]
  %v101 = vld [vmem:[%s1 + $0x100] sm:$0xff]
  %v102 = vld [vmem:[%s1 + $0x108] sm:$0xff]
  %v103 = vld [vmem:[%s1 + $0x110] sm:$0xff]
  %v104 = vld [vmem:[%s1 + $0x118] sm:$0xff]
  %v105 = vld [vmem:[%s1 + $0x120] sm:$0xff]
  %v106 = vld [vmem:[%s1 + $0x128] sm:$0xff]
  %v107 = vld [vmem:[%s1 + $0x130] sm:$0xff]
  %v108 = vld [vmem:[%s1 + $0x138] sm:$0xff]
  %v109 = vld [vmem:[%s1 + $0x140] sm:$0xff]
  %v110 = vld [vmem:[%s1 + $0x148] sm:$0xff]
  %v111 = vld [vmem:[%s1 + $0x150] sm:$0xff]
  %v112 = vld [vmem:[%s1 + $0x158] sm:$0xff]
  %v113 = vld [vmem:[%s1 + $0x160] sm:$0xff]
  %v114 = vld [vmem:[%s1 + $0x168] sm:$0xff]
  %v115 = vld [vmem:[%s1 + $0x170] sm:$0xff]
  %v116 = vld [vmem:[%s1 + $0x178] sm:$0xff]
  %v117 = vld [vmem:[%s1 + $0x180] sm:$0xff]
  %v118 = vld [vmem:[%s1 + $0x188] sm:$0xff]
  %v119 = vld [vmem:[%s1 + $0x190] sm:$0xff]
  %v120 = vld [vmem:[%s1 + $0x198] sm:$0xff]
  %v121 = vld [vmem:[%s1 + $0x1a0] sm:$0xff]
  %v122 = vld [vmem:[%s1 + $0x1a8] sm:$0xff]
  %v123 = vld [vmem:[%s1 + $0x1b0] sm:$0xff]
  %v124 = vld [vmem:[%s1 + $0x1b8] sm:$0xff]
  %v125 = vld [vmem:[%s1 + $0x1c0] sm:$0xff]
  %v126 = vld [vmem:[%s1 + $0x1c8] sm:$0xff]
  %v127 = vld [vmem:[%s1 + $0x1d0] sm:$0xff]
  %v128 = vld [vmem:[%s1 + $0x1d8] sm:$0xff]
  %v129 = vld [vmem:[%s1 + $0x1e0] sm:$0xff]
  %v130 = vld [vmem:[%s1 + $0x1e8] sm:$0xff]
  %v131 = vld [vmem:[%s1 + $0x1f0] sm:$0xff]
  %v132 = vld [vmem:[%s1 + $0x1f8] sm:$0xff]
  %v133 = vld [vmem:[%s1 + $0x200] sm:$0xff]
  %v134 = vld [vmem:[%s1 + $0x208] sm:$0xff]
  %v135 = vld [vmem:[%s1 + $0x210] sm:$0xff]
  %v136 = vld [vmem:[%s1 + $0x218] sm:$0xff]
  %v137 = vld [vmem:[%s1 + $0x220] sm:$0xff]
  %v138 = vld [vmem:[%s1 + $0x228] sm:$0xff]
  %v139 = vld [vmem:[%s1 + $0x230] sm:$0xff]
  %v140 = vld [vmem:[%s1 + $0x238] sm:$0xff]
  %v141 = vld [vmem:[%s1 + $0x240] sm:$0xff]
  %v142 = vld [vmem:[%s1 + $0x248] sm:$0xff]
  %v143 = vld [vmem:[%s1 + $0x250] sm:$0xff]
  %v144 = vld [vmem:[%s1 + $0x258] sm:$0xff]
  %v145 = vld [vmem:[%s1 + $0x260] sm:$0xff]
  %v146 = vld [vmem:[%s1 + $0x268] sm:$0xff]
  %v147 = vld [vmem:[%s1 + $0x270] sm:$0xff]
  %v148 = vld [vmem:[%s1 + $0x278] sm:$0xff]
  %v149 = vld [vmem:[%s1 + $0x280] sm:$0xff]
  %v150 = vld [vmem:[%s1 + $0x288] sm:$0xff]
  %v151 = vld [vmem:[%s1 + $0x290] sm:$0xff]
  %v152 = vld [vmem:[%s1 + $0x298] sm:$0xff]
  %v153 = vld [vmem:[%s1 + $0x2a0] sm:$0xff]
  %v154 = vld [vmem:[%s1 + $0x2a8] sm:$0xff]
  %v155 = vld [vmem:[%s1 + $0x2b0] sm:$0xff]
  %v156 = vld [vmem:[%s1 + $0x2b8] sm:$0xff]
  %v157 = vld [vmem:[%s1 + $0x2c0] sm:$0xff]
  %v158 = vld [vmem:[%s1 + $0x2c8] sm:$0xff]
  %v159 = vld [vmem:[%s1 + $0x2d0] sm:$0xff]
  %v160 = vld [vmem:[%s1 + $0x2d8] sm:$0xff]
  %v161 = vld [vmem:[%s1 + $0x2e0] sm:$0xff]
  %v162 = vld [vmem:[%s1 + $0x2e8] sm:$0xff]
  %v163 = vld [vmem:[%s1 + $0x2f0] sm:$0xff]
  %v164 = vld [vmem:[%s1 + $0x2f8] sm:$0xff]
  %v165 = vld [vmem:[%s1 + $0x300] sm:$0xff]
  %v166 = vld [vmem:[%s1 + $0x308] sm:$0xff]
  %v167 = vld [vmem:[%s1 + $0x310] sm:$0xff]
  %v168 = vld [vmem:[%s1 + $0x318] sm:$0xff]
  %v169 = vld [vmem:[%s1 + $0x320] sm:$0xff]
  %v170 = vld [vmem:[%s1 + $0x328] sm:$0xff]
  %v171 = vld [vmem:[%s1 + $0x330] sm:$0xff]
  %v172 = vld [vmem:[%s1 + $0x338] sm:$0xff]
  %v173 = vld [vmem:[%s1 + $0x340] sm:$0xff]
  %v174 = vld [vmem:[%s1 + $0x348] sm:$0xff]
  %v175 = vld [vmem:[%s1 + $0x350] sm:$0xff]
  %v176 = vld [vmem:[%s1 + $0x358] sm:$0xff]
  %v177 = vld [vmem:[%s1 + $0x360] sm:$0xff]
  %v178 = vld [vmem:[%s1 + $0x368] sm:$0xff]
  %v179 = vld [vmem:[%s1 + $0x370] sm:$0xff]
  %v180 = vld [vmem:[%s1 + $0x378] sm:$0xff]
  %v181 = vld [vmem:[%s1 + $0x380] sm:$0xff]
  %v182 = vld [vmem:[%s1 + $0x388] sm:$0xff]
  %v183 = vld [vmem:[%s1 + $0x390] sm:$0xff]
  %v184 = vld [vmem:[%s1 + $0x398] sm:$0xff]
  %v185 = vld [vmem:[%s1 + $0x3a0] sm:$0xff]
  %v186 = vld [vmem:[%s1 + $0x3a8] sm:$0xff]
  %v187 = vld [vmem:[%s1 + $0x3b0] sm:$0xff]
  %v188 = vld [vmem:[%s1 + $0x3b8] sm:$0xff]
  %v189 = vld [vmem:[%s1 + $0x3c0] sm:$0xff]
  %v190 = vld [vmem:[%s1 + $0x3c8] sm:$0xff]
  %v191 = vld [vmem:[%s1 + $0x3d0] sm:$0xff]
  %v192 = vld [vmem:[%s1 + $0x3d8] sm:$0xff]
  %v193 = vld [vmem:[%s1 + $0x3e0] sm:$0xff]
  %v194 = vld [vmem:[%s1 + $0x3e8] sm:$0xff]
  %v195 = vld [vmem:[%s1 + $0x3f0] sm:$0xff]
  %v196 = vld [vmem:[%s1 + $0x3f8] sm:$0xff]
  %v197 = vld [vmem:[%s1 + $0x400] sm:$0xff]
  %v198 = vld [vmem:[%s1 + $0x408] sm:$0xff]
  %v199 = vld [vmem:[%s1 + $0x410] sm:$0xff]
  %v200 = vld [vmem:[%s1 + $0x418] sm:$0xff]
  %v201 = vld [vmem:[%s1 + $0x420] sm:$0xff]
  %v202 = vld [vmem:[%s1 + $0x428] sm:$0xff]
  %v203 = vld [vmem:[%s1 + $0x430] sm:$0xff]
  %v204 = vld [vmem:[%s1 + $0x438] sm:$0xff]
  %v205 = vld [vmem:[%s1 + $0x440] sm:$0xff]
  %v206 = vld [vmem:[%s1 + $0x448] sm:$0xff]
  %v207 = vld [vmem:[%s1 + $0x450] sm:$0xff]
  %v208 = vld [vmem:[%s1 + $0x458] sm:$0xff]
  %v209 = vld [vmem:[%s1 + $0x460] sm:$0xff]
  %v210 = vld [vmem:[%s1 + $0x468] sm:$0xff]
  %v211 = vld [vmem:[%s1 + $0x470] sm:$0xff]
  %v212 = vld [vmem:[%s1 + $0x478] sm:$0xff]
  %v213 = vld [vmem:[%s1 + $0x480] sm:$0xff]
  %v214 = vld [vmem:[%s1 + $0x488] sm:$0xff]
  %v215 = vld [vmem:[%s1 + $0x490] sm:$0xff]
  %v216 = vld [vmem:[%s1 + $0x498] sm:$0xff]
  %v217 = vld [vmem:[%s1 + $0x4a0] sm:$0xff]
  %v218 = vld [vmem:[%s1 + $0x4a8] sm:$0xff]
  %v219 = vld [vmem:[%s1 + $0x4b0] sm:$0xff]
  %v220 = vld [vmem:[%s1 + $0x4b8] sm:$0xff]
  %v221 = vld [vmem:[%s1 + $0x4c0] sm:$0xff]
  %v222 = vld [vmem:[%s1 + $0x4c8] sm:$0xff]
  %v223 = vld [vmem:[%s1 + $0x4d0] sm:$0xff]
  %v224 = vld [vmem:[%s1 + $0x4d8] sm:$0xff]
  %v225 = vld [vmem:[%s1 + $0x4e0] sm:$0xff]
  %v226 = vld [vmem:[%s1 + $0x4e8] sm:$0xff]
  %v227 = vld [vmem:[%s1 + $0x4f0] sm:$0xff]
  %v228 = vld [vmem:[%s1 + $0x4f8] sm:$0xff]
  %v229 = vld [vmem:[%s1 + $0x500] sm:$0xff]
  %v230 = vld [vmem:[%s1 + $0x508] sm:$0xff]
  %v231 = vld [vmem:[%s1 + $0x510] sm:$0xff]
  %v232 = vld [vmem:[%s1 + $0x518] sm:$0xff]
  %v233 = vld [vmem:[%s1 + $0x520] sm:$0xff]
  %v234 = vld [vmem:[%s1 + $0x528] sm:$0xff]
  %v235 = vld [vmem:[%s1 + $0x530] sm:$0xff]
  %v236 = vld [vmem:[%s1 + $0x538] sm:$0xff]
  %v237 = vld [vmem:[%s1 + $0x540] sm:$0xff]
  %v238 = vld [vmem:[%s1 + $0x548] sm:$0xff]
  %v239 = vld [vmem:[%s1 + $0x550] sm:$0xff]
  %v240 = vld [vmem:[%s1 + $0x558] sm:$0xff]
  %v241 = vld [vmem:[%s1 + $0x560] sm:$0xff]
  %v242 = vld [vmem:[%s1 + $0x568] sm:$0xff]
  %v243 = vld [vmem:[%s1 + $0x570] sm:$0xff]
  %v244 = vld [vmem:[%s1 + $0x578] sm:$0xff]
  %v245 = vld [vmem:[%s1 + $0x580] sm:$0xff]
  %v246 = vld [vmem:[%s1 + $0x588] sm:$0xff]
  %v247 = vld [vmem:[%s1 + $0x590] sm:$0xff]
  %v248 = vld [vmem:[%s1 + $0x598] sm:$0xff]
  %v249 = vld [vmem:[%s1 + $0x5a0] sm:$0xff]
  %v250 = vld [vmem:[%s1 + $0x5a8] sm:$0xff]
  %v251 = vld [vmem:[%s1 + $0x5b0] sm:$0xff]
  %v252 = vld [vmem:[%s1 + $0x5b8] sm:$0xff]
  %v253 = vld [vmem:[%s1 + $0x5c0] sm:$0xff]
  %v254 = vld [vmem:[%s1 + $0x5c8] sm:$0xff]
  %v255 = vld [vmem:[%s1 + $0x5d0] sm:$0xff]
  %v256 = vld [vmem:[%s1 + $0x5d8] sm:$0xff]
  %v257 = vld [vmem:[%s1 + $0x5e0] sm:$0xff]
  %v258 = vld [vmem:[%s1 + $0x5e8] sm:$0xff]
  %v259 = vld [vmem:[%s1 + $0x5f0] sm:$0xff]
  %v260 = vld [vmem:[%s1 + $0x5f8] sm:$0xff]
  %v261 = vld [vmem:[%s1 + $0x600] sm:$0xff]
  %v262 = vld [vmem:[%s1 + $0x608] sm:$0xff]
  %v263 = vld [vmem:[%s1 + $0x610] sm:$0xff]
  %v264 = vld [vmem:[%s1 + $0x618] sm:$0xff]
  %v265 = vld [vmem:[%s1 + $0x620] sm:$0xff]
  %v266 = vld [vmem:[%s1 + $0x628] sm:$0xff]
  %v267 = vld [vmem:[%s1 + $0x630] sm:$0xff]
  %v268 = vld [vmem:[%s1 + $0x638] sm:$0xff]
  %v269 = vld [vmem:[%s1 + $0x640] sm:$0xff]
  %v270 = vld [vmem:[%s1 + $0x648] sm:$0xff]
  %v271 = vld [vmem:[%s1 + $0x650] sm:$0xff]
  %v272 = vld [vmem:[%s1 + $0x658] sm:$0xff]
  %v273 = vld [vmem:[%s1 + $0x660] sm:$0xff]
  %v274 = vld [vmem:[%s1 + $0x668] sm:$0xff]
  %v275 = vld [vmem:[%s1 + $0x670] sm:$0xff]
  %v276 = vld [vmem:[%s1 + $0x678] sm:$0xff]
  %v277 = vld [vmem:[%s1 + $0x680] sm:$0xff]
  %v278 = vld [vmem:[%s1 + $0x688] sm:$0xff]
  %v279 = vld [vmem:[%s1 + $0x690] sm:$0xff]
  %v280 = vld [vmem:[%s1 + $0x698] sm:$0xff]
  %v281 = vld [vmem:[%s1 + $0x6a0] sm:$0xff]
  %v282 = vld [vmem:[%s1 + $0x6a8] sm:$0xff]
  %v283 = vld [vmem:[%s1 + $0x6b0] sm:$0xff]
  %v284 = vld [vmem:[%s1 + $0x6b8] sm:$0xff]
  %v285 = vld [vmem:[%s1 + $0x6c0] sm:$0xff]
  %v286 = vld [vmem:[%s1 + $0x6c8] sm:$0xff]
  %v287 = vld [vmem:[%s1 + $0x6d0] sm:$0xff]
  %v288 = vld [vmem:[%s1 + $0x6d8] sm:$0xff]
  %v289 = vld [vmem:[%s1 + $0x6e0] sm:$0xff]
  %v290 = vld [vmem:[%s1 + $0x6e8] sm:$0xff]
  %v291 = vld [vmem:[%s1 + $0x6f0] sm:$0xff]
  %v292 = vld [vmem:[%s1 + $0x6f8] sm:$0xff]
  %v293 = vld [vmem:[%s1 + $0x700] sm:$0xff]
  %v294 = vld [vmem:[%s1 + $0x708] sm:$0xff]
  %v295 = vld [vmem:[%s1 + $0x710] sm:$0xff]
  %v296 = vld [vmem:[%s1 + $0x718] sm:$0xff]
  %v297 = vld [vmem:[%s1 + $0x720] sm:$0xff]
  %v298 = vld [vmem:[%s1 + $0x728] sm:$0xff]
  %v299 = vld [vmem:[%s1 + $0x730] sm:$0xff]
  %v300 = vld [vmem:[%s1 + $0x738] sm:$0xff]
  %v301 = vld [vmem:[%s1 + $0x740] sm:$0xff]
  %v302 = vld [vmem:[%s1 + $0x748] sm:$0xff]
  %v303 = vld [vmem:[%s1 + $0x750] sm:$0xff]
  %v304 = vld [vmem:[%s1 + $0x758] sm:$0xff]
  %v305 = vld [vmem:[%s1 + $0x760] sm:$0xff]
  %v306 = vld [vmem:[%s1 + $0x768] sm:$0xff]
  %v307 = vld [vmem:[%s1 + $0x770] sm:$0xff]
  %v308 = vld [vmem:[%s1 + $0x778] sm:$0xff]
  %v309 = vld [vmem:[%s1 + $0x780] sm:$0xff]
  %v310 = vld [vmem:[%s1 + $0x788] sm:$0xff]
  %v311 = vld [vmem:[%s1 + $0x790] sm:$0xff]
  %v312 = vld [vmem:[%s1 + $0x798] sm:$0xff]
  %v313 = vld [vmem:[%s1 + $0x7a0] sm:$0xff]
  %v314 = vld [vmem:[%s1 + $0x7a8] sm:$0xff]
  %v315 = vld [vmem:[%s1 + $0x7b0] sm:$0xff]
  %v316 = vld [vmem:[%s1 + $0x7b8] sm:$0xff]
  %v317 = vld [vmem:[%s1 + $0x7c0] sm:$0xff]
  %v318 = vld [vmem:[%s1 + $0x7c8] sm:$0xff]
  %v319 = vld [vmem:[%s1 + $0x7d0] sm:$0xff]
  %v320 = vld [vmem:[%s1 + $0x7d8] sm:$0xff]
  %v321 = vld [vmem:[%s1 + $0x7e0] sm:$0xff]
  %v322 = vld [vmem:[%s1 + $0x7e8] sm:$0xff]
  %v323 = vld [vmem:[%s1 + $0x7f0] sm:$0xff]
  %v324 = vld [vmem:[%s1 + $0x7f8] sm:$0xff]
  %v325 = vld [vmem:[%s1 + $0x800] sm:$0xff]
  %v326 = vld [vmem:[%s1 + $0x808] sm:$0xff]
  %v327 = vld [vmem:[%s1 + $0x810] sm:$0xff]
  %v328 = vld [vmem:[%s1 + $0x818] sm:$0xff]
  %v329 = vld [vmem:[%s1 + $0x820] sm:$0xff]
  %v330 = vld [vmem:[%s1 + $0x828] sm:$0xff]
  %v331 = vld [vmem:[%s1 + $0x830] sm:$0xff]
  %v332 = vld [vmem:[%s1 + $0x838] sm:$0xff]
  %v333 = vld [vmem:[%s1 + $0x840] sm:$0xff]
  %v334 = vld [vmem:[%s1 + $0x848] sm:$0xff]
  %v335 = vld [vmem:[%s1 + $0x850] sm:$0xff]
  %v336 = vld [vmem:[%s1 + $0x858] sm:$0xff]
  %v337 = vld [vmem:[%s1 + $0x860] sm:$0xff]
  %v338 = vld [vmem:[%s1 + $0x868] sm:$0xff]
  %v339 = vld [vmem:[%s1 + $0x870] sm:$0xff]
  %v340 = vld [vmem:[%s1 + $0x878] sm:$0xff]
  %v341 = vld [vmem:[%s1 + $0x880] sm:$0xff]
  %v342 = vld [vmem:[%s1 + $0x888] sm:$0xff]
  %v343 = vld [vmem:[%s1 + $0x890] sm:$0xff]
  %v344 = vld [vmem:[%s1 + $0x898] sm:$0xff]
  %v345 = vld [vmem:[%s1 + $0x8a0] sm:$0xff]
  %v346 = vld [vmem:[%s1 + $0x8a8] sm:$0xff]
  %v347 = vld [vmem:[%s1 + $0x8b0] sm:$0xff]
  %v348 = vld [vmem:[%s1 + $0x8b8] sm:$0xff]
  %v349 = vld [vmem:[%s1 + $0x8c0] sm:$0xff]
  %v350 = vld [vmem:[%s1 + $0x8c8] sm:$0xff]
  %v351 = vld [vmem:[%s1 + $0x8d0] sm:$0xff]
  %v352 = vld [vmem:[%s1 + $0x8d8] sm:$0xff]
  %v353 = vld [vmem:[%s1 + $0x8e0] sm:$0xff]
  %v354 = vld [vmem:[%s1 + $0x8e8] sm:$0xff]
  %v355 = vld [vmem:[%s1 + $0x8f0] sm:$0xff]
  %v356 = vld [vmem:[%s1 + $0x8f8] sm:$0xff]
  %v357 = vld [vmem:[%s1 + $0x900] sm:$0xff]
  %v358 = vld [vmem:[%s1 + $0x908] sm:$0xff]
  %v359 = vld [vmem:[%s1 + $0x910] sm:$0xff]
  %v360 = vld [vmem:[%s1 + $0x918] sm:$0xff]
  %v361 = vld [vmem:[%s1 + $0x920] sm:$0xff]
  %v362 = vld [vmem:[%s1 + $0x928] sm:$0xff]
  %v363 = vld [vmem:[%s1 + $0x930] sm:$0xff]
  %v364 = vld [vmem:[%s1 + $0x938] sm:$0xff]
  %v365 = vld [vmem:[%s1 + $0x940] sm:$0xff]
  %v366 = vld [vmem:[%s1 + $0x948] sm:$0xff]
  %v367 = vld [vmem:[%s1 + $0x950] sm:$0xff]
  %v368 = vld [vmem:[%s1 + $0x958] sm:$0xff]
  %v369 = vld [vmem:[%s1 + $0x960] sm:$0xff]
  %v370 = vld [vmem:[%s1 + $0x968] sm:$0xff]
  %v371 = vld [vmem:[%s1 + $0x970] sm:$0xff]
  %v372 = vld [vmem:[%s1 + $0x978] sm:$0xff]
  %v373 = vld [vmem:[%s1 + $0x980] sm:$0xff]
  %v374 = vld [vmem:[%s1 + $0x988] sm:$0xff]
  %v375 = vld [vmem:[%s1 + $0x990] sm:$0xff]
  %v376 = vld [vmem:[%s1 + $0x998] sm:$0xff]
  %v377 = vld [vmem:[%s1 + $0x9a0] sm:$0xff]
  %v378 = vld [vmem:[%s1 + $0x9a8] sm:$0xff]
  %v379 = vld [vmem:[%s1 + $0x9b0] sm:$0xff]
  %v380 = vld [vmem:[%s1 + $0x9b8] sm:$0xff]
  %v381 = vld [vmem:[%s1 + $0x9c0] sm:$0xff]
  %v382 = vld [vmem:[%s1 + $0x9c8] sm:$0xff]
  %v383 = vld [vmem:[%s1 + $0x9d0] sm:$0xff]
  %v384 = vld [vmem:[%s1 + $0x9d8] sm:$0xff]
  %v385 = vld [vmem:[%s1 + $0x9e0] sm:$0xff]
  %v386 = vld [vmem:[%s1 + $0x9e8] sm:$0xff]
  %v387 = vld [vmem:[%s1 + $0x9f0] sm:$0xff]
  %v388 = vld [vmem:[%s1 + $0x9f8] sm:$0xff]
  %v389 = vld [vmem:[%s1 + $0xa00] sm:$0xff]
  %v390 = vld [vmem:[%s1 + $0xa08] sm:$0xff]
  %v391 = vld [vmem:[%s1 + $0xa10] sm:$0xff]
  %v392 = vld [vmem:[%s1 + $0xa18] sm:$0xff]
  %v393 = vld [vmem:[%s1 + $0xa20] sm:$0xff]
  %v394 = vld [vmem:[%s1 + $0xa28] sm:$0xff]
  %v395 = vld [vmem:[%s1 + $0xa30] sm:$0xff]
  %v396 = vld [vmem:[%s1 + $0xa38] sm:$0xff]
  %v397 = vld [vmem:[%s1 + $0xa40] sm:$0xff]
  %v398 = vld [vmem:[%s1 + $0xa48] sm:$0xff]
  %v399 = vld [vmem:[%s1 + $0xa50] sm:$0xff]
  %v400 = vld [vmem:[%s1 + $0xa58] sm:$0xff]
  %v401 = vld [vmem:[%s1 + $0xa60] sm:$0xff]
  %v402 = vld [vmem:[%s1 + $0xa68] sm:$0xff]
  %v403 = vld [vmem:[%s1 + $0xa70] sm:$0xff]
  %v404 = vld [vmem:[%s1 + $0xa78] sm:$0xff]
  %v405 = vld [vmem:[%s1 + $0xa80] sm:$0xff]
  %v406 = vld [vmem:[%s1 + $0xa88] sm:$0xff]
  %v407 = vld [vmem:[%s1 + $0xa90] sm:$0xff]
  %v408 = vld [vmem:[%s1 + $0xa98] sm:$0xff]
  %v409 = vld [vmem:[%s1 + $0xaa0] sm:$0xff]
  %v410 = vld [vmem:[%s1 + $0xaa8] sm:$0xff]
  %v411 = vld [vmem:[%s1 + $0xab0] sm:$0xff]
  %v412 = vld [vmem:[%s1 + $0xab8] sm:$0xff]
  %v413 = vld [vmem:[%s1 + $0xac0] sm:$0xff]
  %v414 = vld [vmem:[%s1 + $0xac8] sm:$0xff]
  %v415 = vld [vmem:[%s1 + $0xad0] sm:$0xff]
  %v416 = vld [vmem:[%s1 + $0xad8] sm:$0xff]
  %v417 = vld [vmem:[%s1 + $0xae0] sm:$0xff]
  %v418 = vld [vmem:[%s1 + $0xae8] sm:$0xff]
  %v419 = vld [vmem:[%s1 + $0xaf0] sm:$0xff]
  %v420 = vld [vmem:[%s1 + $0xaf8] sm:$0xff]
  %v421 = vld [vmem:[%s1 + $0xb00] sm:$0xff]
  %v422 = vld [vmem:[%s1 + $0xb08] sm:$0xff]
  %v423 = vld [vmem:[%s1 + $0xb10] sm:$0xff]
  %v424 = vld [vmem:[%s1 + $0xb18] sm:$0xff]
  %v425 = vld [vmem:[%s1 + $0xb20] sm:$0xff]
  %v426 = vld [vmem:[%s1 + $0xb28] sm:$0xff]
  %v427 = vld [vmem:[%s1 + $0xb30] sm:$0xff]
  %v428 = vld [vmem:[%s1 + $0xb38] sm:$0xff]
  %v429 = vld [vmem:[%s1 + $0xb40] sm:$0xff]
  %v430 = vld [vmem:[%s1 + $0xb48] sm:$0xff]
  %v431 = vld [vmem:[%s1 + $0xb50] sm:$0xff]
  %v432 = vld [vmem:[%s1 + $0xb58] sm:$0xff]
  %v433 = vld [vmem:[%s1 + $0xb60] sm:$0xff]
  %v434 = vld [vmem:[%s1 + $0xb68] sm:$0xff]
  %v435 = vld [vmem:[%s1 + $0xb70] sm:$0xff]
  %v436 = vld [vmem:[%s1 + $0xb78] sm:$0xff]
  %v437 = vld [vmem:[%s1 + $0xb80] sm:$0xff]
  %v438 = vld [vmem:[%s1 + $0xb88] sm:$0xff]
  %v439 = vld [vmem:[%s1 + $0xb90] sm:$0xff]
  %v440 = vld [vmem:[%s1 + $0xb98] sm:$0xff]
  %v441 = vld [vmem:[%s1 + $0xba0] sm:$0xff]
  %v442 = vld [vmem:[%s1 + $0xba8] sm:$0xff]
  %v443 = vld [vmem:[%s1 + $0xbb0] sm:$0xff]
  %v444 = vld [vmem:[%s1 + $0xbb8] sm:$0xff]
  %v445 = vld [vmem:[%s1 + $0xbc0] sm:$0xff]
  %v446 = vld [vmem:[%s1 + $0xbc8] sm:$0xff]
  %v447 = vld [vmem:[%s1 + $0xbd0] sm:$0xff]
  %v448 = vld [vmem:[%s1 + $0xbd8] sm:$0xff]
  %v449 = vld [vmem:[%s1 + $0xbe0] sm:$0xff]
  %v450 = vld [vmem:[%s1 + $0xbe8] sm:$0xff]
  %v451 = vld [vmem:[%s1 + $0xbf0] sm:$0xff]
  %v452 = vld [vmem:[%s1 + $0xbf8] sm:$0xff]
  %v453 = vld [vmem:[%s1 + $0xc00] sm:$0xff]
  %v454 = vld [vmem:[%s1 + $0xc08] sm:$0xff]
  %v455 = vld [vmem:[%s1 + $0xc10] sm:$0xff]
  %v456 = vld [vmem:[%s1 + $0xc18] sm:$0xff]
  %v457 = vld [vmem:[%s1 + $0xc20] sm:$0xff]
  %v458 = vld [vmem:[%s1 + $0xc28] sm:$0xff]
  %v459 = vld [vmem:[%s1 + $0xc30] sm:$0xff]
  %v460 = vld [vmem:[%s1 + $0xc38] sm:$0xff]
  %v461 = vld [vmem:[%s1 + $0xc40] sm:$0xff]
  %v462 = vld [vmem:[%s1 + $0xc48] sm:$0xff]
  %v463 = vld [vmem:[%s1 + $0xc50] sm:$0xff]
  %v464 = vld [vmem:[%s1 + $0xc58] sm:$0xff]
  %v465 = vld [vmem:[%s1 + $0xc60] sm:$0xff]
  %v466 = vld [vmem:[%s1 + $0xc68] sm:$0xff]
  %v467 = vld [vmem:[%s1 + $0xc70] sm:$0xff]
  %v468 = vld [vmem:[%s1 + $0xc78] sm:$0xff]
  %v469 = vld [vmem:[%s1 + $0xc80] sm:$0xff]
  %v470 = vld [vmem:[%s1 + $0xc88] sm:$0xff]
  %v471 = vld [vmem:[%s1 + $0xc90] sm:$0xff]
  %v472 = vld [vmem:[%s1 + $0xc98] sm:$0xff]
  %v473 = vld [vmem:[%s1 + $0xca0] sm:$0xff]
  %v474 = vld [vmem:[%s1 + $0xca8] sm:$0xff]
  %v475 = vld [vmem:[%s1 + $0xcb0] sm:$0xff]
  %v476 = vld [vmem:[%s1 + $0xcb8] sm:$0xff]
  %v477 = vld [vmem:[%s1 + $0xcc0] sm:$0xff]
  %v478 = vld [vmem:[%s1 + $0xcc8] sm:$0xff]
  %v479 = vld [vmem:[%s1 + $0xcd0] sm:$0xff]
  %v480 = vld [vmem:[%s1 + $0xcd8] sm:$0xff]
  %v481 = vld [vmem:[%s1 + $0xce0] sm:$0xff]
  %v482 = vld [vmem:[%s1 + $0xce8] sm:$0xff]
  %v483 = vld [vmem:[%s1 + $0xcf0] sm:$0xff]
  %v484 = vld [vmem:[%s1 + $0xcf8] sm:$0xff]
  %v485 = vld [vmem:[%s1 + $0xd00] sm:$0xff]
  %v486 = vld [vmem:[%s1 + $0xd08] sm:$0xff]
  %v487 = vld [vmem:[%s1 + $0xd10] sm:$0xff]
  %v488 = vld [vmem:[%s1 + $0xd18] sm:$0xff]
  %v489 = vld [vmem:[%s1 + $0xd20] sm:$0xff]
  %v490 = vld [vmem:[%s1 + $0xd28] sm:$0xff]
  %v491 = vld [vmem:[%s1 + $0xd30] sm:$0xff]
  %v492 = vld [vmem:[%s1 + $0xd38] sm:$0xff]
  %v493 = vld [vmem:[%s1 + $0xd40] sm:$0xff]
  %v494 = vld [vmem:[%s1 + $0xd48] sm:$0xff]
  %v495 = vld [vmem:[%s1 + $0xd50] sm:$0xff]
  %v496 = vld [vmem:[%s1 + $0xd58] sm:$0xff]
  %v497 = vld [vmem:[%s1 + $0xd60] sm:$0xff]
  %v498 = vld [vmem:[%s1 + $0xd68] sm:$0xff]
  %v499 = vld [vmem:[%s1 + $0xd70] sm:$0xff]
  %v500 = vld [vmem:[%s1 + $0xd78] sm:$0xff]
  %v501 = vld [vmem:[%s1 + $0xd80] sm:$0xff]
  %v502 = vld [vmem:[%s1 + $0xd88] sm:$0xff]
  %v503 = vld [vmem:[%s1 + $0xd90] sm:$0xff]
  %v504 = vld [vmem:[%s1 + $0xd98] sm:$0xff]
  %v505 = vld [vmem:[%s1 + $0xda0] sm:$0xff]
  %v506 = vld [vmem:[%s1 + $0xda8] sm:$0xff]
  %v507 = vld [vmem:[%s1 + $0xdb0] sm:$0xff]
  %v508 = vld [vmem:[%s1 + $0xdb8] sm:$0xff]
  %v509 = vld [vmem:[%s1 + $0xdc0] sm:$0xff]
  %v510 = vld [vmem:[%s1 + $0xdc8] sm:$0xff]
  %v511 = vld [vmem:[%s1 + $0xdd0] sm:$0xff]
  %v512 = vld [vmem:[%s1 + $0xdd8] sm:$0xff]
  %v513 = vld [vmem:[%s1 + $0xde0] sm:$0xff]
  %v514 = vld [vmem:[%s1 + $0xde8] sm:$0xff]
  %v515 = vld [vmem:[%s1 + $0xdf0] sm:$0xff]
  %v516 = vld [vmem:[%s1 + $0xdf8] sm:$0xff]
  %v517 = vld [vmem:[%s1 + $0xe00] sm:$0xff]
  %v518 = vld [vmem:[%s1 + $0xe08] sm:$0xff]
  %v519 = vld [vmem:[%s1 + $0xe10] sm:$0xff]
  %v520 = vld [vmem:[%s1 + $0xe18] sm:$0xff]
  %v521 = vld [vmem:[%s1 + $0xe20] sm:$0xff]
  %v522 = vld [vmem:[%s1 + $0xe28] sm:$0xff]
  %v523 = vld [vmem:[%s1 + $0xe30] sm:$0xff]
  %v524 = vld [vmem:[%s1 + $0xe38] sm:$0xff]
  %v525 = vld [vmem:[%s1 + $0xe40] sm:$0xff]
  %v526 = vld [vmem:[%s1 + $0xe48] sm:$0xff]
  %v527 = vld [vmem:[%s1 + $0xe50] sm:$0xff]
  %v528 = vld [vmem:[%s1 + $0xe58] sm:$0xff]
  %v529 = vld [vmem:[%s1 + $0xe60] sm:$0xff]
  %v530 = vld [vmem:[%s1 + $0xe68] sm:$0xff]
  %v531 = vld [vmem:[%s1 + $0xe70] sm:$0xff]
  %v532 = vld [vmem:[%s1 + $0xe78] sm:$0xff]
  %v533 = vld [vmem:[%s1 + $0xe80] sm:$0xff]
  %v534 = vld [vmem:[%s1 + $0xe88] sm:$0xff]
  %v535 = vld [vmem:[%s1 + $0xe90] sm:$0xff]
  %v536 = vld [vmem:[%s1 + $0xe98] sm:$0xff]
  %v537 = vld [vmem:[%s1 + $0xea0] sm:$0xff]
  %v538 = vld [vmem:[%s1 + $0xea8] sm:$0xff]
  %v539 = vld [vmem:[%s1 + $0xeb0] sm:$0xff]
  %v540 = vld [vmem:[%s1 + $0xeb8] sm:$0xff]
  %v541 = vld [vmem:[%s1 + $0xec0] sm:$0xff]
  %v542 = vld [vmem:[%s1 + $0xec8] sm:$0xff]
  %v543 = vld [vmem:[%s1 + $0xed0] sm:$0xff]
  %v544 = vld [vmem:[%s1 + $0xed8] sm:$0xff]
  %v545 = vld [vmem:[%s1 + $0xee0] sm:$0xff]
  %v546 = vld [vmem:[%s1 + $0xee8] sm:$0xff]
  %v547 = vld [vmem:[%s1 + $0xef0] sm:$0xff]
  %v548 = vld [vmem:[%s1 + $0xef8] sm:$0xff]
  %v549 = vld [vmem:[%s1 + $0xf00] sm:$0xff]
  %v550 = vld [vmem:[%s1 + $0xf08] sm:$0xff]
  %v551 = vld [vmem:[%s1 + $0xf10] sm:$0xff]
  %v552 = vld [vmem:[%s1 + $0xf18] sm:$0xff]
  %v553 = vld [vmem:[%s1 + $0xf20] sm:$0xff]
  %v554 = vld [vmem:[%s1 + $0xf28] sm:$0xff]
  %v555 = vld [vmem:[%s1 + $0xf30] sm:$0xff]
  %v556 = vld [vmem:[%s1 + $0xf38] sm:$0xff]
  %v557 = vld [vmem:[%s1 + $0xf40] sm:$0xff]
  %v558 = vld [vmem:[%s1 + $0xf48] sm:$0xff]
  %v559 = vld [vmem:[%s1 + $0xf50] sm:$0xff]
  %v560 = vld [vmem:[%s1 + $0xf58] sm:$0xff]
  %v561 = vld [vmem:[%s1 + $0xf60] sm:$0xff]
  %v562 = vld [vmem:[%s1 + $0xf68] sm:$0xff]
  %v563 = vld [vmem:[%s1 + $0xf70] sm:$0xff]
  %v564 = vld [vmem:[%s1 + $0xf78] sm:$0xff]
  %v565 = vld [vmem:[%s1 + $0xf80] sm:$0xff]
  %v566 = vld [vmem:[%s1 + $0xf88] sm:$0xff]
  %v567 = vld [vmem:[%s1 + $0xf90] sm:$0xff]
  %v568 = vld [vmem:[%s1 + $0xf98] sm:$0xff]
  %v569 = vld [vmem:[%s1 + $0xfa0] sm:$0xff]
  %v570 = vld [vmem:[%s1 + $0xfa8] sm:$0xff]
  %v571 = vld [vmem:[%s1 + $0xfb0] sm:$0xff]
  %v572 = vld [vmem:[%s1 + $0xfb8] sm:$0xff]
  %v573 = vld [vmem:[%s1 + $0xfc0] sm:$0xff]
  %v574 = vld [vmem:[%s1 + $0xfc8] sm:$0xff]
  %v575 = vld [vmem:[%s1 + $0xfd0] sm:$0xff]
  %v576 = vld [vmem:[%s1 + $0xfd8] sm:$0xff]
  %v577 = vld [vmem:[%s1 + $0xfe0] sm:$0xff]
  %v578 = vld [vmem:[%s1 + $0xfe8] sm:$0xff]
  %v579 = vld [vmem:[%s1 + $0xff0] sm:$0xff]
  %v580 = vld [vmem:[%s1 + $0xff8] sm:$0xff]
  %v581 = vld [vmem:[%s1 + $0x1000] sm:$0xff]
  %v582 = vld [vmem:[%s1 + $0x1008] sm:$0xff]
  %v583 = vld [vmem:[%s1 + $0x1010] sm:$0xff]
  %v584 = vld [vmem:[%s1 + $0x1018] sm:$0xff]
  %v585 = vld [vmem:[%s1 + $0x1020] sm:$0xff]
  %v586 = vld [vmem:[%s1 + $0x1028] sm:$0xff]
  %v587 = vld [vmem:[%s1 + $0x1030] sm:$0xff]
  %v588 = vld [vmem:[%s1 + $0x1038] sm:$0xff]
  %v589 = vld [vmem:[%s1 + $0x1040] sm:$0xff]
  %v590 = vld [vmem:[%s1 + $0x1048] sm:$0xff]
  %v591 = vld [vmem:[%s1 + $0x1050] sm:$0xff]
  %v592 = vld [vmem:[%s1 + $0x1058] sm:$0xff]
  %v593 = vld [vmem:[%s1 + $0x1060] sm:$0xff]
  %v594 = vld [vmem:[%s1 + $0x1068] sm:$0xff]
  %v595 = vld [vmem:[%s1 + $0x1070] sm:$0xff]
  %v596 = vld [vmem:[%s1 + $0x1078] sm:$0xff]
  %v597 = vld [vmem:[%s1 + $0x1080] sm:$0xff]
  %v598 = vld [vmem:[%s1 + $0x1088] sm:$0xff]
  %v599 = vld [vmem:[%s1 + $0x1090] sm:$0xff]
  %v600 = vld [vmem:[%s1 + $0x1098] sm:$0xff]
  %v601 = vld [vmem:[%s1 + $0x10a0] sm:$0xff]
  %v602 = vld [vmem:[%s1 + $0x10a8] sm:$0xff]
  %v603 = vld [vmem:[%s1 + $0x10b0] sm:$0xff]
  %v604 = vld [vmem:[%s1 + $0x10b8] sm:$0xff]
  %v605 = vld [vmem:[%s1 + $0x10c0] sm:$0xff]
  %v606 = vld [vmem:[%s1 + $0x10c8] sm:$0xff]
  %v607 = vld [vmem:[%s1 + $0x10d0] sm:$0xff]
  %v608 = vld [vmem:[%s1 + $0x10d8] sm:$0xff]
  %v609 = vld [vmem:[%s1 + $0x10e0] sm:$0xff]
  %v610 = vld [vmem:[%s1 + $0x10e8] sm:$0xff]
  %v611 = vld [vmem:[%s1 + $0x10f0] sm:$0xff]
  %v612 = vld [vmem:[%s1 + $0x10f8] sm:$0xff]
  %v613 = vld [vmem:[%s1 + $0x1100] sm:$0xff]
  %v614 = vld [vmem:[%s1 + $0x1108] sm:$0xff]
  %v615 = vld [vmem:[%s1 + $0x1110] sm:$0xff]
  %v616 = vld [vmem:[%s1 + $0x1118] sm:$0xff]
  %v617 = vld [vmem:[%s1 + $0x1120] sm:$0xff]
  %v618 = vld [vmem:[%s1 + $0x1128] sm:$0xff]
  %v619 = vld [vmem:[%s1 + $0x1130] sm:$0xff]
  %v620 = vld [vmem:[%s1 + $0x1138] sm:$0xff]
  %v621 = vld [vmem:[%s1 + $0x1140] sm:$0xff]
  %v622 = vld [vmem:[%s1 + $0x1148] sm:$0xff]
  %v623 = vld [vmem:[%s1 + $0x1150] sm:$0xff]
  %v624 = vld [vmem:[%s1 + $0x1158] sm:$0xff]
  %v625 = vld [vmem:[%s1 + $0x1160] sm:$0xff]
  %v626 = vld [vmem:[%s1 + $0x1168] sm:$0xff]
  %v627 = vld [vmem:[%s1 + $0x1170] sm:$0xff]
  %v628 = vld [vmem:[%s1 + $0x1178] sm:$0xff]
  %v629 = vld [vmem:[%s1 + $0x1180] sm:$0xff]
  %v630 = vld [vmem:[%s1 + $0x1188] sm:$0xff]
  %v631 = vld [vmem:[%s1 + $0x1190] sm:$0xff]
  %v632 = vld [vmem:[%s1 + $0x1198] sm:$0xff]
  %v633 = vld [vmem:[%s1 + $0x11a0] sm:$0xff]
  %v634 = vld [vmem:[%s1 + $0x11a8] sm:$0xff]
  %v635 = vld [vmem:[%s1 + $0x11b0] sm:$0xff]
  %v636 = vld [vmem:[%s1 + $0x11b8] sm:$0xff]
  %v637 = vld [vmem:[%s1 + $0x11c0] sm:$0xff]
  %v638 = vld [vmem:[%s1 + $0x11c8] sm:$0xff]
  %v639 = vld [vmem:[%s1 + $0x11d0] sm:$0xff]
  %v640 = vld [vmem:[%s1 + $0x11d8] sm:$0xff]
  %v641 = vld [vmem:[%s1 + $0x11e0] sm:$0xff]
  %v642 = vld [vmem:[%s1 + $0x11e8] sm:$0xff]
  %v643 = vld [vmem:[%s1 + $0x11f0] sm:$0xff]
  %v644 = vld [vmem:[%s1 + $0x11f8] sm:$0xff]
  %v645 = vld [vmem:[%s1 + $0x1200] sm:$0xff]
  %v646 = vld [vmem:[%s1 + $0x1208] sm:$0xff]
  %v647 = vld [vmem:[%s1 + $0x1210] sm:$0xff]
  %v648 = vld [vmem:[%s1 + $0x1218] sm:$0xff]
  %v649 = vld [vmem:[%s1 + $0x1220] sm:$0xff]
  %v650 = vld [vmem:[%s1 + $0x1228] sm:$0xff]
  %v651 = vld [vmem:[%s1 + $0x1230] sm:$0xff]
  %v652 = vld [vmem:[%s1 + $0x1238] sm:$0xff]
  %v653 = vld [vmem:[%s1 + $0x1240] sm:$0xff]
  %v654 = vld [vmem:[%s1 + $0x1248] sm:$0xff]
  %v655 = vld [vmem:[%s1 + $0x1250] sm:$0xff]
  %v656 = vld [vmem:[%s1 + $0x1258] sm:$0xff]
  %v657 = vld [vmem:[%s1 + $0x1260] sm:$0xff]
  %v658 = vld [vmem:[%s1 + $0x1268] sm:$0xff]
  %v659 = vld [vmem:[%s1 + $0x1270] sm:$0xff]
  %v660 = vld [vmem:[%s1 + $0x1278] sm:$0xff]
  %v661 = vld [vmem:[%s1 + $0x1280] sm:$0xff]
  %v662 = vld [vmem:[%s1 + $0x1288] sm:$0xff]
  %v663 = vld [vmem:[%s1 + $0x1290] sm:$0xff]
  %v664 = vld [vmem:[%s1 + $0x1298] sm:$0xff]
  %v665 = vld [vmem:[%s1 + $0x12a0] sm:$0xff]
  %v666 = vld [vmem:[%s1 + $0x12a8] sm:$0xff]
  %v667 = vld [vmem:[%s1 + $0x12b0] sm:$0xff]
  %v668 = vld [vmem:[%s1 + $0x12b8] sm:$0xff]
  %v669 = vld [vmem:[%s1 + $0x12c0] sm:$0xff]
  %v670 = vld [vmem:[%s1 + $0x12c8] sm:$0xff]
  %v671 = vld [vmem:[%s1 + $0x12d0] sm:$0xff]
  %v672 = vld [vmem:[%s1 + $0x12d8] sm:$0xff]
  %v673 = vld [vmem:[%s1 + $0x12e0] sm:$0xff]
  %v674 = vld [vmem:[%s1 + $0x12e8] sm:$0xff]
  %v675 = vld [vmem:[%s1 + $0x12f0] sm:$0xff]
  %v676 = vld [vmem:[%s1 + $0x12f8] sm:$0xff]
  %v677 = vld [vmem:[%s1 + $0x1300] sm:$0xff]
  %v678 = vld [vmem:[%s1 + $0x1308] sm:$0xff]
  %v679 = vld [vmem:[%s1 + $0x1310] sm:$0xff]
  %v680 = vld [vmem:[%s1 + $0x1318] sm:$0xff]
  %v681 = vld [vmem:[%s1 + $0x1320] sm:$0xff]
  %v682 = vld [vmem:[%s1 + $0x1328] sm:$0xff]
  %v683 = vld [vmem:[%s1 + $0x1330] sm:$0xff]
  %v684 = vld [vmem:[%s1 + $0x1338] sm:$0xff]
  %v685 = vld [vmem:[%s1 + $0x1340] sm:$0xff]
  %v686 = vld [vmem:[%s1 + $0x1348] sm:$0xff]
  %v687 = vld [vmem:[%s1 + $0x1350] sm:$0xff]
  %v688 = vld [vmem:[%s1 + $0x1358] sm:$0xff]
  %v689 = vld [vmem:[%s1 + $0x1360] sm:$0xff]
  %v690 = vld [vmem:[%s1 + $0x1368] sm:$0xff]
  %v691 = vld [vmem:[%s1 + $0x1370] sm:$0xff]
  %v692 = vld [vmem:[%s1 + $0x1378] sm:$0xff]
  %v693 = vld [vmem:[%s1 + $0x1380] sm:$0xff]
  %v694 = vld [vmem:[%s1 + $0x1388] sm:$0xff]
  %v695 = vld [vmem:[%s1 + $0x1390] sm:$0xff]
  %v696 = vld [vmem:[%s1 + $0x1398] sm:$0xff]
  %v697 = vld [vmem:[%s1 + $0x13a0] sm:$0xff]
  %v698 = vld [vmem:[%s1 + $0x13a8] sm:$0xff]
  %v699 = vld [vmem:[%s1 + $0x13b0] sm:$0xff]
  %v700 = vld [vmem:[%s1 + $0x13b8] sm:$0xff]
  %v701 = vld [vmem:[%s1 + $0x13c0] sm:$0xff]
  %v702 = vld [vmem:[%s1 + $0x13c8] sm:$0xff]
  %v703 = vld [vmem:[%s1 + $0x13d0] sm:$0xff]
  %v704 = vld [vmem:[%s1 + $0x13d8] sm:$0xff]
  %v705 = vld [vmem:[%s1 + $0x13e0] sm:$0xff]
  %v706 = vld [vmem:[%s1 + $0x13e8] sm:$0xff]
  %v707 = vld [vmem:[%s1 + $0x13f0] sm:$0xff]
  %v708 = vld [vmem:[%s1 + $0x13f8] sm:$0xff]
  %v709 = vld [vmem:[%s2] sm:$0xff]
  %v711 = vlaneseq
  %v712 = vshrl.u32 %v711, 7
  %v713 = vsub.s32 0, %v712
  %v714 = vrot.slane %v709, %v713
  %v715 = vlaneseq
  %v716 = vshrl.u32 %v715, 7
  %v717 = vsub.s32 1, %v716
  %v718 = vrot.slane %v709, %v717
  %v719 = vlaneseq
  %v720 = vshrl.u32 %v719, 7
  %v721 = vsub.s32 2, %v720
  %v722 = vrot.slane %v709, %v721
  %v723 = vlaneseq
  %v724 = vshrl.u32 %v723, 7
  %v725 = vsub.s32 3, %v724
  %v726 = vrot.slane %v709, %v725
  %v727 = vlaneseq
  %v728 = vshrl.u32 %v727, 7
  %v729 = vsub.s32 4, %v728
  %v730 = vrot.slane %v709, %v729
  %v731 = vlaneseq
  %v732 = vshrl.u32 %v731, 7
  %v733 = vsub.s32 5, %v732
  %v734 = vrot.slane %v709, %v733
  %v735 = vlaneseq
  %v736 = vshrl.u32 %v735, 7
  %v737 = vsub.s32 6, %v736
  %v738 = vrot.slane %v709, %v737
  %v739 = vlaneseq
  %v740 = vshrl.u32 %v739, 7
  %v741 = vsub.s32 7, %v740
  %v742 = vrot.slane %v709, %v741
  %v761 = vunpack.c.l.b16 %v59
  %v762 = vunpack.c.h.b16 %v59
  %v763 = vunpack.c.l.b16 %v60
  %v764 = vunpack.c.h.b16 %v60
  %v765 = vunpack.c.l.b16 %v61
  %v766 = vunpack.c.h.b16 %v61
  %v767 = vunpack.c.l.b16 %v62
  %v768 = vunpack.c.h.b16 %v62
  %v769 = vunpack.c.l.b16 %v63
  %v770 = vunpack.c.h.b16 %v63
  %v771 = vunpack.c.l.b16 %v64
  %v772 = vunpack.c.h.b16 %v64
  %v773 = vunpack.c.l.b16 %v65
  %v774 = vunpack.c.h.b16 %v65
  %v775 = vunpack.c.l.b16 %v66
  %v776 = vunpack.c.h.b16 %v66
  %v777 = vunpack.c.l.b16 %v67
  %v778 = vunpack.c.h.b16 %v67
  %v779 = vunpack.c.l.b16 %v68
  %v780 = vunpack.c.h.b16 %v68
  %v781 = vpack.c.b16 %v771, %v761
  %v782 = vpack.c.b16 %v772, %v762
  %v783 = vpack.c.b16 %v773, %v763
  %v784 = vpack.c.b16 %v774, %v764
  %v785 = vpack.c.b16 %v775, %v765
  %v786 = vpack.c.b16 %v776, %v766
  %v787 = vpack.c.b16 %v777, %v767
  %v788 = vpack.c.b16 %v778, %v768
  %v789 = vpack.c.b16 %v779, %v769
  %v790 = vpack.c.b16 %v780, %v770
  %v1441 = vunpack.c.l.b16 %v69
  %v1442 = vunpack.c.h.b16 %v69
  %v1443 = vunpack.c.l.b16 %v70
  %v1444 = vunpack.c.h.b16 %v70
  %v1445 = vunpack.c.l.b16 %v71
  %v1446 = vunpack.c.h.b16 %v71
  %v1447 = vunpack.c.l.b16 %v72
  %v1448 = vunpack.c.h.b16 %v72
  %v1449 = vunpack.c.l.b16 %v73
  %v1450 = vunpack.c.h.b16 %v73
  %v1451 = vunpack.c.l.b16 %v74
  %v1452 = vunpack.c.h.b16 %v74
  %v1453 = vunpack.c.l.b16 %v75
  %v1454 = vunpack.c.h.b16 %v75
  %v1455 = vunpack.c.l.b16 %v76
  %v1456 = vunpack.c.h.b16 %v76
  %v1457 = vunpack.c.l.b16 %v77
  %v1458 = vunpack.c.h.b16 %v77
  %v1459 = vunpack.c.l.b16 %v78
  %v1460 = vunpack.c.h.b16 %v78
  %v1461 = vunpack.c.l.b16 %v79
  %v1462 = vunpack.c.h.b16 %v79
  %v1463 = vunpack.c.l.b16 %v80
  %v1464 = vunpack.c.h.b16 %v80
  %v1465 = vunpack.c.l.b16 %v81
  %v1466 = vunpack.c.h.b16 %v81
  %v1467 = vunpack.c.l.b16 %v82
  %v1468 = vunpack.c.h.b16 %v82
  %v1469 = vunpack.c.l.b16 %v83
  %v1470 = vunpack.c.h.b16 %v83
  %v1471 = vunpack.c.l.b16 %v84
  %v1472 = vunpack.c.h.b16 %v84
  %v1473 = vunpack.c.l.b16 %v85
  %v1474 = vunpack.c.h.b16 %v85
  %v1475 = vunpack.c.l.b16 %v86
  %v1476 = vunpack.c.h.b16 %v86
  %v1477 = vunpack.c.l.b16 %v87
  %v1478 = vunpack.c.h.b16 %v87
  %v1479 = vunpack.c.l.b16 %v88
  %v1480 = vunpack.c.h.b16 %v88
  %v1481 = vunpack.c.l.b16 %v89
  %v1482 = vunpack.c.h.b16 %v89
  %v1483 = vunpack.c.l.b16 %v90
  %v1484 = vunpack.c.h.b16 %v90
  %v1485 = vunpack.c.l.b16 %v91
  %v1486 = vunpack.c.h.b16 %v91
  %v1487 = vunpack.c.l.b16 %v92
  %v1488 = vunpack.c.h.b16 %v92
  %v1489 = vunpack.c.l.b16 %v93
  %v1490 = vunpack.c.h.b16 %v93
  %v1491 = vunpack.c.l.b16 %v94
  %v1492 = vunpack.c.h.b16 %v94
  %v1493 = vunpack.c.l.b16 %v95
  %v1494 = vunpack.c.h.b16 %v95
  %v1495 = vunpack.c.l.b16 %v96
  %v1496 = vunpack.c.h.b16 %v96
  %v1497 = vunpack.c.l.b16 %v97
  %v1498 = vunpack.c.h.b16 %v97
  %v1499 = vunpack.c.l.b16 %v98
  %v1500 = vunpack.c.h.b16 %v98
  %v1501 = vunpack.c.l.b16 %v99
  %v1502 = vunpack.c.h.b16 %v99
  %v1503 = vunpack.c.l.b16 %v100
  %v1504 = vunpack.c.h.b16 %v100
  %v1505 = vunpack.c.l.b16 %v101
  %v1506 = vunpack.c.h.b16 %v101
  %v1507 = vunpack.c.l.b16 %v102
  %v1508 = vunpack.c.h.b16 %v102
  %v1509 = vunpack.c.l.b16 %v103
  %v1510 = vunpack.c.h.b16 %v103
  %v1511 = vunpack.c.l.b16 %v104
  %v1512 = vunpack.c.h.b16 %v104
  %v1513 = vunpack.c.l.b16 %v105
  %v1514 = vunpack.c.h.b16 %v105
  %v1515 = vunpack.c.l.b16 %v106
  %v1516 = vunpack.c.h.b16 %v106
  %v1517 = vunpack.c.l.b16 %v107
  %v1518 = vunpack.c.h.b16 %v107
  %v1519 = vunpack.c.l.b16 %v108
  %v1520 = vunpack.c.h.b16 %v108
  %v1521 = vunpack.c.l.b16 %v109
  %v1522 = vunpack.c.h.b16 %v109
  %v1523 = vunpack.c.l.b16 %v110
  %v1524 = vunpack.c.h.b16 %v110
  %v1525 = vunpack.c.l.b16 %v111
  %v1526 = vunpack.c.h.b16 %v111
  %v1527 = vunpack.c.l.b16 %v112
  %v1528 = vunpack.c.h.b16 %v112
  %v1529 = vunpack.c.l.b16 %v113
  %v1530 = vunpack.c.h.b16 %v113
  %v1531 = vunpack.c.l.b16 %v114
  %v1532 = vunpack.c.h.b16 %v114
  %v1533 = vunpack.c.l.b16 %v115
  %v1534 = vunpack.c.h.b16 %v115
  %v1535 = vunpack.c.l.b16 %v116
  %v1536 = vunpack.c.h.b16 %v116
  %v1537 = vunpack.c.l.b16 %v117
  %v1538 = vunpack.c.h.b16 %v117
  %v1539 = vunpack.c.l.b16 %v118
  %v1540 = vunpack.c.h.b16 %v118
  %v1541 = vunpack.c.l.b16 %v119
  %v1542 = vunpack.c.h.b16 %v119
  %v1543 = vunpack.c.l.b16 %v120
  %v1544 = vunpack.c.h.b16 %v120
  %v1545 = vunpack.c.l.b16 %v121
  %v1546 = vunpack.c.h.b16 %v121
  %v1547 = vunpack.c.l.b16 %v122
  %v1548 = vunpack.c.h.b16 %v122
  %v1549 = vunpack.c.l.b16 %v123
  %v1550 = vunpack.c.h.b16 %v123
  %v1551 = vunpack.c.l.b16 %v124
  %v1552 = vunpack.c.h.b16 %v124
  %v1553 = vunpack.c.l.b16 %v125
  %v1554 = vunpack.c.h.b16 %v125
  %v1555 = vunpack.c.l.b16 %v126
  %v1556 = vunpack.c.h.b16 %v126
  %v1557 = vunpack.c.l.b16 %v127
  %v1558 = vunpack.c.h.b16 %v127
  %v1559 = vunpack.c.l.b16 %v128
  %v1560 = vunpack.c.h.b16 %v128
  %v1561 = vunpack.c.l.b16 %v129
  %v1562 = vunpack.c.h.b16 %v129
  %v1563 = vunpack.c.l.b16 %v130
  %v1564 = vunpack.c.h.b16 %v130
  %v1565 = vunpack.c.l.b16 %v131
  %v1566 = vunpack.c.h.b16 %v131
  %v1567 = vunpack.c.l.b16 %v132
  %v1568 = vunpack.c.h.b16 %v132
  %v1569 = vunpack.c.l.b16 %v133
  %v1570 = vunpack.c.h.b16 %v133
  %v1571 = vunpack.c.l.b16 %v134
  %v1572 = vunpack.c.h.b16 %v134
  %v1573 = vunpack.c.l.b16 %v135
  %v1574 = vunpack.c.h.b16 %v135
  %v1575 = vunpack.c.l.b16 %v136
  %v1576 = vunpack.c.h.b16 %v136
  %v1577 = vunpack.c.l.b16 %v137
  %v1578 = vunpack.c.h.b16 %v137
  %v1579 = vunpack.c.l.b16 %v138
  %v1580 = vunpack.c.h.b16 %v138
  %v1581 = vunpack.c.l.b16 %v139
  %v1582 = vunpack.c.h.b16 %v139
  %v1583 = vunpack.c.l.b16 %v140
  %v1584 = vunpack.c.h.b16 %v140
  %v1585 = vunpack.c.l.b16 %v141
  %v1586 = vunpack.c.h.b16 %v141
  %v1587 = vunpack.c.l.b16 %v142
  %v1588 = vunpack.c.h.b16 %v142
  %v1589 = vunpack.c.l.b16 %v143
  %v1590 = vunpack.c.h.b16 %v143
  %v1591 = vunpack.c.l.b16 %v144
  %v1592 = vunpack.c.h.b16 %v144
  %v1593 = vunpack.c.l.b16 %v145
  %v1594 = vunpack.c.h.b16 %v145
  %v1595 = vunpack.c.l.b16 %v146
  %v1596 = vunpack.c.h.b16 %v146
  %v1597 = vunpack.c.l.b16 %v147
  %v1598 = vunpack.c.h.b16 %v147
  %v1599 = vunpack.c.l.b16 %v148
  %v1600 = vunpack.c.h.b16 %v148
  %v1601 = vunpack.c.l.b16 %v149
  %v1602 = vunpack.c.h.b16 %v149
  %v1603 = vunpack.c.l.b16 %v150
  %v1604 = vunpack.c.h.b16 %v150
  %v1605 = vunpack.c.l.b16 %v151
  %v1606 = vunpack.c.h.b16 %v151
  %v1607 = vunpack.c.l.b16 %v152
  %v1608 = vunpack.c.h.b16 %v152
  %v1609 = vunpack.c.l.b16 %v153
  %v1610 = vunpack.c.h.b16 %v153
  %v1611 = vunpack.c.l.b16 %v154
  %v1612 = vunpack.c.h.b16 %v154
  %v1613 = vunpack.c.l.b16 %v155
  %v1614 = vunpack.c.h.b16 %v155
  %v1615 = vunpack.c.l.b16 %v156
  %v1616 = vunpack.c.h.b16 %v156
  %v1617 = vunpack.c.l.b16 %v157
  %v1618 = vunpack.c.h.b16 %v157
  %v1619 = vunpack.c.l.b16 %v158
  %v1620 = vunpack.c.h.b16 %v158
  %v1621 = vunpack.c.l.b16 %v159
  %v1622 = vunpack.c.h.b16 %v159
  %v1623 = vunpack.c.l.b16 %v160
  %v1624 = vunpack.c.h.b16 %v160
  %v1625 = vunpack.c.l.b16 %v161
  %v1626 = vunpack.c.h.b16 %v161
  %v1627 = vunpack.c.l.b16 %v162
  %v1628 = vunpack.c.h.b16 %v162
  %v1629 = vunpack.c.l.b16 %v163
  %v1630 = vunpack.c.h.b16 %v163
  %v1631 = vunpack.c.l.b16 %v164
  %v1632 = vunpack.c.h.b16 %v164
  %v1633 = vunpack.c.l.b16 %v165
  %v1634 = vunpack.c.h.b16 %v165
  %v1635 = vunpack.c.l.b16 %v166
  %v1636 = vunpack.c.h.b16 %v166
  %v1637 = vunpack.c.l.b16 %v167
  %v1638 = vunpack.c.h.b16 %v167
  %v1639 = vunpack.c.l.b16 %v168
  %v1640 = vunpack.c.h.b16 %v168
  %v1641 = vunpack.c.l.b16 %v169
  %v1642 = vunpack.c.h.b16 %v169
  %v1643 = vunpack.c.l.b16 %v170
  %v1644 = vunpack.c.h.b16 %v170
  %v1645 = vunpack.c.l.b16 %v171
  %v1646 = vunpack.c.h.b16 %v171
  %v1647 = vunpack.c.l.b16 %v172
  %v1648 = vunpack.c.h.b16 %v172
  %v1649 = vunpack.c.l.b16 %v173
  %v1650 = vunpack.c.h.b16 %v173
  %v1651 = vunpack.c.l.b16 %v174
  %v1652 = vunpack.c.h.b16 %v174
  %v1653 = vunpack.c.l.b16 %v175
  %v1654 = vunpack.c.h.b16 %v175
  %v1655 = vunpack.c.l.b16 %v176
  %v1656 = vunpack.c.h.b16 %v176
  %v1657 = vunpack.c.l.b16 %v177
  %v1658 = vunpack.c.h.b16 %v177
  %v1659 = vunpack.c.l.b16 %v178
  %v1660 = vunpack.c.h.b16 %v178
  %v1661 = vunpack.c.l.b16 %v179
  %v1662 = vunpack.c.h.b16 %v179
  %v1663 = vunpack.c.l.b16 %v180
  %v1664 = vunpack.c.h.b16 %v180
  %v1665 = vunpack.c.l.b16 %v181
  %v1666 = vunpack.c.h.b16 %v181
  %v1667 = vunpack.c.l.b16 %v182
  %v1668 = vunpack.c.h.b16 %v182
  %v1669 = vunpack.c.l.b16 %v183
  %v1670 = vunpack.c.h.b16 %v183
  %v1671 = vunpack.c.l.b16 %v184
  %v1672 = vunpack.c.h.b16 %v184
  %v1673 = vunpack.c.l.b16 %v185
  %v1674 = vunpack.c.h.b16 %v185
  %v1675 = vunpack.c.l.b16 %v186
  %v1676 = vunpack.c.h.b16 %v186
  %v1677 = vunpack.c.l.b16 %v187
  %v1678 = vunpack.c.h.b16 %v187
  %v1679 = vunpack.c.l.b16 %v188
  %v1680 = vunpack.c.h.b16 %v188
  %v1681 = vunpack.c.l.b16 %v189
  %v1682 = vunpack.c.h.b16 %v189
  %v1683 = vunpack.c.l.b16 %v190
  %v1684 = vunpack.c.h.b16 %v190
  %v1685 = vunpack.c.l.b16 %v191
  %v1686 = vunpack.c.h.b16 %v191
  %v1687 = vunpack.c.l.b16 %v192
  %v1688 = vunpack.c.h.b16 %v192
  %v1689 = vunpack.c.l.b16 %v193
  %v1690 = vunpack.c.h.b16 %v193
  %v1691 = vunpack.c.l.b16 %v194
  %v1692 = vunpack.c.h.b16 %v194
  %v1693 = vunpack.c.l.b16 %v195
  %v1694 = vunpack.c.h.b16 %v195
  %v1695 = vunpack.c.l.b16 %v196
  %v1696 = vunpack.c.h.b16 %v196
  %v1697 = vunpack.c.l.b16 %v197
  %v1698 = vunpack.c.h.b16 %v197
  %v1699 = vunpack.c.l.b16 %v198
  %v1700 = vunpack.c.h.b16 %v198
  %v1701 = vunpack.c.l.b16 %v199
  %v1702 = vunpack.c.h.b16 %v199
  %v1703 = vunpack.c.l.b16 %v200
  %v1704 = vunpack.c.h.b16 %v200
  %v1705 = vunpack.c.l.b16 %v201
  %v1706 = vunpack.c.h.b16 %v201
  %v1707 = vunpack.c.l.b16 %v202
  %v1708 = vunpack.c.h.b16 %v202
  %v1709 = vunpack.c.l.b16 %v203
  %v1710 = vunpack.c.h.b16 %v203
  %v1711 = vunpack.c.l.b16 %v204
  %v1712 = vunpack.c.h.b16 %v204
  %v1713 = vunpack.c.l.b16 %v205
  %v1714 = vunpack.c.h.b16 %v205
  %v1715 = vunpack.c.l.b16 %v206
  %v1716 = vunpack.c.h.b16 %v206
  %v1717 = vunpack.c.l.b16 %v207
  %v1718 = vunpack.c.h.b16 %v207
  %v1719 = vunpack.c.l.b16 %v208
  %v1720 = vunpack.c.h.b16 %v208
  %v1721 = vunpack.c.l.b16 %v209
  %v1722 = vunpack.c.h.b16 %v209
  %v1723 = vunpack.c.l.b16 %v210
  %v1724 = vunpack.c.h.b16 %v210
  %v1725 = vunpack.c.l.b16 %v211
  %v1726 = vunpack.c.h.b16 %v211
  %v1727 = vunpack.c.l.b16 %v212
  %v1728 = vunpack.c.h.b16 %v212
  %v1729 = vunpack.c.l.b16 %v213
  %v1730 = vunpack.c.h.b16 %v213
  %v1731 = vunpack.c.l.b16 %v214
  %v1732 = vunpack.c.h.b16 %v214
  %v1733 = vunpack.c.l.b16 %v215
  %v1734 = vunpack.c.h.b16 %v215
  %v1735 = vunpack.c.l.b16 %v216
  %v1736 = vunpack.c.h.b16 %v216
  %v1737 = vunpack.c.l.b16 %v217
  %v1738 = vunpack.c.h.b16 %v217
  %v1739 = vunpack.c.l.b16 %v218
  %v1740 = vunpack.c.h.b16 %v218
  %v1741 = vunpack.c.l.b16 %v219
  %v1742 = vunpack.c.h.b16 %v219
  %v1743 = vunpack.c.l.b16 %v220
  %v1744 = vunpack.c.h.b16 %v220
  %v1745 = vunpack.c.l.b16 %v221
  %v1746 = vunpack.c.h.b16 %v221
  %v1747 = vunpack.c.l.b16 %v222
  %v1748 = vunpack.c.h.b16 %v222
  %v1749 = vunpack.c.l.b16 %v223
  %v1750 = vunpack.c.h.b16 %v223
  %v1751 = vunpack.c.l.b16 %v224
  %v1752 = vunpack.c.h.b16 %v224
  %v1753 = vunpack.c.l.b16 %v225
  %v1754 = vunpack.c.h.b16 %v225
  %v1755 = vunpack.c.l.b16 %v226
  %v1756 = vunpack.c.h.b16 %v226
  %v1757 = vunpack.c.l.b16 %v227
  %v1758 = vunpack.c.h.b16 %v227
  %v1759 = vunpack.c.l.b16 %v228
  %v1760 = vunpack.c.h.b16 %v228
  %v1761 = vunpack.c.l.b16 %v229
  %v1762 = vunpack.c.h.b16 %v229
  %v1763 = vunpack.c.l.b16 %v230
  %v1764 = vunpack.c.h.b16 %v230
  %v1765 = vunpack.c.l.b16 %v231
  %v1766 = vunpack.c.h.b16 %v231
  %v1767 = vunpack.c.l.b16 %v232
  %v1768 = vunpack.c.h.b16 %v232
  %v1769 = vunpack.c.l.b16 %v233
  %v1770 = vunpack.c.h.b16 %v233
  %v1771 = vunpack.c.l.b16 %v234
  %v1772 = vunpack.c.h.b16 %v234
  %v1773 = vunpack.c.l.b16 %v235
  %v1774 = vunpack.c.h.b16 %v235
  %v1775 = vunpack.c.l.b16 %v236
  %v1776 = vunpack.c.h.b16 %v236
  %v1777 = vunpack.c.l.b16 %v237
  %v1778 = vunpack.c.h.b16 %v237
  %v1779 = vunpack.c.l.b16 %v238
  %v1780 = vunpack.c.h.b16 %v238
  %v1781 = vunpack.c.l.b16 %v239
  %v1782 = vunpack.c.h.b16 %v239
  %v1783 = vunpack.c.l.b16 %v240
  %v1784 = vunpack.c.h.b16 %v240
  %v1785 = vunpack.c.l.b16 %v241
  %v1786 = vunpack.c.h.b16 %v241
  %v1787 = vunpack.c.l.b16 %v242
  %v1788 = vunpack.c.h.b16 %v242
  %v1789 = vunpack.c.l.b16 %v243
  %v1790 = vunpack.c.h.b16 %v243
  %v1791 = vunpack.c.l.b16 %v244
  %v1792 = vunpack.c.h.b16 %v244
  %v1793 = vunpack.c.l.b16 %v245
  %v1794 = vunpack.c.h.b16 %v245
  %v1795 = vunpack.c.l.b16 %v246
  %v1796 = vunpack.c.h.b16 %v246
  %v1797 = vunpack.c.l.b16 %v247
  %v1798 = vunpack.c.h.b16 %v247
  %v1799 = vunpack.c.l.b16 %v248
  %v1800 = vunpack.c.h.b16 %v248
  %v1801 = vunpack.c.l.b16 %v249
  %v1802 = vunpack.c.h.b16 %v249
  %v1803 = vunpack.c.l.b16 %v250
  %v1804 = vunpack.c.h.b16 %v250
  %v1805 = vunpack.c.l.b16 %v251
  %v1806 = vunpack.c.h.b16 %v251
  %v1807 = vunpack.c.l.b16 %v252
  %v1808 = vunpack.c.h.b16 %v252
  %v1809 = vunpack.c.l.b16 %v253
  %v1810 = vunpack.c.h.b16 %v253
  %v1811 = vunpack.c.l.b16 %v254
  %v1812 = vunpack.c.h.b16 %v254
  %v1813 = vunpack.c.l.b16 %v255
  %v1814 = vunpack.c.h.b16 %v255
  %v1815 = vunpack.c.l.b16 %v256
  %v1816 = vunpack.c.h.b16 %v256
  %v1817 = vunpack.c.l.b16 %v257
  %v1818 = vunpack.c.h.b16 %v257
  %v1819 = vunpack.c.l.b16 %v258
  %v1820 = vunpack.c.h.b16 %v258
  %v1821 = vunpack.c.l.b16 %v259
  %v1822 = vunpack.c.h.b16 %v259
  %v1823 = vunpack.c.l.b16 %v260
  %v1824 = vunpack.c.h.b16 %v260
  %v1825 = vunpack.c.l.b16 %v261
  %v1826 = vunpack.c.h.b16 %v261
  %v1827 = vunpack.c.l.b16 %v262
  %v1828 = vunpack.c.h.b16 %v262
  %v1829 = vunpack.c.l.b16 %v263
  %v1830 = vunpack.c.h.b16 %v263
  %v1831 = vunpack.c.l.b16 %v264
  %v1832 = vunpack.c.h.b16 %v264
  %v1833 = vunpack.c.l.b16 %v265
  %v1834 = vunpack.c.h.b16 %v265
  %v1835 = vunpack.c.l.b16 %v266
  %v1836 = vunpack.c.h.b16 %v266
  %v1837 = vunpack.c.l.b16 %v267
  %v1838 = vunpack.c.h.b16 %v267
  %v1839 = vunpack.c.l.b16 %v268
  %v1840 = vunpack.c.h.b16 %v268
  %v1841 = vunpack.c.l.b16 %v269
  %v1842 = vunpack.c.h.b16 %v269
  %v1843 = vunpack.c.l.b16 %v270
  %v1844 = vunpack.c.h.b16 %v270
  %v1845 = vunpack.c.l.b16 %v271
  %v1846 = vunpack.c.h.b16 %v271
  %v1847 = vunpack.c.l.b16 %v272
  %v1848 = vunpack.c.h.b16 %v272
  %v1849 = vunpack.c.l.b16 %v273
  %v1850 = vunpack.c.h.b16 %v273
  %v1851 = vunpack.c.l.b16 %v274
  %v1852 = vunpack.c.h.b16 %v274
  %v1853 = vunpack.c.l.b16 %v275
  %v1854 = vunpack.c.h.b16 %v275
  %v1855 = vunpack.c.l.b16 %v276
  %v1856 = vunpack.c.h.b16 %v276
  %v1857 = vunpack.c.l.b16 %v277
  %v1858 = vunpack.c.h.b16 %v277
  %v1859 = vunpack.c.l.b16 %v278
  %v1860 = vunpack.c.h.b16 %v278
  %v1861 = vunpack.c.l.b16 %v279
  %v1862 = vunpack.c.h.b16 %v279
  %v1863 = vunpack.c.l.b16 %v280
  %v1864 = vunpack.c.h.b16 %v280
  %v1865 = vunpack.c.l.b16 %v281
  %v1866 = vunpack.c.h.b16 %v281
  %v1867 = vunpack.c.l.b16 %v282
  %v1868 = vunpack.c.h.b16 %v282
  %v1869 = vunpack.c.l.b16 %v283
  %v1870 = vunpack.c.h.b16 %v283
  %v1871 = vunpack.c.l.b16 %v284
  %v1872 = vunpack.c.h.b16 %v284
  %v1873 = vunpack.c.l.b16 %v285
  %v1874 = vunpack.c.h.b16 %v285
  %v1875 = vunpack.c.l.b16 %v286
  %v1876 = vunpack.c.h.b16 %v286
  %v1877 = vunpack.c.l.b16 %v287
  %v1878 = vunpack.c.h.b16 %v287
  %v1879 = vunpack.c.l.b16 %v288
  %v1880 = vunpack.c.h.b16 %v288
  %v1881 = vunpack.c.l.b16 %v289
  %v1882 = vunpack.c.h.b16 %v289
  %v1883 = vunpack.c.l.b16 %v290
  %v1884 = vunpack.c.h.b16 %v290
  %v1885 = vunpack.c.l.b16 %v291
  %v1886 = vunpack.c.h.b16 %v291
  %v1887 = vunpack.c.l.b16 %v292
  %v1888 = vunpack.c.h.b16 %v292
  %v1889 = vunpack.c.l.b16 %v293
  %v1890 = vunpack.c.h.b16 %v293
  %v1891 = vunpack.c.l.b16 %v294
  %v1892 = vunpack.c.h.b16 %v294
  %v1893 = vunpack.c.l.b16 %v295
  %v1894 = vunpack.c.h.b16 %v295
  %v1895 = vunpack.c.l.b16 %v296
  %v1896 = vunpack.c.h.b16 %v296
  %v1897 = vunpack.c.l.b16 %v297
  %v1898 = vunpack.c.h.b16 %v297
  %v1899 = vunpack.c.l.b16 %v298
  %v1900 = vunpack.c.h.b16 %v298
  %v1901 = vunpack.c.l.b16 %v299
  %v1902 = vunpack.c.h.b16 %v299
  %v1903 = vunpack.c.l.b16 %v300
  %v1904 = vunpack.c.h.b16 %v300
  %v1905 = vunpack.c.l.b16 %v301
  %v1906 = vunpack.c.h.b16 %v301
  %v1907 = vunpack.c.l.b16 %v302
  %v1908 = vunpack.c.h.b16 %v302
  %v1909 = vunpack.c.l.b16 %v303
  %v1910 = vunpack.c.h.b16 %v303
  %v1911 = vunpack.c.l.b16 %v304
  %v1912 = vunpack.c.h.b16 %v304
  %v1913 = vunpack.c.l.b16 %v305
  %v1914 = vunpack.c.h.b16 %v305
  %v1915 = vunpack.c.l.b16 %v306
  %v1916 = vunpack.c.h.b16 %v306
  %v1917 = vunpack.c.l.b16 %v307
  %v1918 = vunpack.c.h.b16 %v307
  %v1919 = vunpack.c.l.b16 %v308
  %v1920 = vunpack.c.h.b16 %v308
  %v1921 = vunpack.c.l.b16 %v309
  %v1922 = vunpack.c.h.b16 %v309
  %v1923 = vunpack.c.l.b16 %v310
  %v1924 = vunpack.c.h.b16 %v310
  %v1925 = vunpack.c.l.b16 %v311
  %v1926 = vunpack.c.h.b16 %v311
  %v1927 = vunpack.c.l.b16 %v312
  %v1928 = vunpack.c.h.b16 %v312
  %v1929 = vunpack.c.l.b16 %v313
  %v1930 = vunpack.c.h.b16 %v313
  %v1931 = vunpack.c.l.b16 %v314
  %v1932 = vunpack.c.h.b16 %v314
  %v1933 = vunpack.c.l.b16 %v315
  %v1934 = vunpack.c.h.b16 %v315
  %v1935 = vunpack.c.l.b16 %v316
  %v1936 = vunpack.c.h.b16 %v316
  %v1937 = vunpack.c.l.b16 %v317
  %v1938 = vunpack.c.h.b16 %v317
  %v1939 = vunpack.c.l.b16 %v318
  %v1940 = vunpack.c.h.b16 %v318
  %v1941 = vunpack.c.l.b16 %v319
  %v1942 = vunpack.c.h.b16 %v319
  %v1943 = vunpack.c.l.b16 %v320
  %v1944 = vunpack.c.h.b16 %v320
  %v1945 = vunpack.c.l.b16 %v321
  %v1946 = vunpack.c.h.b16 %v321
  %v1947 = vunpack.c.l.b16 %v322
  %v1948 = vunpack.c.h.b16 %v322
  %v1949 = vunpack.c.l.b16 %v323
  %v1950 = vunpack.c.h.b16 %v323
  %v1951 = vunpack.c.l.b16 %v324
  %v1952 = vunpack.c.h.b16 %v324
  %v1953 = vunpack.c.l.b16 %v325
  %v1954 = vunpack.c.h.b16 %v325
  %v1955 = vunpack.c.l.b16 %v326
  %v1956 = vunpack.c.h.b16 %v326
  %v1957 = vunpack.c.l.b16 %v327
  %v1958 = vunpack.c.h.b16 %v327
  %v1959 = vunpack.c.l.b16 %v328
  %v1960 = vunpack.c.h.b16 %v328
  %v1961 = vunpack.c.l.b16 %v329
  %v1962 = vunpack.c.h.b16 %v329
  %v1963 = vunpack.c.l.b16 %v330
  %v1964 = vunpack.c.h.b16 %v330
  %v1965 = vunpack.c.l.b16 %v331
  %v1966 = vunpack.c.h.b16 %v331
  %v1967 = vunpack.c.l.b16 %v332
  %v1968 = vunpack.c.h.b16 %v332
  %v1969 = vunpack.c.l.b16 %v333
  %v1970 = vunpack.c.h.b16 %v333
  %v1971 = vunpack.c.l.b16 %v334
  %v1972 = vunpack.c.h.b16 %v334
  %v1973 = vunpack.c.l.b16 %v335
  %v1974 = vunpack.c.h.b16 %v335
  %v1975 = vunpack.c.l.b16 %v336
  %v1976 = vunpack.c.h.b16 %v336
  %v1977 = vunpack.c.l.b16 %v337
  %v1978 = vunpack.c.h.b16 %v337
  %v1979 = vunpack.c.l.b16 %v338
  %v1980 = vunpack.c.h.b16 %v338
  %v1981 = vunpack.c.l.b16 %v339
  %v1982 = vunpack.c.h.b16 %v339
  %v1983 = vunpack.c.l.b16 %v340
  %v1984 = vunpack.c.h.b16 %v340
  %v1985 = vunpack.c.l.b16 %v341
  %v1986 = vunpack.c.h.b16 %v341
  %v1987 = vunpack.c.l.b16 %v342
  %v1988 = vunpack.c.h.b16 %v342
  %v1989 = vunpack.c.l.b16 %v343
  %v1990 = vunpack.c.h.b16 %v343
  %v1991 = vunpack.c.l.b16 %v344
  %v1992 = vunpack.c.h.b16 %v344
  %v1993 = vunpack.c.l.b16 %v345
  %v1994 = vunpack.c.h.b16 %v345
  %v1995 = vunpack.c.l.b16 %v346
  %v1996 = vunpack.c.h.b16 %v346
  %v1997 = vunpack.c.l.b16 %v347
  %v1998 = vunpack.c.h.b16 %v347
  %v1999 = vunpack.c.l.b16 %v348
  %v2000 = vunpack.c.h.b16 %v348
  %v2001 = vunpack.c.l.b16 %v349
  %v2002 = vunpack.c.h.b16 %v349
  %v2003 = vunpack.c.l.b16 %v350
  %v2004 = vunpack.c.h.b16 %v350
  %v2005 = vunpack.c.l.b16 %v351
  %v2006 = vunpack.c.h.b16 %v351
  %v2007 = vunpack.c.l.b16 %v352
  %v2008 = vunpack.c.h.b16 %v352
  %v2009 = vunpack.c.l.b16 %v353
  %v2010 = vunpack.c.h.b16 %v353
  %v2011 = vunpack.c.l.b16 %v354
  %v2012 = vunpack.c.h.b16 %v354
  %v2013 = vunpack.c.l.b16 %v355
  %v2014 = vunpack.c.h.b16 %v355
  %v2015 = vunpack.c.l.b16 %v356
  %v2016 = vunpack.c.h.b16 %v356
  %v2017 = vunpack.c.l.b16 %v357
  %v2018 = vunpack.c.h.b16 %v357
  %v2019 = vunpack.c.l.b16 %v358
  %v2020 = vunpack.c.h.b16 %v358
  %v2021 = vunpack.c.l.b16 %v359
  %v2022 = vunpack.c.h.b16 %v359
  %v2023 = vunpack.c.l.b16 %v360
  %v2024 = vunpack.c.h.b16 %v360
  %v2025 = vunpack.c.l.b16 %v361
  %v2026 = vunpack.c.h.b16 %v361
  %v2027 = vunpack.c.l.b16 %v362
  %v2028 = vunpack.c.h.b16 %v362
  %v2029 = vunpack.c.l.b16 %v363
  %v2030 = vunpack.c.h.b16 %v363
  %v2031 = vunpack.c.l.b16 %v364
  %v2032 = vunpack.c.h.b16 %v364
  %v2033 = vunpack.c.l.b16 %v365
  %v2034 = vunpack.c.h.b16 %v365
  %v2035 = vunpack.c.l.b16 %v366
  %v2036 = vunpack.c.h.b16 %v366
  %v2037 = vunpack.c.l.b16 %v367
  %v2038 = vunpack.c.h.b16 %v367
  %v2039 = vunpack.c.l.b16 %v368
  %v2040 = vunpack.c.h.b16 %v368
  %v2041 = vunpack.c.l.b16 %v369
  %v2042 = vunpack.c.h.b16 %v369
  %v2043 = vunpack.c.l.b16 %v370
  %v2044 = vunpack.c.h.b16 %v370
  %v2045 = vunpack.c.l.b16 %v371
  %v2046 = vunpack.c.h.b16 %v371
  %v2047 = vunpack.c.l.b16 %v372
  %v2048 = vunpack.c.h.b16 %v372
  %v2049 = vunpack.c.l.b16 %v373
  %v2050 = vunpack.c.h.b16 %v373
  %v2051 = vunpack.c.l.b16 %v374
  %v2052 = vunpack.c.h.b16 %v374
  %v2053 = vunpack.c.l.b16 %v375
  %v2054 = vunpack.c.h.b16 %v375
  %v2055 = vunpack.c.l.b16 %v376
  %v2056 = vunpack.c.h.b16 %v376
  %v2057 = vunpack.c.l.b16 %v377
  %v2058 = vunpack.c.h.b16 %v377
  %v2059 = vunpack.c.l.b16 %v378
  %v2060 = vunpack.c.h.b16 %v378
  %v2061 = vunpack.c.l.b16 %v379
  %v2062 = vunpack.c.h.b16 %v379
  %v2063 = vunpack.c.l.b16 %v380
  %v2064 = vunpack.c.h.b16 %v380
  %v2065 = vunpack.c.l.b16 %v381
  %v2066 = vunpack.c.h.b16 %v381
  %v2067 = vunpack.c.l.b16 %v382
  %v2068 = vunpack.c.h.b16 %v382
  %v2069 = vunpack.c.l.b16 %v383
  %v2070 = vunpack.c.h.b16 %v383
  %v2071 = vunpack.c.l.b16 %v384
  %v2072 = vunpack.c.h.b16 %v384
  %v2073 = vunpack.c.l.b16 %v385
  %v2074 = vunpack.c.h.b16 %v385
  %v2075 = vunpack.c.l.b16 %v386
  %v2076 = vunpack.c.h.b16 %v386
  %v2077 = vunpack.c.l.b16 %v387
  %v2078 = vunpack.c.h.b16 %v387
  %v2079 = vunpack.c.l.b16 %v388
  %v2080 = vunpack.c.h.b16 %v388
  %v2081 = vunpack.c.l.b16 %v389
  %v2082 = vunpack.c.h.b16 %v389
  %v2083 = vunpack.c.l.b16 %v390
  %v2084 = vunpack.c.h.b16 %v390
  %v2085 = vunpack.c.l.b16 %v391
  %v2086 = vunpack.c.h.b16 %v391
  %v2087 = vunpack.c.l.b16 %v392
  %v2088 = vunpack.c.h.b16 %v392
  %v2089 = vunpack.c.l.b16 %v393
  %v2090 = vunpack.c.h.b16 %v393
  %v2091 = vunpack.c.l.b16 %v394
  %v2092 = vunpack.c.h.b16 %v394
  %v2093 = vunpack.c.l.b16 %v395
  %v2094 = vunpack.c.h.b16 %v395
  %v2095 = vunpack.c.l.b16 %v396
  %v2096 = vunpack.c.h.b16 %v396
  %v2097 = vunpack.c.l.b16 %v397
  %v2098 = vunpack.c.h.b16 %v397
  %v2099 = vunpack.c.l.b16 %v398
  %v2100 = vunpack.c.h.b16 %v398
  %v2101 = vunpack.c.l.b16 %v399
  %v2102 = vunpack.c.h.b16 %v399
  %v2103 = vunpack.c.l.b16 %v400
  %v2104 = vunpack.c.h.b16 %v400
  %v2105 = vunpack.c.l.b16 %v401
  %v2106 = vunpack.c.h.b16 %v401
  %v2107 = vunpack.c.l.b16 %v402
  %v2108 = vunpack.c.h.b16 %v402
  %v2109 = vunpack.c.l.b16 %v403
  %v2110 = vunpack.c.h.b16 %v403
  %v2111 = vunpack.c.l.b16 %v404
  %v2112 = vunpack.c.h.b16 %v404
  %v2113 = vunpack.c.l.b16 %v405
  %v2114 = vunpack.c.h.b16 %v405
  %v2115 = vunpack.c.l.b16 %v406
  %v2116 = vunpack.c.h.b16 %v406
  %v2117 = vunpack.c.l.b16 %v407
  %v2118 = vunpack.c.h.b16 %v407
  %v2119 = vunpack.c.l.b16 %v408
  %v2120 = vunpack.c.h.b16 %v408
  %v2121 = vunpack.c.l.b16 %v409
  %v2122 = vunpack.c.h.b16 %v409
  %v2123 = vunpack.c.l.b16 %v410
  %v2124 = vunpack.c.h.b16 %v410
  %v2125 = vunpack.c.l.b16 %v411
  %v2126 = vunpack.c.h.b16 %v411
  %v2127 = vunpack.c.l.b16 %v412
  %v2128 = vunpack.c.h.b16 %v412
  %v2129 = vunpack.c.l.b16 %v413
  %v2130 = vunpack.c.h.b16 %v413
  %v2131 = vunpack.c.l.b16 %v414
  %v2132 = vunpack.c.h.b16 %v414
  %v2133 = vunpack.c.l.b16 %v415
  %v2134 = vunpack.c.h.b16 %v415
  %v2135 = vunpack.c.l.b16 %v416
  %v2136 = vunpack.c.h.b16 %v416
  %v2137 = vunpack.c.l.b16 %v417
  %v2138 = vunpack.c.h.b16 %v417
  %v2139 = vunpack.c.l.b16 %v418
  %v2140 = vunpack.c.h.b16 %v418
  %v2141 = vunpack.c.l.b16 %v419
  %v2142 = vunpack.c.h.b16 %v419
  %v2143 = vunpack.c.l.b16 %v420
  %v2144 = vunpack.c.h.b16 %v420
  %v2145 = vunpack.c.l.b16 %v421
  %v2146 = vunpack.c.h.b16 %v421
  %v2147 = vunpack.c.l.b16 %v422
  %v2148 = vunpack.c.h.b16 %v422
  %v2149 = vunpack.c.l.b16 %v423
  %v2150 = vunpack.c.h.b16 %v423
  %v2151 = vunpack.c.l.b16 %v424
  %v2152 = vunpack.c.h.b16 %v424
  %v2153 = vunpack.c.l.b16 %v425
  %v2154 = vunpack.c.h.b16 %v425
  %v2155 = vunpack.c.l.b16 %v426
  %v2156 = vunpack.c.h.b16 %v426
  %v2157 = vunpack.c.l.b16 %v427
  %v2158 = vunpack.c.h.b16 %v427
  %v2159 = vunpack.c.l.b16 %v428
  %v2160 = vunpack.c.h.b16 %v428
  %v2161 = vunpack.c.l.b16 %v429
  %v2162 = vunpack.c.h.b16 %v429
  %v2163 = vunpack.c.l.b16 %v430
  %v2164 = vunpack.c.h.b16 %v430
  %v2165 = vunpack.c.l.b16 %v431
  %v2166 = vunpack.c.h.b16 %v431
  %v2167 = vunpack.c.l.b16 %v432
  %v2168 = vunpack.c.h.b16 %v432
  %v2169 = vunpack.c.l.b16 %v433
  %v2170 = vunpack.c.h.b16 %v433
  %v2171 = vunpack.c.l.b16 %v434
  %v2172 = vunpack.c.h.b16 %v434
  %v2173 = vunpack.c.l.b16 %v435
  %v2174 = vunpack.c.h.b16 %v435
  %v2175 = vunpack.c.l.b16 %v436
  %v2176 = vunpack.c.h.b16 %v436
  %v2177 = vunpack.c.l.b16 %v437
  %v2178 = vunpack.c.h.b16 %v437
  %v2179 = vunpack.c.l.b16 %v438
  %v2180 = vunpack.c.h.b16 %v438
  %v2181 = vunpack.c.l.b16 %v439
  %v2182 = vunpack.c.h.b16 %v439
  %v2183 = vunpack.c.l.b16 %v440
  %v2184 = vunpack.c.h.b16 %v440
  %v2185 = vunpack.c.l.b16 %v441
  %v2186 = vunpack.c.h.b16 %v441
  %v2187 = vunpack.c.l.b16 %v442
  %v2188 = vunpack.c.h.b16 %v442
  %v2189 = vunpack.c.l.b16 %v443
  %v2190 = vunpack.c.h.b16 %v443
  %v2191 = vunpack.c.l.b16 %v444
  %v2192 = vunpack.c.h.b16 %v444
  %v2193 = vunpack.c.l.b16 %v445
  %v2194 = vunpack.c.h.b16 %v445
  %v2195 = vunpack.c.l.b16 %v446
  %v2196 = vunpack.c.h.b16 %v446
  %v2197 = vunpack.c.l.b16 %v447
  %v2198 = vunpack.c.h.b16 %v447
  %v2199 = vunpack.c.l.b16 %v448
  %v2200 = vunpack.c.h.b16 %v448
  %v2201 = vunpack.c.l.b16 %v449
  %v2202 = vunpack.c.h.b16 %v449
  %v2203 = vunpack.c.l.b16 %v450
  %v2204 = vunpack.c.h.b16 %v450
  %v2205 = vunpack.c.l.b16 %v451
  %v2206 = vunpack.c.h.b16 %v451
  %v2207 = vunpack.c.l.b16 %v452
  %v2208 = vunpack.c.h.b16 %v452
  %v2209 = vunpack.c.l.b16 %v453
  %v2210 = vunpack.c.h.b16 %v453
  %v2211 = vunpack.c.l.b16 %v454
  %v2212 = vunpack.c.h.b16 %v454
  %v2213 = vunpack.c.l.b16 %v455
  %v2214 = vunpack.c.h.b16 %v455
  %v2215 = vunpack.c.l.b16 %v456
  %v2216 = vunpack.c.h.b16 %v456
  %v2217 = vunpack.c.l.b16 %v457
  %v2218 = vunpack.c.h.b16 %v457
  %v2219 = vunpack.c.l.b16 %v458
  %v2220 = vunpack.c.h.b16 %v458
  %v2221 = vunpack.c.l.b16 %v459
  %v2222 = vunpack.c.h.b16 %v459
  %v2223 = vunpack.c.l.b16 %v460
  %v2224 = vunpack.c.h.b16 %v460
  %v2225 = vunpack.c.l.b16 %v461
  %v2226 = vunpack.c.h.b16 %v461
  %v2227 = vunpack.c.l.b16 %v462
  %v2228 = vunpack.c.h.b16 %v462
  %v2229 = vunpack.c.l.b16 %v463
  %v2230 = vunpack.c.h.b16 %v463
  %v2231 = vunpack.c.l.b16 %v464
  %v2232 = vunpack.c.h.b16 %v464
  %v2233 = vunpack.c.l.b16 %v465
  %v2234 = vunpack.c.h.b16 %v465
  %v2235 = vunpack.c.l.b16 %v466
  %v2236 = vunpack.c.h.b16 %v466
  %v2237 = vunpack.c.l.b16 %v467
  %v2238 = vunpack.c.h.b16 %v467
  %v2239 = vunpack.c.l.b16 %v468
  %v2240 = vunpack.c.h.b16 %v468
  %v2241 = vunpack.c.l.b16 %v469
  %v2242 = vunpack.c.h.b16 %v469
  %v2243 = vunpack.c.l.b16 %v470
  %v2244 = vunpack.c.h.b16 %v470
  %v2245 = vunpack.c.l.b16 %v471
  %v2246 = vunpack.c.h.b16 %v471
  %v2247 = vunpack.c.l.b16 %v472
  %v2248 = vunpack.c.h.b16 %v472
  %v2249 = vunpack.c.l.b16 %v473
  %v2250 = vunpack.c.h.b16 %v473
  %v2251 = vunpack.c.l.b16 %v474
  %v2252 = vunpack.c.h.b16 %v474
  %v2253 = vunpack.c.l.b16 %v475
  %v2254 = vunpack.c.h.b16 %v475
  %v2255 = vunpack.c.l.b16 %v476
  %v2256 = vunpack.c.h.b16 %v476
  %v2257 = vunpack.c.l.b16 %v477
  %v2258 = vunpack.c.h.b16 %v477
  %v2259 = vunpack.c.l.b16 %v478
  %v2260 = vunpack.c.h.b16 %v478
  %v2261 = vunpack.c.l.b16 %v479
  %v2262 = vunpack.c.h.b16 %v479
  %v2263 = vunpack.c.l.b16 %v480
  %v2264 = vunpack.c.h.b16 %v480
  %v2265 = vunpack.c.l.b16 %v481
  %v2266 = vunpack.c.h.b16 %v481
  %v2267 = vunpack.c.l.b16 %v482
  %v2268 = vunpack.c.h.b16 %v482
  %v2269 = vunpack.c.l.b16 %v483
  %v2270 = vunpack.c.h.b16 %v483
  %v2271 = vunpack.c.l.b16 %v484
  %v2272 = vunpack.c.h.b16 %v484
  %v2273 = vunpack.c.l.b16 %v485
  %v2274 = vunpack.c.h.b16 %v485
  %v2275 = vunpack.c.l.b16 %v486
  %v2276 = vunpack.c.h.b16 %v486
  %v2277 = vunpack.c.l.b16 %v487
  %v2278 = vunpack.c.h.b16 %v487
  %v2279 = vunpack.c.l.b16 %v488
  %v2280 = vunpack.c.h.b16 %v488
  %v2281 = vunpack.c.l.b16 %v489
  %v2282 = vunpack.c.h.b16 %v489
  %v2283 = vunpack.c.l.b16 %v490
  %v2284 = vunpack.c.h.b16 %v490
  %v2285 = vunpack.c.l.b16 %v491
  %v2286 = vunpack.c.h.b16 %v491
  %v2287 = vunpack.c.l.b16 %v492
  %v2288 = vunpack.c.h.b16 %v492
  %v2289 = vunpack.c.l.b16 %v493
  %v2290 = vunpack.c.h.b16 %v493
  %v2291 = vunpack.c.l.b16 %v494
  %v2292 = vunpack.c.h.b16 %v494
  %v2293 = vunpack.c.l.b16 %v495
  %v2294 = vunpack.c.h.b16 %v495
  %v2295 = vunpack.c.l.b16 %v496
  %v2296 = vunpack.c.h.b16 %v496
  %v2297 = vunpack.c.l.b16 %v497
  %v2298 = vunpack.c.h.b16 %v497
  %v2299 = vunpack.c.l.b16 %v498
  %v2300 = vunpack.c.h.b16 %v498
  %v2301 = vunpack.c.l.b16 %v499
  %v2302 = vunpack.c.h.b16 %v499
  %v2303 = vunpack.c.l.b16 %v500
  %v2304 = vunpack.c.h.b16 %v500
  %v2305 = vunpack.c.l.b16 %v501
  %v2306 = vunpack.c.h.b16 %v501
  %v2307 = vunpack.c.l.b16 %v502
  %v2308 = vunpack.c.h.b16 %v502
  %v2309 = vunpack.c.l.b16 %v503
  %v2310 = vunpack.c.h.b16 %v503
  %v2311 = vunpack.c.l.b16 %v504
  %v2312 = vunpack.c.h.b16 %v504
  %v2313 = vunpack.c.l.b16 %v505
  %v2314 = vunpack.c.h.b16 %v505
  %v2315 = vunpack.c.l.b16 %v506
  %v2316 = vunpack.c.h.b16 %v506
  %v2317 = vunpack.c.l.b16 %v507
  %v2318 = vunpack.c.h.b16 %v507
  %v2319 = vunpack.c.l.b16 %v508
  %v2320 = vunpack.c.h.b16 %v508
  %v2321 = vunpack.c.l.b16 %v509
  %v2322 = vunpack.c.h.b16 %v509
  %v2323 = vunpack.c.l.b16 %v510
  %v2324 = vunpack.c.h.b16 %v510
  %v2325 = vunpack.c.l.b16 %v511
  %v2326 = vunpack.c.h.b16 %v511
  %v2327 = vunpack.c.l.b16 %v512
  %v2328 = vunpack.c.h.b16 %v512
  %v2329 = vunpack.c.l.b16 %v513
  %v2330 = vunpack.c.h.b16 %v513
  %v2331 = vunpack.c.l.b16 %v514
  %v2332 = vunpack.c.h.b16 %v514
  %v2333 = vunpack.c.l.b16 %v515
  %v2334 = vunpack.c.h.b16 %v515
  %v2335 = vunpack.c.l.b16 %v516
  %v2336 = vunpack.c.h.b16 %v516
  %v2337 = vunpack.c.l.b16 %v517
  %v2338 = vunpack.c.h.b16 %v517
  %v2339 = vunpack.c.l.b16 %v518
  %v2340 = vunpack.c.h.b16 %v518
  %v2341 = vunpack.c.l.b16 %v519
  %v2342 = vunpack.c.h.b16 %v519
  %v2343 = vunpack.c.l.b16 %v520
  %v2344 = vunpack.c.h.b16 %v520
  %v2345 = vunpack.c.l.b16 %v521
  %v2346 = vunpack.c.h.b16 %v521
  %v2347 = vunpack.c.l.b16 %v522
  %v2348 = vunpack.c.h.b16 %v522
  %v2349 = vunpack.c.l.b16 %v523
  %v2350 = vunpack.c.h.b16 %v523
  %v2351 = vunpack.c.l.b16 %v524
  %v2352 = vunpack.c.h.b16 %v524
  %v2353 = vunpack.c.l.b16 %v525
  %v2354 = vunpack.c.h.b16 %v525
  %v2355 = vunpack.c.l.b16 %v526
  %v2356 = vunpack.c.h.b16 %v526
  %v2357 = vunpack.c.l.b16 %v527
  %v2358 = vunpack.c.h.b16 %v527
  %v2359 = vunpack.c.l.b16 %v528
  %v2360 = vunpack.c.h.b16 %v528
  %v2361 = vunpack.c.l.b16 %v529
  %v2362 = vunpack.c.h.b16 %v529
  %v2363 = vunpack.c.l.b16 %v530
  %v2364 = vunpack.c.h.b16 %v530
  %v2365 = vunpack.c.l.b16 %v531
  %v2366 = vunpack.c.h.b16 %v531
  %v2367 = vunpack.c.l.b16 %v532
  %v2368 = vunpack.c.h.b16 %v532
  %v2369 = vunpack.c.l.b16 %v533
  %v2370 = vunpack.c.h.b16 %v533
  %v2371 = vunpack.c.l.b16 %v534
  %v2372 = vunpack.c.h.b16 %v534
  %v2373 = vunpack.c.l.b16 %v535
  %v2374 = vunpack.c.h.b16 %v535
  %v2375 = vunpack.c.l.b16 %v536
  %v2376 = vunpack.c.h.b16 %v536
  %v2377 = vunpack.c.l.b16 %v537
  %v2378 = vunpack.c.h.b16 %v537
  %v2379 = vunpack.c.l.b16 %v538
  %v2380 = vunpack.c.h.b16 %v538
  %v2381 = vunpack.c.l.b16 %v539
  %v2382 = vunpack.c.h.b16 %v539
  %v2383 = vunpack.c.l.b16 %v540
  %v2384 = vunpack.c.h.b16 %v540
  %v2385 = vunpack.c.l.b16 %v541
  %v2386 = vunpack.c.h.b16 %v541
  %v2387 = vunpack.c.l.b16 %v542
  %v2388 = vunpack.c.h.b16 %v542
  %v2389 = vunpack.c.l.b16 %v543
  %v2390 = vunpack.c.h.b16 %v543
  %v2391 = vunpack.c.l.b16 %v544
  %v2392 = vunpack.c.h.b16 %v544
  %v2393 = vunpack.c.l.b16 %v545
  %v2394 = vunpack.c.h.b16 %v545
  %v2395 = vunpack.c.l.b16 %v546
  %v2396 = vunpack.c.h.b16 %v546
  %v2397 = vunpack.c.l.b16 %v547
  %v2398 = vunpack.c.h.b16 %v547
  %v2399 = vunpack.c.l.b16 %v548
  %v2400 = vunpack.c.h.b16 %v548
  %v2401 = vunpack.c.l.b16 %v549
  %v2402 = vunpack.c.h.b16 %v549
  %v2403 = vunpack.c.l.b16 %v550
  %v2404 = vunpack.c.h.b16 %v550
  %v2405 = vunpack.c.l.b16 %v551
  %v2406 = vunpack.c.h.b16 %v551
  %v2407 = vunpack.c.l.b16 %v552
  %v2408 = vunpack.c.h.b16 %v552
  %v2409 = vunpack.c.l.b16 %v553
  %v2410 = vunpack.c.h.b16 %v553
  %v2411 = vunpack.c.l.b16 %v554
  %v2412 = vunpack.c.h.b16 %v554
  %v2413 = vunpack.c.l.b16 %v555
  %v2414 = vunpack.c.h.b16 %v555
  %v2415 = vunpack.c.l.b16 %v556
  %v2416 = vunpack.c.h.b16 %v556
  %v2417 = vunpack.c.l.b16 %v557
  %v2418 = vunpack.c.h.b16 %v557
  %v2419 = vunpack.c.l.b16 %v558
  %v2420 = vunpack.c.h.b16 %v558
  %v2421 = vunpack.c.l.b16 %v559
  %v2422 = vunpack.c.h.b16 %v559
  %v2423 = vunpack.c.l.b16 %v560
  %v2424 = vunpack.c.h.b16 %v560
  %v2425 = vunpack.c.l.b16 %v561
  %v2426 = vunpack.c.h.b16 %v561
  %v2427 = vunpack.c.l.b16 %v562
  %v2428 = vunpack.c.h.b16 %v562
  %v2429 = vunpack.c.l.b16 %v563
  %v2430 = vunpack.c.h.b16 %v563
  %v2431 = vunpack.c.l.b16 %v564
  %v2432 = vunpack.c.h.b16 %v564
  %v2433 = vunpack.c.l.b16 %v565
  %v2434 = vunpack.c.h.b16 %v565
  %v2435 = vunpack.c.l.b16 %v566
  %v2436 = vunpack.c.h.b16 %v566
  %v2437 = vunpack.c.l.b16 %v567
  %v2438 = vunpack.c.h.b16 %v567
  %v2439 = vunpack.c.l.b16 %v568
  %v2440 = vunpack.c.h.b16 %v568
  %v2441 = vunpack.c.l.b16 %v569
  %v2442 = vunpack.c.h.b16 %v569
  %v2443 = vunpack.c.l.b16 %v570
  %v2444 = vunpack.c.h.b16 %v570
  %v2445 = vunpack.c.l.b16 %v571
  %v2446 = vunpack.c.h.b16 %v571
  %v2447 = vunpack.c.l.b16 %v572
  %v2448 = vunpack.c.h.b16 %v572
  %v2449 = vunpack.c.l.b16 %v573
  %v2450 = vunpack.c.h.b16 %v573
  %v2451 = vunpack.c.l.b16 %v574
  %v2452 = vunpack.c.h.b16 %v574
  %v2453 = vunpack.c.l.b16 %v575
  %v2454 = vunpack.c.h.b16 %v575
  %v2455 = vunpack.c.l.b16 %v576
  %v2456 = vunpack.c.h.b16 %v576
  %v2457 = vunpack.c.l.b16 %v577
  %v2458 = vunpack.c.h.b16 %v577
  %v2459 = vunpack.c.l.b16 %v578
  %v2460 = vunpack.c.h.b16 %v578
  %v2461 = vunpack.c.l.b16 %v579
  %v2462 = vunpack.c.h.b16 %v579
  %v2463 = vunpack.c.l.b16 %v580
  %v2464 = vunpack.c.h.b16 %v580
  %v2465 = vunpack.c.l.b16 %v581
  %v2466 = vunpack.c.h.b16 %v581
  %v2467 = vunpack.c.l.b16 %v582
  %v2468 = vunpack.c.h.b16 %v582
  %v2469 = vunpack.c.l.b16 %v583
  %v2470 = vunpack.c.h.b16 %v583
  %v2471 = vunpack.c.l.b16 %v584
  %v2472 = vunpack.c.h.b16 %v584
  %v2473 = vunpack.c.l.b16 %v585
  %v2474 = vunpack.c.h.b16 %v585
  %v2475 = vunpack.c.l.b16 %v586
  %v2476 = vunpack.c.h.b16 %v586
  %v2477 = vunpack.c.l.b16 %v587
  %v2478 = vunpack.c.h.b16 %v587
  %v2479 = vunpack.c.l.b16 %v588
  %v2480 = vunpack.c.h.b16 %v588
  %v2481 = vunpack.c.l.b16 %v589
  %v2482 = vunpack.c.h.b16 %v589
  %v2483 = vunpack.c.l.b16 %v590
  %v2484 = vunpack.c.h.b16 %v590
  %v2485 = vunpack.c.l.b16 %v591
  %v2486 = vunpack.c.h.b16 %v591
  %v2487 = vunpack.c.l.b16 %v592
  %v2488 = vunpack.c.h.b16 %v592
  %v2489 = vunpack.c.l.b16 %v593
  %v2490 = vunpack.c.h.b16 %v593
  %v2491 = vunpack.c.l.b16 %v594
  %v2492 = vunpack.c.h.b16 %v594
  %v2493 = vunpack.c.l.b16 %v595
  %v2494 = vunpack.c.h.b16 %v595
  %v2495 = vunpack.c.l.b16 %v596
  %v2496 = vunpack.c.h.b16 %v596
  %v2497 = vunpack.c.l.b16 %v597
  %v2498 = vunpack.c.h.b16 %v597
  %v2499 = vunpack.c.l.b16 %v598
  %v2500 = vunpack.c.h.b16 %v598
  %v2501 = vunpack.c.l.b16 %v599
  %v2502 = vunpack.c.h.b16 %v599
  %v2503 = vunpack.c.l.b16 %v600
  %v2504 = vunpack.c.h.b16 %v600
  %v2505 = vunpack.c.l.b16 %v601
  %v2506 = vunpack.c.h.b16 %v601
  %v2507 = vunpack.c.l.b16 %v602
  %v2508 = vunpack.c.h.b16 %v602
  %v2509 = vunpack.c.l.b16 %v603
  %v2510 = vunpack.c.h.b16 %v603
  %v2511 = vunpack.c.l.b16 %v604
  %v2512 = vunpack.c.h.b16 %v604
  %v2513 = vunpack.c.l.b16 %v605
  %v2514 = vunpack.c.h.b16 %v605
  %v2515 = vunpack.c.l.b16 %v606
  %v2516 = vunpack.c.h.b16 %v606
  %v2517 = vunpack.c.l.b16 %v607
  %v2518 = vunpack.c.h.b16 %v607
  %v2519 = vunpack.c.l.b16 %v608
  %v2520 = vunpack.c.h.b16 %v608
  %v2521 = vunpack.c.l.b16 %v609
  %v2522 = vunpack.c.h.b16 %v609
  %v2523 = vunpack.c.l.b16 %v610
  %v2524 = vunpack.c.h.b16 %v610
  %v2525 = vunpack.c.l.b16 %v611
  %v2526 = vunpack.c.h.b16 %v611
  %v2527 = vunpack.c.l.b16 %v612
  %v2528 = vunpack.c.h.b16 %v612
  %v2529 = vunpack.c.l.b16 %v613
  %v2530 = vunpack.c.h.b16 %v613
  %v2531 = vunpack.c.l.b16 %v614
  %v2532 = vunpack.c.h.b16 %v614
  %v2533 = vunpack.c.l.b16 %v615
  %v2534 = vunpack.c.h.b16 %v615
  %v2535 = vunpack.c.l.b16 %v616
  %v2536 = vunpack.c.h.b16 %v616
  %v2537 = vunpack.c.l.b16 %v617
  %v2538 = vunpack.c.h.b16 %v617
  %v2539 = vunpack.c.l.b16 %v618
  %v2540 = vunpack.c.h.b16 %v618
  %v2541 = vunpack.c.l.b16 %v619
  %v2542 = vunpack.c.h.b16 %v619
  %v2543 = vunpack.c.l.b16 %v620
  %v2544 = vunpack.c.h.b16 %v620
  %v2545 = vunpack.c.l.b16 %v621
  %v2546 = vunpack.c.h.b16 %v621
  %v2547 = vunpack.c.l.b16 %v622
  %v2548 = vunpack.c.h.b16 %v622
  %v2549 = vunpack.c.l.b16 %v623
  %v2550 = vunpack.c.h.b16 %v623
  %v2551 = vunpack.c.l.b16 %v624
  %v2552 = vunpack.c.h.b16 %v624
  %v2553 = vunpack.c.l.b16 %v625
  %v2554 = vunpack.c.h.b16 %v625
  %v2555 = vunpack.c.l.b16 %v626
  %v2556 = vunpack.c.h.b16 %v626
  %v2557 = vunpack.c.l.b16 %v627
  %v2558 = vunpack.c.h.b16 %v627
  %v2559 = vunpack.c.l.b16 %v628
  %v2560 = vunpack.c.h.b16 %v628
  %v2561 = vunpack.c.l.b16 %v629
  %v2562 = vunpack.c.h.b16 %v629
  %v2563 = vunpack.c.l.b16 %v630
  %v2564 = vunpack.c.h.b16 %v630
  %v2565 = vunpack.c.l.b16 %v631
  %v2566 = vunpack.c.h.b16 %v631
  %v2567 = vunpack.c.l.b16 %v632
  %v2568 = vunpack.c.h.b16 %v632
  %v2569 = vunpack.c.l.b16 %v633
  %v2570 = vunpack.c.h.b16 %v633
  %v2571 = vunpack.c.l.b16 %v634
  %v2572 = vunpack.c.h.b16 %v634
  %v2573 = vunpack.c.l.b16 %v635
  %v2574 = vunpack.c.h.b16 %v635
  %v2575 = vunpack.c.l.b16 %v636
  %v2576 = vunpack.c.h.b16 %v636
  %v2577 = vunpack.c.l.b16 %v637
  %v2578 = vunpack.c.h.b16 %v637
  %v2579 = vunpack.c.l.b16 %v638
  %v2580 = vunpack.c.h.b16 %v638
  %v2581 = vunpack.c.l.b16 %v639
  %v2582 = vunpack.c.h.b16 %v639
  %v2583 = vunpack.c.l.b16 %v640
  %v2584 = vunpack.c.h.b16 %v640
  %v2585 = vunpack.c.l.b16 %v641
  %v2586 = vunpack.c.h.b16 %v641
  %v2587 = vunpack.c.l.b16 %v642
  %v2588 = vunpack.c.h.b16 %v642
  %v2589 = vunpack.c.l.b16 %v643
  %v2590 = vunpack.c.h.b16 %v643
  %v2591 = vunpack.c.l.b16 %v644
  %v2592 = vunpack.c.h.b16 %v644
  %v2593 = vunpack.c.l.b16 %v645
  %v2594 = vunpack.c.h.b16 %v645
  %v2595 = vunpack.c.l.b16 %v646
  %v2596 = vunpack.c.h.b16 %v646
  %v2597 = vunpack.c.l.b16 %v647
  %v2598 = vunpack.c.h.b16 %v647
  %v2599 = vunpack.c.l.b16 %v648
  %v2600 = vunpack.c.h.b16 %v648
  %v2601 = vunpack.c.l.b16 %v649
  %v2602 = vunpack.c.h.b16 %v649
  %v2603 = vunpack.c.l.b16 %v650
  %v2604 = vunpack.c.h.b16 %v650
  %v2605 = vunpack.c.l.b16 %v651
  %v2606 = vunpack.c.h.b16 %v651
  %v2607 = vunpack.c.l.b16 %v652
  %v2608 = vunpack.c.h.b16 %v652
  %v2609 = vunpack.c.l.b16 %v653
  %v2610 = vunpack.c.h.b16 %v653
  %v2611 = vunpack.c.l.b16 %v654
  %v2612 = vunpack.c.h.b16 %v654
  %v2613 = vunpack.c.l.b16 %v655
  %v2614 = vunpack.c.h.b16 %v655
  %v2615 = vunpack.c.l.b16 %v656
  %v2616 = vunpack.c.h.b16 %v656
  %v2617 = vunpack.c.l.b16 %v657
  %v2618 = vunpack.c.h.b16 %v657
  %v2619 = vunpack.c.l.b16 %v658
  %v2620 = vunpack.c.h.b16 %v658
  %v2621 = vunpack.c.l.b16 %v659
  %v2622 = vunpack.c.h.b16 %v659
  %v2623 = vunpack.c.l.b16 %v660
  %v2624 = vunpack.c.h.b16 %v660
  %v2625 = vunpack.c.l.b16 %v661
  %v2626 = vunpack.c.h.b16 %v661
  %v2627 = vunpack.c.l.b16 %v662
  %v2628 = vunpack.c.h.b16 %v662
  %v2629 = vunpack.c.l.b16 %v663
  %v2630 = vunpack.c.h.b16 %v663
  %v2631 = vunpack.c.l.b16 %v664
  %v2632 = vunpack.c.h.b16 %v664
  %v2633 = vunpack.c.l.b16 %v665
  %v2634 = vunpack.c.h.b16 %v665
  %v2635 = vunpack.c.l.b16 %v666
  %v2636 = vunpack.c.h.b16 %v666
  %v2637 = vunpack.c.l.b16 %v667
  %v2638 = vunpack.c.h.b16 %v667
  %v2639 = vunpack.c.l.b16 %v668
  %v2640 = vunpack.c.h.b16 %v668
  %v2641 = vunpack.c.l.b16 %v669
  %v2642 = vunpack.c.h.b16 %v669
  %v2643 = vunpack.c.l.b16 %v670
  %v2644 = vunpack.c.h.b16 %v670
  %v2645 = vunpack.c.l.b16 %v671
  %v2646 = vunpack.c.h.b16 %v671
  %v2647 = vunpack.c.l.b16 %v672
  %v2648 = vunpack.c.h.b16 %v672
  %v2649 = vunpack.c.l.b16 %v673
  %v2650 = vunpack.c.h.b16 %v673
  %v2651 = vunpack.c.l.b16 %v674
  %v2652 = vunpack.c.h.b16 %v674
  %v2653 = vunpack.c.l.b16 %v675
  %v2654 = vunpack.c.h.b16 %v675
  %v2655 = vunpack.c.l.b16 %v676
  %v2656 = vunpack.c.h.b16 %v676
  %v2657 = vunpack.c.l.b16 %v677
  %v2658 = vunpack.c.h.b16 %v677
  %v2659 = vunpack.c.l.b16 %v678
  %v2660 = vunpack.c.h.b16 %v678
  %v2661 = vunpack.c.l.b16 %v679
  %v2662 = vunpack.c.h.b16 %v679
  %v2663 = vunpack.c.l.b16 %v680
  %v2664 = vunpack.c.h.b16 %v680
  %v2665 = vunpack.c.l.b16 %v681
  %v2666 = vunpack.c.h.b16 %v681
  %v2667 = vunpack.c.l.b16 %v682
  %v2668 = vunpack.c.h.b16 %v682
  %v2669 = vunpack.c.l.b16 %v683
  %v2670 = vunpack.c.h.b16 %v683
  %v2671 = vunpack.c.l.b16 %v684
  %v2672 = vunpack.c.h.b16 %v684
  %v2673 = vunpack.c.l.b16 %v685
  %v2674 = vunpack.c.h.b16 %v685
  %v2675 = vunpack.c.l.b16 %v686
  %v2676 = vunpack.c.h.b16 %v686
  %v2677 = vunpack.c.l.b16 %v687
  %v2678 = vunpack.c.h.b16 %v687
  %v2679 = vunpack.c.l.b16 %v688
  %v2680 = vunpack.c.h.b16 %v688
  %v2681 = vunpack.c.l.b16 %v689
  %v2682 = vunpack.c.h.b16 %v689
  %v2683 = vunpack.c.l.b16 %v690
  %v2684 = vunpack.c.h.b16 %v690
  %v2685 = vunpack.c.l.b16 %v691
  %v2686 = vunpack.c.h.b16 %v691
  %v2687 = vunpack.c.l.b16 %v692
  %v2688 = vunpack.c.h.b16 %v692
  %v2689 = vunpack.c.l.b16 %v693
  %v2690 = vunpack.c.h.b16 %v693
  %v2691 = vunpack.c.l.b16 %v694
  %v2692 = vunpack.c.h.b16 %v694
  %v2693 = vunpack.c.l.b16 %v695
  %v2694 = vunpack.c.h.b16 %v695
  %v2695 = vunpack.c.l.b16 %v696
  %v2696 = vunpack.c.h.b16 %v696
  %v2697 = vunpack.c.l.b16 %v697
  %v2698 = vunpack.c.h.b16 %v697
  %v2699 = vunpack.c.l.b16 %v698
  %v2700 = vunpack.c.h.b16 %v698
  %v2701 = vunpack.c.l.b16 %v699
  %v2702 = vunpack.c.h.b16 %v699
  %v2703 = vunpack.c.l.b16 %v700
  %v2704 = vunpack.c.h.b16 %v700
  %v2705 = vunpack.c.l.b16 %v701
  %v2706 = vunpack.c.h.b16 %v701
  %v2707 = vunpack.c.l.b16 %v702
  %v2708 = vunpack.c.h.b16 %v702
  %v2709 = vunpack.c.l.b16 %v703
  %v2710 = vunpack.c.h.b16 %v703
  %v2711 = vunpack.c.l.b16 %v704
  %v2712 = vunpack.c.h.b16 %v704
  %v2713 = vunpack.c.l.b16 %v705
  %v2714 = vunpack.c.h.b16 %v705
  %v2715 = vunpack.c.l.b16 %v706
  %v2716 = vunpack.c.h.b16 %v706
  %v2717 = vunpack.c.l.b16 %v707
  %v2718 = vunpack.c.h.b16 %v707
  %v2719 = vunpack.c.l.b16 %v708
  %v2720 = vunpack.c.h.b16 %v708
  %v2721 = vpack.c.b16 %v1449, %v1441
  %v2722 = vpack.c.b16 %v1450, %v1442
  %v2723 = vpack.c.b16 %v1451, %v1443
  %v2724 = vpack.c.b16 %v1452, %v1444
  %v2725 = vpack.c.b16 %v1453, %v1445
  %v2726 = vpack.c.b16 %v1454, %v1446
  %v2727 = vpack.c.b16 %v1455, %v1447
  %v2728 = vpack.c.b16 %v1456, %v1448
  %v2729 = vpack.c.b16 %v1465, %v1457
  %v2730 = vpack.c.b16 %v1466, %v1458
  %v2731 = vpack.c.b16 %v1467, %v1459
  %v2732 = vpack.c.b16 %v1468, %v1460
  %v2733 = vpack.c.b16 %v1469, %v1461
  %v2734 = vpack.c.b16 %v1470, %v1462
  %v2735 = vpack.c.b16 %v1471, %v1463
  %v2736 = vpack.c.b16 %v1472, %v1464
  %v2737 = vpack.c.b16 %v1481, %v1473
  %v2738 = vpack.c.b16 %v1482, %v1474
  %v2739 = vpack.c.b16 %v1483, %v1475
  %v2740 = vpack.c.b16 %v1484, %v1476
  %v2741 = vpack.c.b16 %v1485, %v1477
  %v2742 = vpack.c.b16 %v1486, %v1478
  %v2743 = vpack.c.b16 %v1487, %v1479
  %v2744 = vpack.c.b16 %v1488, %v1480
  %v2745 = vpack.c.b16 %v1497, %v1489
  %v2746 = vpack.c.b16 %v1498, %v1490
  %v2747 = vpack.c.b16 %v1499, %v1491
  %v2748 = vpack.c.b16 %v1500, %v1492
  %v2749 = vpack.c.b16 %v1501, %v1493
  %v2750 = vpack.c.b16 %v1502, %v1494
  %v2751 = vpack.c.b16 %v1503, %v1495
  %v2752 = vpack.c.b16 %v1504, %v1496
  %v2753 = vpack.c.b16 %v1513, %v1505
  %v2754 = vpack.c.b16 %v1514, %v1506
  %v2755 = vpack.c.b16 %v1515, %v1507
  %v2756 = vpack.c.b16 %v1516, %v1508
  %v2757 = vpack.c.b16 %v1517, %v1509
  %v2758 = vpack.c.b16 %v1518, %v1510
  %v2759 = vpack.c.b16 %v1519, %v1511
  %v2760 = vpack.c.b16 %v1520, %v1512
  %v2761 = vpack.c.b16 %v1529, %v1521
  %v2762 = vpack.c.b16 %v1530, %v1522
  %v2763 = vpack.c.b16 %v1531, %v1523
  %v2764 = vpack.c.b16 %v1532, %v1524
  %v2765 = vpack.c.b16 %v1533, %v1525
  %v2766 = vpack.c.b16 %v1534, %v1526
  %v2767 = vpack.c.b16 %v1535, %v1527
  %v2768 = vpack.c.b16 %v1536, %v1528
  %v2769 = vpack.c.b16 %v1545, %v1537
  %v2770 = vpack.c.b16 %v1546, %v1538
  %v2771 = vpack.c.b16 %v1547, %v1539
  %v2772 = vpack.c.b16 %v1548, %v1540
  %v2773 = vpack.c.b16 %v1549, %v1541
  %v2774 = vpack.c.b16 %v1550, %v1542
  %v2775 = vpack.c.b16 %v1551, %v1543
  %v2776 = vpack.c.b16 %v1552, %v1544
  %v2777 = vpack.c.b16 %v1561, %v1553
  %v2778 = vpack.c.b16 %v1562, %v1554
  %v2779 = vpack.c.b16 %v1563, %v1555
  %v2780 = vpack.c.b16 %v1564, %v1556
  %v2781 = vpack.c.b16 %v1565, %v1557
  %v2782 = vpack.c.b16 %v1566, %v1558
  %v2783 = vpack.c.b16 %v1567, %v1559
  %v2784 = vpack.c.b16 %v1568, %v1560
  %v2785 = vpack.c.b16 %v1577, %v1569
  %v2786 = vpack.c.b16 %v1578, %v1570
  %v2787 = vpack.c.b16 %v1579, %v1571
  %v2788 = vpack.c.b16 %v1580, %v1572
  %v2789 = vpack.c.b16 %v1581, %v1573
  %v2790 = vpack.c.b16 %v1582, %v1574
  %v2791 = vpack.c.b16 %v1583, %v1575
  %v2792 = vpack.c.b16 %v1584, %v1576
  %v2793 = vpack.c.b16 %v1593, %v1585
  %v2794 = vpack.c.b16 %v1594, %v1586
  %v2795 = vpack.c.b16 %v1595, %v1587
  %v2796 = vpack.c.b16 %v1596, %v1588
  %v2797 = vpack.c.b16 %v1597, %v1589
  %v2798 = vpack.c.b16 %v1598, %v1590
  %v2799 = vpack.c.b16 %v1599, %v1591
  %v2800 = vpack.c.b16 %v1600, %v1592
  %v2801 = vpack.c.b16 %v1609, %v1601
  %v2802 = vpack.c.b16 %v1610, %v1602
  %v2803 = vpack.c.b16 %v1611, %v1603
  %v2804 = vpack.c.b16 %v1612, %v1604
  %v2805 = vpack.c.b16 %v1613, %v1605
  %v2806 = vpack.c.b16 %v1614, %v1606
  %v2807 = vpack.c.b16 %v1615, %v1607
  %v2808 = vpack.c.b16 %v1616, %v1608
  %v2809 = vpack.c.b16 %v1625, %v1617
  %v2810 = vpack.c.b16 %v1626, %v1618
  %v2811 = vpack.c.b16 %v1627, %v1619
  %v2812 = vpack.c.b16 %v1628, %v1620
  %v2813 = vpack.c.b16 %v1629, %v1621
  %v2814 = vpack.c.b16 %v1630, %v1622
  %v2815 = vpack.c.b16 %v1631, %v1623
  %v2816 = vpack.c.b16 %v1632, %v1624
  %v2817 = vpack.c.b16 %v1641, %v1633
  %v2818 = vpack.c.b16 %v1642, %v1634
  %v2819 = vpack.c.b16 %v1643, %v1635
  %v2820 = vpack.c.b16 %v1644, %v1636
  %v2821 = vpack.c.b16 %v1645, %v1637
  %v2822 = vpack.c.b16 %v1646, %v1638
  %v2823 = vpack.c.b16 %v1647, %v1639
  %v2824 = vpack.c.b16 %v1648, %v1640
  %v2825 = vpack.c.b16 %v1657, %v1649
  %v2826 = vpack.c.b16 %v1658, %v1650
  %v2827 = vpack.c.b16 %v1659, %v1651
  %v2828 = vpack.c.b16 %v1660, %v1652
  %v2829 = vpack.c.b16 %v1661, %v1653
  %v2830 = vpack.c.b16 %v1662, %v1654
  %v2831 = vpack.c.b16 %v1663, %v1655
  %v2832 = vpack.c.b16 %v1664, %v1656
  %v2833 = vpack.c.b16 %v1673, %v1665
  %v2834 = vpack.c.b16 %v1674, %v1666
  %v2835 = vpack.c.b16 %v1675, %v1667
  %v2836 = vpack.c.b16 %v1676, %v1668
  %v2837 = vpack.c.b16 %v1677, %v1669
  %v2838 = vpack.c.b16 %v1678, %v1670
  %v2839 = vpack.c.b16 %v1679, %v1671
  %v2840 = vpack.c.b16 %v1680, %v1672
  %v2841 = vpack.c.b16 %v1689, %v1681
  %v2842 = vpack.c.b16 %v1690, %v1682
  %v2843 = vpack.c.b16 %v1691, %v1683
  %v2844 = vpack.c.b16 %v1692, %v1684
  %v2845 = vpack.c.b16 %v1693, %v1685
  %v2846 = vpack.c.b16 %v1694, %v1686
  %v2847 = vpack.c.b16 %v1695, %v1687
  %v2848 = vpack.c.b16 %v1696, %v1688
  %v2849 = vpack.c.b16 %v1705, %v1697
  %v2850 = vpack.c.b16 %v1706, %v1698
  %v2851 = vpack.c.b16 %v1707, %v1699
  %v2852 = vpack.c.b16 %v1708, %v1700
  %v2853 = vpack.c.b16 %v1709, %v1701
  %v2854 = vpack.c.b16 %v1710, %v1702
  %v2855 = vpack.c.b16 %v1711, %v1703
  %v2856 = vpack.c.b16 %v1712, %v1704
  %v2857 = vpack.c.b16 %v1721, %v1713
  %v2858 = vpack.c.b16 %v1722, %v1714
  %v2859 = vpack.c.b16 %v1723, %v1715
  %v2860 = vpack.c.b16 %v1724, %v1716
  %v2861 = vpack.c.b16 %v1725, %v1717
  %v2862 = vpack.c.b16 %v1726, %v1718
  %v2863 = vpack.c.b16 %v1727, %v1719
  %v2864 = vpack.c.b16 %v1728, %v1720
  %v2865 = vpack.c.b16 %v1737, %v1729
  %v2866 = vpack.c.b16 %v1738, %v1730
  %v2867 = vpack.c.b16 %v1739, %v1731
  %v2868 = vpack.c.b16 %v1740, %v1732
  %v2869 = vpack.c.b16 %v1741, %v1733
  %v2870 = vpack.c.b16 %v1742, %v1734
  %v2871 = vpack.c.b16 %v1743, %v1735
  %v2872 = vpack.c.b16 %v1744, %v1736
  %v2873 = vpack.c.b16 %v1753, %v1745
  %v2874 = vpack.c.b16 %v1754, %v1746
  %v2875 = vpack.c.b16 %v1755, %v1747
  %v2876 = vpack.c.b16 %v1756, %v1748
  %v2877 = vpack.c.b16 %v1757, %v1749
  %v2878 = vpack.c.b16 %v1758, %v1750
  %v2879 = vpack.c.b16 %v1759, %v1751
  %v2880 = vpack.c.b16 %v1760, %v1752
  %v2881 = vpack.c.b16 %v1769, %v1761
  %v2882 = vpack.c.b16 %v1770, %v1762
  %v2883 = vpack.c.b16 %v1771, %v1763
  %v2884 = vpack.c.b16 %v1772, %v1764
  %v2885 = vpack.c.b16 %v1773, %v1765
  %v2886 = vpack.c.b16 %v1774, %v1766
  %v2887 = vpack.c.b16 %v1775, %v1767
  %v2888 = vpack.c.b16 %v1776, %v1768
  %v2889 = vpack.c.b16 %v1785, %v1777
  %v2890 = vpack.c.b16 %v1786, %v1778
  %v2891 = vpack.c.b16 %v1787, %v1779
  %v2892 = vpack.c.b16 %v1788, %v1780
  %v2893 = vpack.c.b16 %v1789, %v1781
  %v2894 = vpack.c.b16 %v1790, %v1782
  %v2895 = vpack.c.b16 %v1791, %v1783
  %v2896 = vpack.c.b16 %v1792, %v1784
  %v2897 = vpack.c.b16 %v1801, %v1793
  %v2898 = vpack.c.b16 %v1802, %v1794
  %v2899 = vpack.c.b16 %v1803, %v1795
  %v2900 = vpack.c.b16 %v1804, %v1796
  %v2901 = vpack.c.b16 %v1805, %v1797
  %v2902 = vpack.c.b16 %v1806, %v1798
  %v2903 = vpack.c.b16 %v1807, %v1799
  %v2904 = vpack.c.b16 %v1808, %v1800
  %v2905 = vpack.c.b16 %v1817, %v1809
  %v2906 = vpack.c.b16 %v1818, %v1810
  %v2907 = vpack.c.b16 %v1819, %v1811
  %v2908 = vpack.c.b16 %v1820, %v1812
  %v2909 = vpack.c.b16 %v1821, %v1813
  %v2910 = vpack.c.b16 %v1822, %v1814
  %v2911 = vpack.c.b16 %v1823, %v1815
  %v2912 = vpack.c.b16 %v1824, %v1816
  %v2913 = vpack.c.b16 %v1833, %v1825
  %v2914 = vpack.c.b16 %v1834, %v1826
  %v2915 = vpack.c.b16 %v1835, %v1827
  %v2916 = vpack.c.b16 %v1836, %v1828
  %v2917 = vpack.c.b16 %v1837, %v1829
  %v2918 = vpack.c.b16 %v1838, %v1830
  %v2919 = vpack.c.b16 %v1839, %v1831
  %v2920 = vpack.c.b16 %v1840, %v1832
  %v2921 = vpack.c.b16 %v1849, %v1841
  %v2922 = vpack.c.b16 %v1850, %v1842
  %v2923 = vpack.c.b16 %v1851, %v1843
  %v2924 = vpack.c.b16 %v1852, %v1844
  %v2925 = vpack.c.b16 %v1853, %v1845
  %v2926 = vpack.c.b16 %v1854, %v1846
  %v2927 = vpack.c.b16 %v1855, %v1847
  %v2928 = vpack.c.b16 %v1856, %v1848
  %v2929 = vpack.c.b16 %v1865, %v1857
  %v2930 = vpack.c.b16 %v1866, %v1858
  %v2931 = vpack.c.b16 %v1867, %v1859
  %v2932 = vpack.c.b16 %v1868, %v1860
  %v2933 = vpack.c.b16 %v1869, %v1861
  %v2934 = vpack.c.b16 %v1870, %v1862
  %v2935 = vpack.c.b16 %v1871, %v1863
  %v2936 = vpack.c.b16 %v1872, %v1864
  %v2937 = vpack.c.b16 %v1881, %v1873
  %v2938 = vpack.c.b16 %v1882, %v1874
  %v2939 = vpack.c.b16 %v1883, %v1875
  %v2940 = vpack.c.b16 %v1884, %v1876
  %v2941 = vpack.c.b16 %v1885, %v1877
  %v2942 = vpack.c.b16 %v1886, %v1878
  %v2943 = vpack.c.b16 %v1887, %v1879
  %v2944 = vpack.c.b16 %v1888, %v1880
  %v2945 = vpack.c.b16 %v1897, %v1889
  %v2946 = vpack.c.b16 %v1898, %v1890
  %v2947 = vpack.c.b16 %v1899, %v1891
  %v2948 = vpack.c.b16 %v1900, %v1892
  %v2949 = vpack.c.b16 %v1901, %v1893
  %v2950 = vpack.c.b16 %v1902, %v1894
  %v2951 = vpack.c.b16 %v1903, %v1895
  %v2952 = vpack.c.b16 %v1904, %v1896
  %v2953 = vpack.c.b16 %v1913, %v1905
  %v2954 = vpack.c.b16 %v1914, %v1906
  %v2955 = vpack.c.b16 %v1915, %v1907
  %v2956 = vpack.c.b16 %v1916, %v1908
  %v2957 = vpack.c.b16 %v1917, %v1909
  %v2958 = vpack.c.b16 %v1918, %v1910
  %v2959 = vpack.c.b16 %v1919, %v1911
  %v2960 = vpack.c.b16 %v1920, %v1912
  %v2961 = vpack.c.b16 %v1929, %v1921
  %v2962 = vpack.c.b16 %v1930, %v1922
  %v2963 = vpack.c.b16 %v1931, %v1923
  %v2964 = vpack.c.b16 %v1932, %v1924
  %v2965 = vpack.c.b16 %v1933, %v1925
  %v2966 = vpack.c.b16 %v1934, %v1926
  %v2967 = vpack.c.b16 %v1935, %v1927
  %v2968 = vpack.c.b16 %v1936, %v1928
  %v2969 = vpack.c.b16 %v1945, %v1937
  %v2970 = vpack.c.b16 %v1946, %v1938
  %v2971 = vpack.c.b16 %v1947, %v1939
  %v2972 = vpack.c.b16 %v1948, %v1940
  %v2973 = vpack.c.b16 %v1949, %v1941
  %v2974 = vpack.c.b16 %v1950, %v1942
  %v2975 = vpack.c.b16 %v1951, %v1943
  %v2976 = vpack.c.b16 %v1952, %v1944
  %v2977 = vpack.c.b16 %v1961, %v1953
  %v2978 = vpack.c.b16 %v1962, %v1954
  %v2979 = vpack.c.b16 %v1963, %v1955
  %v2980 = vpack.c.b16 %v1964, %v1956
  %v2981 = vpack.c.b16 %v1965, %v1957
  %v2982 = vpack.c.b16 %v1966, %v1958
  %v2983 = vpack.c.b16 %v1967, %v1959
  %v2984 = vpack.c.b16 %v1968, %v1960
  %v2985 = vpack.c.b16 %v1977, %v1969
  %v2986 = vpack.c.b16 %v1978, %v1970
  %v2987 = vpack.c.b16 %v1979, %v1971
  %v2988 = vpack.c.b16 %v1980, %v1972
  %v2989 = vpack.c.b16 %v1981, %v1973
  %v2990 = vpack.c.b16 %v1982, %v1974
  %v2991 = vpack.c.b16 %v1983, %v1975
  %v2992 = vpack.c.b16 %v1984, %v1976
  %v2993 = vpack.c.b16 %v1993, %v1985
  %v2994 = vpack.c.b16 %v1994, %v1986
  %v2995 = vpack.c.b16 %v1995, %v1987
  %v2996 = vpack.c.b16 %v1996, %v1988
  %v2997 = vpack.c.b16 %v1997, %v1989
  %v2998 = vpack.c.b16 %v1998, %v1990
  %v2999 = vpack.c.b16 %v1999, %v1991
  %v3000 = vpack.c.b16 %v2000, %v1992
  %v3001 = vpack.c.b16 %v2009, %v2001
  %v3002 = vpack.c.b16 %v2010, %v2002
  %v3003 = vpack.c.b16 %v2011, %v2003
  %v3004 = vpack.c.b16 %v2012, %v2004
  %v3005 = vpack.c.b16 %v2013, %v2005
  %v3006 = vpack.c.b16 %v2014, %v2006
  %v3007 = vpack.c.b16 %v2015, %v2007
  %v3008 = vpack.c.b16 %v2016, %v2008
  %v3009 = vpack.c.b16 %v2025, %v2017
  %v3010 = vpack.c.b16 %v2026, %v2018
  %v3011 = vpack.c.b16 %v2027, %v2019
  %v3012 = vpack.c.b16 %v2028, %v2020
  %v3013 = vpack.c.b16 %v2029, %v2021
  %v3014 = vpack.c.b16 %v2030, %v2022
  %v3015 = vpack.c.b16 %v2031, %v2023
  %v3016 = vpack.c.b16 %v2032, %v2024
  %v3017 = vpack.c.b16 %v2041, %v2033
  %v3018 = vpack.c.b16 %v2042, %v2034
  %v3019 = vpack.c.b16 %v2043, %v2035
  %v3020 = vpack.c.b16 %v2044, %v2036
  %v3021 = vpack.c.b16 %v2045, %v2037
  %v3022 = vpack.c.b16 %v2046, %v2038
  %v3023 = vpack.c.b16 %v2047, %v2039
  %v3024 = vpack.c.b16 %v2048, %v2040
  %v3025 = vpack.c.b16 %v2057, %v2049
  %v3026 = vpack.c.b16 %v2058, %v2050
  %v3027 = vpack.c.b16 %v2059, %v2051
  %v3028 = vpack.c.b16 %v2060, %v2052
  %v3029 = vpack.c.b16 %v2061, %v2053
  %v3030 = vpack.c.b16 %v2062, %v2054
  %v3031 = vpack.c.b16 %v2063, %v2055
  %v3032 = vpack.c.b16 %v2064, %v2056
  %v3033 = vpack.c.b16 %v2073, %v2065
  %v3034 = vpack.c.b16 %v2074, %v2066
  %v3035 = vpack.c.b16 %v2075, %v2067
  %v3036 = vpack.c.b16 %v2076, %v2068
  %v3037 = vpack.c.b16 %v2077, %v2069
  %v3038 = vpack.c.b16 %v2078, %v2070
  %v3039 = vpack.c.b16 %v2079, %v2071
  %v3040 = vpack.c.b16 %v2080, %v2072
  %v3041 = vpack.c.b16 %v2089, %v2081
  %v3042 = vpack.c.b16 %v2090, %v2082
  %v3043 = vpack.c.b16 %v2091, %v2083
  %v3044 = vpack.c.b16 %v2092, %v2084
  %v3045 = vpack.c.b16 %v2093, %v2085
  %v3046 = vpack.c.b16 %v2094, %v2086
  %v3047 = vpack.c.b16 %v2095, %v2087
  %v3048 = vpack.c.b16 %v2096, %v2088
  %v3049 = vpack.c.b16 %v2105, %v2097
  %v3050 = vpack.c.b16 %v2106, %v2098
  %v3051 = vpack.c.b16 %v2107, %v2099
  %v3052 = vpack.c.b16 %v2108, %v2100
  %v3053 = vpack.c.b16 %v2109, %v2101
  %v3054 = vpack.c.b16 %v2110, %v2102
  %v3055 = vpack.c.b16 %v2111, %v2103
  %v3056 = vpack.c.b16 %v2112, %v2104
  %v3057 = vpack.c.b16 %v2121, %v2113
  %v3058 = vpack.c.b16 %v2122, %v2114
  %v3059 = vpack.c.b16 %v2123, %v2115
  %v3060 = vpack.c.b16 %v2124, %v2116
  %v3061 = vpack.c.b16 %v2125, %v2117
  %v3062 = vpack.c.b16 %v2126, %v2118
  %v3063 = vpack.c.b16 %v2127, %v2119
  %v3064 = vpack.c.b16 %v2128, %v2120
  %v3065 = vpack.c.b16 %v2137, %v2129
  %v3066 = vpack.c.b16 %v2138, %v2130
  %v3067 = vpack.c.b16 %v2139, %v2131
  %v3068 = vpack.c.b16 %v2140, %v2132
  %v3069 = vpack.c.b16 %v2141, %v2133
  %v3070 = vpack.c.b16 %v2142, %v2134
  %v3071 = vpack.c.b16 %v2143, %v2135
  %v3072 = vpack.c.b16 %v2144, %v2136
  %v3073 = vpack.c.b16 %v2153, %v2145
  %v3074 = vpack.c.b16 %v2154, %v2146
  %v3075 = vpack.c.b16 %v2155, %v2147
  %v3076 = vpack.c.b16 %v2156, %v2148
  %v3077 = vpack.c.b16 %v2157, %v2149
  %v3078 = vpack.c.b16 %v2158, %v2150
  %v3079 = vpack.c.b16 %v2159, %v2151
  %v3080 = vpack.c.b16 %v2160, %v2152
  %v3081 = vpack.c.b16 %v2169, %v2161
  %v3082 = vpack.c.b16 %v2170, %v2162
  %v3083 = vpack.c.b16 %v2171, %v2163
  %v3084 = vpack.c.b16 %v2172, %v2164
  %v3085 = vpack.c.b16 %v2173, %v2165
  %v3086 = vpack.c.b16 %v2174, %v2166
  %v3087 = vpack.c.b16 %v2175, %v2167
  %v3088 = vpack.c.b16 %v2176, %v2168
  %v3089 = vpack.c.b16 %v2185, %v2177
  %v3090 = vpack.c.b16 %v2186, %v2178
  %v3091 = vpack.c.b16 %v2187, %v2179
  %v3092 = vpack.c.b16 %v2188, %v2180
  %v3093 = vpack.c.b16 %v2189, %v2181
  %v3094 = vpack.c.b16 %v2190, %v2182
  %v3095 = vpack.c.b16 %v2191, %v2183
  %v3096 = vpack.c.b16 %v2192, %v2184
  %v3097 = vpack.c.b16 %v2201, %v2193
  %v3098 = vpack.c.b16 %v2202, %v2194
  %v3099 = vpack.c.b16 %v2203, %v2195
  %v3100 = vpack.c.b16 %v2204, %v2196
  %v3101 = vpack.c.b16 %v2205, %v2197
  %v3102 = vpack.c.b16 %v2206, %v2198
  %v3103 = vpack.c.b16 %v2207, %v2199
  %v3104 = vpack.c.b16 %v2208, %v2200
  %v3105 = vpack.c.b16 %v2217, %v2209
  %v3106 = vpack.c.b16 %v2218, %v2210
  %v3107 = vpack.c.b16 %v2219, %v2211
  %v3108 = vpack.c.b16 %v2220, %v2212
  %v3109 = vpack.c.b16 %v2221, %v2213
  %v3110 = vpack.c.b16 %v2222, %v2214
  %v3111 = vpack.c.b16 %v2223, %v2215
  %v3112 = vpack.c.b16 %v2224, %v2216
  %v3113 = vpack.c.b16 %v2233, %v2225
  %v3114 = vpack.c.b16 %v2234, %v2226
  %v3115 = vpack.c.b16 %v2235, %v2227
  %v3116 = vpack.c.b16 %v2236, %v2228
  %v3117 = vpack.c.b16 %v2237, %v2229
  %v3118 = vpack.c.b16 %v2238, %v2230
  %v3119 = vpack.c.b16 %v2239, %v2231
  %v3120 = vpack.c.b16 %v2240, %v2232
  %v3121 = vpack.c.b16 %v2249, %v2241
  %v3122 = vpack.c.b16 %v2250, %v2242
  %v3123 = vpack.c.b16 %v2251, %v2243
  %v3124 = vpack.c.b16 %v2252, %v2244
  %v3125 = vpack.c.b16 %v2253, %v2245
  %v3126 = vpack.c.b16 %v2254, %v2246
  %v3127 = vpack.c.b16 %v2255, %v2247
  %v3128 = vpack.c.b16 %v2256, %v2248
  %v3129 = vpack.c.b16 %v2265, %v2257
  %v3130 = vpack.c.b16 %v2266, %v2258
  %v3131 = vpack.c.b16 %v2267, %v2259
  %v3132 = vpack.c.b16 %v2268, %v2260
  %v3133 = vpack.c.b16 %v2269, %v2261
  %v3134 = vpack.c.b16 %v2270, %v2262
  %v3135 = vpack.c.b16 %v2271, %v2263
  %v3136 = vpack.c.b16 %v2272, %v2264
  %v3137 = vpack.c.b16 %v2281, %v2273
  %v3138 = vpack.c.b16 %v2282, %v2274
  %v3139 = vpack.c.b16 %v2283, %v2275
  %v3140 = vpack.c.b16 %v2284, %v2276
  %v3141 = vpack.c.b16 %v2285, %v2277
  %v3142 = vpack.c.b16 %v2286, %v2278
  %v3143 = vpack.c.b16 %v2287, %v2279
  %v3144 = vpack.c.b16 %v2288, %v2280
  %v3145 = vpack.c.b16 %v2297, %v2289
  %v3146 = vpack.c.b16 %v2298, %v2290
  %v3147 = vpack.c.b16 %v2299, %v2291
  %v3148 = vpack.c.b16 %v2300, %v2292
  %v3149 = vpack.c.b16 %v2301, %v2293
  %v3150 = vpack.c.b16 %v2302, %v2294
  %v3151 = vpack.c.b16 %v2303, %v2295
  %v3152 = vpack.c.b16 %v2304, %v2296
  %v3153 = vpack.c.b16 %v2313, %v2305
  %v3154 = vpack.c.b16 %v2314, %v2306
  %v3155 = vpack.c.b16 %v2315, %v2307
  %v3156 = vpack.c.b16 %v2316, %v2308
  %v3157 = vpack.c.b16 %v2317, %v2309
  %v3158 = vpack.c.b16 %v2318, %v2310
  %v3159 = vpack.c.b16 %v2319, %v2311
  %v3160 = vpack.c.b16 %v2320, %v2312
  %v3161 = vpack.c.b16 %v2329, %v2321
  %v3162 = vpack.c.b16 %v2330, %v2322
  %v3163 = vpack.c.b16 %v2331, %v2323
  %v3164 = vpack.c.b16 %v2332, %v2324
  %v3165 = vpack.c.b16 %v2333, %v2325
  %v3166 = vpack.c.b16 %v2334, %v2326
  %v3167 = vpack.c.b16 %v2335, %v2327
  %v3168 = vpack.c.b16 %v2336, %v2328
  %v3169 = vpack.c.b16 %v2345, %v2337
  %v3170 = vpack.c.b16 %v2346, %v2338
  %v3171 = vpack.c.b16 %v2347, %v2339
  %v3172 = vpack.c.b16 %v2348, %v2340
  %v3173 = vpack.c.b16 %v2349, %v2341
  %v3174 = vpack.c.b16 %v2350, %v2342
  %v3175 = vpack.c.b16 %v2351, %v2343
  %v3176 = vpack.c.b16 %v2352, %v2344
  %v3177 = vpack.c.b16 %v2361, %v2353
  %v3178 = vpack.c.b16 %v2362, %v2354
  %v3179 = vpack.c.b16 %v2363, %v2355
  %v3180 = vpack.c.b16 %v2364, %v2356
  %v3181 = vpack.c.b16 %v2365, %v2357
  %v3182 = vpack.c.b16 %v2366, %v2358
  %v3183 = vpack.c.b16 %v2367, %v2359
  %v3184 = vpack.c.b16 %v2368, %v2360
  %v3185 = vpack.c.b16 %v2377, %v2369
  %v3186 = vpack.c.b16 %v2378, %v2370
  %v3187 = vpack.c.b16 %v2379, %v2371
  %v3188 = vpack.c.b16 %v2380, %v2372
  %v3189 = vpack.c.b16 %v2381, %v2373
  %v3190 = vpack.c.b16 %v2382, %v2374
  %v3191 = vpack.c.b16 %v2383, %v2375
  %v3192 = vpack.c.b16 %v2384, %v2376
  %v3193 = vpack.c.b16 %v2393, %v2385
  %v3194 = vpack.c.b16 %v2394, %v2386
  %v3195 = vpack.c.b16 %v2395, %v2387
  %v3196 = vpack.c.b16 %v2396, %v2388
  %v3197 = vpack.c.b16 %v2397, %v2389
  %v3198 = vpack.c.b16 %v2398, %v2390
  %v3199 = vpack.c.b16 %v2399, %v2391
  %v3200 = vpack.c.b16 %v2400, %v2392
  %v3201 = vpack.c.b16 %v2409, %v2401
  %v3202 = vpack.c.b16 %v2410, %v2402
  %v3203 = vpack.c.b16 %v2411, %v2403
  %v3204 = vpack.c.b16 %v2412, %v2404
  %v3205 = vpack.c.b16 %v2413, %v2405
  %v3206 = vpack.c.b16 %v2414, %v2406
  %v3207 = vpack.c.b16 %v2415, %v2407
  %v3208 = vpack.c.b16 %v2416, %v2408
  %v3209 = vpack.c.b16 %v2425, %v2417
  %v3210 = vpack.c.b16 %v2426, %v2418
  %v3211 = vpack.c.b16 %v2427, %v2419
  %v3212 = vpack.c.b16 %v2428, %v2420
  %v3213 = vpack.c.b16 %v2429, %v2421
  %v3214 = vpack.c.b16 %v2430, %v2422
  %v3215 = vpack.c.b16 %v2431, %v2423
  %v3216 = vpack.c.b16 %v2432, %v2424
  %v3217 = vpack.c.b16 %v2441, %v2433
  %v3218 = vpack.c.b16 %v2442, %v2434
  %v3219 = vpack.c.b16 %v2443, %v2435
  %v3220 = vpack.c.b16 %v2444, %v2436
  %v3221 = vpack.c.b16 %v2445, %v2437
  %v3222 = vpack.c.b16 %v2446, %v2438
  %v3223 = vpack.c.b16 %v2447, %v2439
  %v3224 = vpack.c.b16 %v2448, %v2440
  %v3225 = vpack.c.b16 %v2457, %v2449
  %v3226 = vpack.c.b16 %v2458, %v2450
  %v3227 = vpack.c.b16 %v2459, %v2451
  %v3228 = vpack.c.b16 %v2460, %v2452
  %v3229 = vpack.c.b16 %v2461, %v2453
  %v3230 = vpack.c.b16 %v2462, %v2454
  %v3231 = vpack.c.b16 %v2463, %v2455
  %v3232 = vpack.c.b16 %v2464, %v2456
  %v3233 = vpack.c.b16 %v2473, %v2465
  %v3234 = vpack.c.b16 %v2474, %v2466
  %v3235 = vpack.c.b16 %v2475, %v2467
  %v3236 = vpack.c.b16 %v2476, %v2468
  %v3237 = vpack.c.b16 %v2477, %v2469
  %v3238 = vpack.c.b16 %v2478, %v2470
  %v3239 = vpack.c.b16 %v2479, %v2471
  %v3240 = vpack.c.b16 %v2480, %v2472
  %v3241 = vpack.c.b16 %v2489, %v2481
  %v3242 = vpack.c.b16 %v2490, %v2482
  %v3243 = vpack.c.b16 %v2491, %v2483
  %v3244 = vpack.c.b16 %v2492, %v2484
  %v3245 = vpack.c.b16 %v2493, %v2485
  %v3246 = vpack.c.b16 %v2494, %v2486
  %v3247 = vpack.c.b16 %v2495, %v2487
  %v3248 = vpack.c.b16 %v2496, %v2488
  %v3249 = vpack.c.b16 %v2505, %v2497
  %v3250 = vpack.c.b16 %v2506, %v2498
  %v3251 = vpack.c.b16 %v2507, %v2499
  %v3252 = vpack.c.b16 %v2508, %v2500
  %v3253 = vpack.c.b16 %v2509, %v2501
  %v3254 = vpack.c.b16 %v2510, %v2502
  %v3255 = vpack.c.b16 %v2511, %v2503
  %v3256 = vpack.c.b16 %v2512, %v2504
  %v3257 = vpack.c.b16 %v2521, %v2513
  %v3258 = vpack.c.b16 %v2522, %v2514
  %v3259 = vpack.c.b16 %v2523, %v2515
  %v3260 = vpack.c.b16 %v2524, %v2516
  %v3261 = vpack.c.b16 %v2525, %v2517
  %v3262 = vpack.c.b16 %v2526, %v2518
  %v3263 = vpack.c.b16 %v2527, %v2519
  %v3264 = vpack.c.b16 %v2528, %v2520
  %v3265 = vpack.c.b16 %v2537, %v2529
  %v3266 = vpack.c.b16 %v2538, %v2530
  %v3267 = vpack.c.b16 %v2539, %v2531
  %v3268 = vpack.c.b16 %v2540, %v2532
  %v3269 = vpack.c.b16 %v2541, %v2533
  %v3270 = vpack.c.b16 %v2542, %v2534
  %v3271 = vpack.c.b16 %v2543, %v2535
  %v3272 = vpack.c.b16 %v2544, %v2536
  %v3273 = vpack.c.b16 %v2553, %v2545
  %v3274 = vpack.c.b16 %v2554, %v2546
  %v3275 = vpack.c.b16 %v2555, %v2547
  %v3276 = vpack.c.b16 %v2556, %v2548
  %v3277 = vpack.c.b16 %v2557, %v2549
  %v3278 = vpack.c.b16 %v2558, %v2550
  %v3279 = vpack.c.b16 %v2559, %v2551
  %v3280 = vpack.c.b16 %v2560, %v2552
  %v3281 = vpack.c.b16 %v2569, %v2561
  %v3282 = vpack.c.b16 %v2570, %v2562
  %v3283 = vpack.c.b16 %v2571, %v2563
  %v3284 = vpack.c.b16 %v2572, %v2564
  %v3285 = vpack.c.b16 %v2573, %v2565
  %v3286 = vpack.c.b16 %v2574, %v2566
  %v3287 = vpack.c.b16 %v2575, %v2567
  %v3288 = vpack.c.b16 %v2576, %v2568
  %v3289 = vpack.c.b16 %v2585, %v2577
  %v3290 = vpack.c.b16 %v2586, %v2578
  %v3291 = vpack.c.b16 %v2587, %v2579
  %v3292 = vpack.c.b16 %v2588, %v2580
  %v3293 = vpack.c.b16 %v2589, %v2581
  %v3294 = vpack.c.b16 %v2590, %v2582
  %v3295 = vpack.c.b16 %v2591, %v2583
  %v3296 = vpack.c.b16 %v2592, %v2584
  %v3297 = vpack.c.b16 %v2601, %v2593
  %v3298 = vpack.c.b16 %v2602, %v2594
  %v3299 = vpack.c.b16 %v2603, %v2595
  %v3300 = vpack.c.b16 %v2604, %v2596
  %v3301 = vpack.c.b16 %v2605, %v2597
  %v3302 = vpack.c.b16 %v2606, %v2598
  %v3303 = vpack.c.b16 %v2607, %v2599
  %v3304 = vpack.c.b16 %v2608, %v2600
  %v3305 = vpack.c.b16 %v2617, %v2609
  %v3306 = vpack.c.b16 %v2618, %v2610
  %v3307 = vpack.c.b16 %v2619, %v2611
  %v3308 = vpack.c.b16 %v2620, %v2612
  %v3309 = vpack.c.b16 %v2621, %v2613
  %v3310 = vpack.c.b16 %v2622, %v2614
  %v3311 = vpack.c.b16 %v2623, %v2615
  %v3312 = vpack.c.b16 %v2624, %v2616
  %v3313 = vpack.c.b16 %v2633, %v2625
  %v3314 = vpack.c.b16 %v2634, %v2626
  %v3315 = vpack.c.b16 %v2635, %v2627
  %v3316 = vpack.c.b16 %v2636, %v2628
  %v3317 = vpack.c.b16 %v2637, %v2629
  %v3318 = vpack.c.b16 %v2638, %v2630
  %v3319 = vpack.c.b16 %v2639, %v2631
  %v3320 = vpack.c.b16 %v2640, %v2632
  %v3321 = vpack.c.b16 %v2649, %v2641
  %v3322 = vpack.c.b16 %v2650, %v2642
  %v3323 = vpack.c.b16 %v2651, %v2643
  %v3324 = vpack.c.b16 %v2652, %v2644
  %v3325 = vpack.c.b16 %v2653, %v2645
  %v3326 = vpack.c.b16 %v2654, %v2646
  %v3327 = vpack.c.b16 %v2655, %v2647
  %v3328 = vpack.c.b16 %v2656, %v2648
  %v3329 = vpack.c.b16 %v2665, %v2657
  %v3330 = vpack.c.b16 %v2666, %v2658
  %v3331 = vpack.c.b16 %v2667, %v2659
  %v3332 = vpack.c.b16 %v2668, %v2660
  %v3333 = vpack.c.b16 %v2669, %v2661
  %v3334 = vpack.c.b16 %v2670, %v2662
  %v3335 = vpack.c.b16 %v2671, %v2663
  %v3336 = vpack.c.b16 %v2672, %v2664
  %v3337 = vpack.c.b16 %v2681, %v2673
  %v3338 = vpack.c.b16 %v2682, %v2674
  %v3339 = vpack.c.b16 %v2683, %v2675
  %v3340 = vpack.c.b16 %v2684, %v2676
  %v3341 = vpack.c.b16 %v2685, %v2677
  %v3342 = vpack.c.b16 %v2686, %v2678
  %v3343 = vpack.c.b16 %v2687, %v2679
  %v3344 = vpack.c.b16 %v2688, %v2680
  %v3345 = vpack.c.b16 %v2697, %v2689
  %v3346 = vpack.c.b16 %v2698, %v2690
  %v3347 = vpack.c.b16 %v2699, %v2691
  %v3348 = vpack.c.b16 %v2700, %v2692
  %v3349 = vpack.c.b16 %v2701, %v2693
  %v3350 = vpack.c.b16 %v2702, %v2694
  %v3351 = vpack.c.b16 %v2703, %v2695
  %v3352 = vpack.c.b16 %v2704, %v2696
  %v3353 = vpack.c.b16 %v2713, %v2705
  %v3354 = vpack.c.b16 %v2714, %v2706
  %v3355 = vpack.c.b16 %v2715, %v2707
  %v3356 = vpack.c.b16 %v2716, %v2708
  %v3357 = vpack.c.b16 %v2717, %v2709
  %v3358 = vpack.c.b16 %v2718, %v2710
  %v3359 = vpack.c.b16 %v2719, %v2711
  %v3360 = vpack.c.b16 %v2720, %v2712
  %4001 = vmatprep.subr.bf16.mxu0 %v2722
  %4002 = vmatpush1.bf16.msra.mxu0 %v2721
  %4003 = vmatprep.subr.bf16.mxu0 %v2730
  %4004 = vmatpush1.bf16.msra.mxu0 %v2729
  %4005 = vmatprep.subr.bf16.mxu0 %v2738
  %4006 = vmatpush1.bf16.msra.mxu0 %v2737
  %4007 = vmatprep.subr.bf16.mxu0 %v2746
  %4008 = vmatpush1.bf16.msra.mxu0 %v2745
  %4009 = vmatprep.subr.bf16.mxu0 %v2754
  %4010 = vmatpush1.bf16.msra.mxu0 %v2753
  %4011 = vmatprep.subr.bf16.mxu0 %v2762
  %4012 = vmatpush1.bf16.msra.mxu0 %v2761
  %4013 = vmatprep.subr.bf16.mxu0 %v2770
  %4014 = vmatpush1.bf16.msra.mxu0 %v2769
  %4015 = vmatprep.subr.bf16.mxu0 %v2778
  %4016 = vmatpush1.bf16.msra.mxu0 %v2777
  %4017 = vmatprep.subr.bf16.mxu0 %v2786
  %4018 = vmatpush1.bf16.msra.mxu0 %v2785
  %4019 = vmatprep.subr.bf16.mxu0 %v2794
  %4020 = vmatpush1.bf16.msra.mxu0 %v2793
  %4021 = vmatprep.subr.bf16.mxu0 %v2802
  %4022 = vmatpush1.bf16.msra.mxu0 %v2801
  %4023 = vmatprep.subr.bf16.mxu0 %v2810
  %4024 = vmatpush1.bf16.msra.mxu0 %v2809
  %4025 = vmatprep.subr.bf16.mxu0 %v2818
  %4026 = vmatpush1.bf16.msra.mxu0 %v2817
  %4027 = vmatprep.subr.bf16.mxu0 %v2826
  %4028 = vmatpush1.bf16.msra.mxu0 %v2825
  %4029 = vmatprep.subr.bf16.mxu0 %v2834
  %4030 = vmatpush1.bf16.msra.mxu0 %v2833
  %4031 = vmatprep.subr.bf16.mxu0 %v2842
  %4032 = vmatpush1.bf16.msra.mxu0 %v2841
  %4033 = vmatprep.mubr.bf16.mxu0 %v782
  %4034 = vmatmul.mubr.bf16.gmra.mrb[0].mxu0 %v781
  %v4035 = vpop.f32.mrb[0].mxu0
  %v4036 = vadd.f32 %v714, %v4035
  %v4037 = vpop.f32.mrb[0].mxu0
  %v4038 = vadd.f32 %v718, %v4037
  %v4039 = vpop.f32.mrb[0].mxu0
  %v4040 = vadd.f32 %v714, %v4039
  %v4041 = vpop.f32.mrb[0].mxu0
  %v4042 = vadd.f32 %v718, %v4041
  %4043 = vdwg.mxu0
  %4044 = vmatprep.subr.bf16.mxu0 %v2850
  %4045 = vmatpush1.bf16.msra.mxu0 %v2849
  %4046 = vmatprep.subr.bf16.mxu0 %v2858
  %4047 = vmatpush1.bf16.msra.mxu0 %v2857
  %4048 = vmatprep.subr.bf16.mxu0 %v2866
  %4049 = vmatpush1.bf16.msra.mxu0 %v2865
  %4050 = vmatprep.subr.bf16.mxu0 %v2874
  %4051 = vmatpush1.bf16.msra.mxu0 %v2873
  %4052 = vmatprep.subr.bf16.mxu0 %v2882
  %4053 = vmatpush1.bf16.msra.mxu0 %v2881
  %4054 = vmatprep.subr.bf16.mxu0 %v2890
  %4055 = vmatpush1.bf16.msra.mxu0 %v2889
  %4056 = vmatprep.subr.bf16.mxu0 %v2898
  %4057 = vmatpush1.bf16.msra.mxu0 %v2897
  %4058 = vmatprep.subr.bf16.mxu0 %v2906
  %4059 = vmatpush1.bf16.msra.mxu0 %v2905
  %4060 = vmatprep.subr.bf16.mxu0 %v2914
  %4061 = vmatpush1.bf16.msra.mxu0 %v2913
  %4062 = vmatprep.subr.bf16.mxu0 %v2922
  %4063 = vmatpush1.bf16.msra.mxu0 %v2921
  %4064 = vmatprep.subr.bf16.mxu0 %v2930
  %4065 = vmatpush1.bf16.msra.mxu0 %v2929
  %4066 = vmatprep.subr.bf16.mxu0 %v2938
  %4067 = vmatpush1.bf16.msra.mxu0 %v2937
  %4068 = vmatprep.subr.bf16.mxu0 %v2946
  %4069 = vmatpush1.bf16.msra.mxu0 %v2945
  %4070 = vmatprep.subr.bf16.mxu0 %v2954
  %4071 = vmatpush1.bf16.msra.mxu0 %v2953
  %4072 = vmatprep.subr.bf16.mxu0 %v2962
  %4073 = vmatpush1.bf16.msra.mxu0 %v2961
  %4074 = vmatprep.subr.bf16.mxu0 %v2970
  %4075 = vmatpush1.bf16.msra.mxu0 %v2969
  %4076 = vmatprep.mubr.bf16.mxu0 %v784
  %4077 = vmatmul.mubr.bf16.gmra.mrb[0].mxu0 %v783
  %v4078 = vpop.f32.mrb[0].mxu0
  %v4079 = vadd.f32 %v4036, %v4078
  %v4080 = vpop.f32.mrb[0].mxu0
  %v4081 = vadd.f32 %v4038, %v4080
  %v4082 = vpop.f32.mrb[0].mxu0
  %v4083 = vadd.f32 %v4040, %v4082
  %v4084 = vpop.f32.mrb[0].mxu0
  %v4085 = vadd.f32 %v4042, %v4084
  %4086 = vdwg.mxu0
  %4087 = vmatprep.subr.bf16.mxu0 %v2978
  %4088 = vmatpush1.bf16.msra.mxu0 %v2977
  %4089 = vmatprep.subr.bf16.mxu0 %v2986
  %4090 = vmatpush1.bf16.msra.mxu0 %v2985
  %4091 = vmatprep.subr.bf16.mxu0 %v2994
  %4092 = vmatpush1.bf16.msra.mxu0 %v2993
  %4093 = vmatprep.subr.bf16.mxu0 %v3002
  %4094 = vmatpush1.bf16.msra.mxu0 %v3001
  %4095 = vmatprep.subr.bf16.mxu0 %v3010
  %4096 = vmatpush1.bf16.msra.mxu0 %v3009
  %4097 = vmatprep.subr.bf16.mxu0 %v3018
  %4098 = vmatpush1.bf16.msra.mxu0 %v3017
  %4099 = vmatprep.subr.bf16.mxu0 %v3026
  %4100 = vmatpush1.bf16.msra.mxu0 %v3025
  %4101 = vmatprep.subr.bf16.mxu0 %v3034
  %4102 = vmatpush1.bf16.msra.mxu0 %v3033
  %4103 = vmatprep.subr.bf16.mxu0 %v3042
  %4104 = vmatpush1.bf16.msra.mxu0 %v3041
  %4105 = vmatprep.subr.bf16.mxu0 %v3050
  %4106 = vmatpush1.bf16.msra.mxu0 %v3049
  %4107 = vmatprep.subr.bf16.mxu0 %v3058
  %4108 = vmatpush1.bf16.msra.mxu0 %v3057
  %4109 = vmatprep.subr.bf16.mxu0 %v3066
  %4110 = vmatpush1.bf16.msra.mxu0 %v3065
  %4111 = vmatprep.subr.bf16.mxu0 %v3074
  %4112 = vmatpush1.bf16.msra.mxu0 %v3073
  %4113 = vmatprep.subr.bf16.mxu0 %v3082
  %4114 = vmatpush1.bf16.msra.mxu0 %v3081
  %4115 = vmatprep.subr.bf16.mxu0 %v3090
  %4116 = vmatpush1.bf16.msra.mxu0 %v3089
  %4117 = vmatprep.subr.bf16.mxu0 %v3098
  %4118 = vmatpush1.bf16.msra.mxu0 %v3097
  %4119 = vmatprep.mubr.bf16.mxu0 %v786
  %4120 = vmatmul.mubr.bf16.gmra.mrb[0].mxu0 %v785
  %v4121 = vpop.f32.mrb[0].mxu0
  %v4122 = vadd.f32 %v4079, %v4121
  %v4123 = vpop.f32.mrb[0].mxu0
  %v4124 = vadd.f32 %v4081, %v4123
  %v4125 = vpop.f32.mrb[0].mxu0
  %v4126 = vadd.f32 %v4083, %v4125
  %v4127 = vpop.f32.mrb[0].mxu0
  %v4128 = vadd.f32 %v4085, %v4127
  %4129 = vdwg.mxu0
  %4130 = vmatprep.subr.bf16.mxu0 %v3106
  %4131 = vmatpush1.bf16.msra.mxu0 %v3105
  %4132 = vmatprep.subr.bf16.mxu0 %v3114
  %4133 = vmatpush1.bf16.msra.mxu0 %v3113
  %4134 = vmatprep.subr.bf16.mxu0 %v3122
  %4135 = vmatpush1.bf16.msra.mxu0 %v3121
  %4136 = vmatprep.subr.bf16.mxu0 %v3130
  %4137 = vmatpush1.bf16.msra.mxu0 %v3129
  %4138 = vmatprep.subr.bf16.mxu0 %v3138
  %4139 = vmatpush1.bf16.msra.mxu0 %v3137
  %4140 = vmatprep.subr.bf16.mxu0 %v3146
  %4141 = vmatpush1.bf16.msra.mxu0 %v3145
  %4142 = vmatprep.subr.bf16.mxu0 %v3154
  %4143 = vmatpush1.bf16.msra.mxu0 %v3153
  %4144 = vmatprep.subr.bf16.mxu0 %v3162
  %4145 = vmatpush1.bf16.msra.mxu0 %v3161
  %4146 = vmatprep.subr.bf16.mxu0 %v3170
  %4147 = vmatpush1.bf16.msra.mxu0 %v3169
  %4148 = vmatprep.subr.bf16.mxu0 %v3178
  %4149 = vmatpush1.bf16.msra.mxu0 %v3177
  %4150 = vmatprep.subr.bf16.mxu0 %v3186
  %4151 = vmatpush1.bf16.msra.mxu0 %v3185
  %4152 = vmatprep.subr.bf16.mxu0 %v3194
  %4153 = vmatpush1.bf16.msra.mxu0 %v3193
  %4154 = vmatprep.subr.bf16.mxu0 %v3202
  %4155 = vmatpush1.bf16.msra.mxu0 %v3201
  %4156 = vmatprep.subr.bf16.mxu0 %v3210
  %4157 = vmatpush1.bf16.msra.mxu0 %v3209
  %4158 = vmatprep.subr.bf16.mxu0 %v3218
  %4159 = vmatpush1.bf16.msra.mxu0 %v3217
  %4160 = vmatprep.subr.bf16.mxu0 %v3226
  %4161 = vmatpush1.bf16.msra.mxu0 %v3225
  %4162 = vmatprep.mubr.bf16.mxu0 %v788
  %4163 = vmatmul.mubr.bf16.gmra.mrb[0].mxu0 %v787
  %v4164 = vpop.f32.mrb[0].mxu0
  %v4165 = vadd.f32 %v4122, %v4164
  %v4166 = vpop.f32.mrb[0].mxu0
  %v4167 = vadd.f32 %v4124, %v4166
  %v4168 = vpop.f32.mrb[0].mxu0
  %v4169 = vadd.f32 %v4126, %v4168
  %v4170 = vpop.f32.mrb[0].mxu0
  %v4171 = vadd.f32 %v4128, %v4170
  %4172 = vdwg.mxu0
  %4173 = vmatprep.subr.bf16.mxu0 %v3234
  %4174 = vmatpush1.bf16.msra.mxu0 %v3233
  %4175 = vmatprep.subr.bf16.mxu0 %v3242
  %4176 = vmatpush1.bf16.msra.mxu0 %v3241
  %4177 = vmatprep.subr.bf16.mxu0 %v3250
  %4178 = vmatpush1.bf16.msra.mxu0 %v3249
  %4179 = vmatprep.subr.bf16.mxu0 %v3258
  %4180 = vmatpush1.bf16.msra.mxu0 %v3257
  %4181 = vmatprep.subr.bf16.mxu0 %v3266
  %4182 = vmatpush1.bf16.msra.mxu0 %v3265
  %4183 = vmatprep.subr.bf16.mxu0 %v3274
  %4184 = vmatpush1.bf16.msra.mxu0 %v3273
  %4185 = vmatprep.subr.bf16.mxu0 %v3282
  %4186 = vmatpush1.bf16.msra.mxu0 %v3281
  %4187 = vmatprep.subr.bf16.mxu0 %v3290
  %4188 = vmatpush1.bf16.msra.mxu0 %v3289
  %4189 = vmatprep.subr.bf16.mxu0 %v3298
  %4190 = vmatpush1.bf16.msra.mxu0 %v3297
  %4191 = vmatprep.subr.bf16.mxu0 %v3306
  %4192 = vmatpush1.bf16.msra.mxu0 %v3305
  %4193 = vmatprep.subr.bf16.mxu0 %v3314
  %4194 = vmatpush1.bf16.msra.mxu0 %v3313
  %4195 = vmatprep.subr.bf16.mxu0 %v3322
  %4196 = vmatpush1.bf16.msra.mxu0 %v3321
  %4197 = vmatprep.subr.bf16.mxu0 %v3330
  %4198 = vmatpush1.bf16.msra.mxu0 %v3329
  %4199 = vmatprep.subr.bf16.mxu0 %v3338
  %4200 = vmatpush1.bf16.msra.mxu0 %v3337
  %4201 = vmatprep.subr.bf16.mxu0 %v3346
  %4202 = vmatpush1.bf16.msra.mxu0 %v3345
  %4203 = vmatprep.subr.bf16.mxu0 %v3354
  %4204 = vmatpush1.bf16.msra.mxu0 %v3353
  %4205 = vmatprep.mubr.bf16.mxu0 %v790
  %4206 = vmatmul.mubr.bf16.gmra.mrb[0].mxu0 %v789
  %v4207 = vpop.f32.mrb[0].mxu0
  %v4208 = vadd.f32 %v4165, %v4207
  %v4209 = vpop.f32.mrb[0].mxu0
  %v4210 = vadd.f32 %v4167, %v4209
  %v4211 = vpop.f32.mrb[0].mxu0
  %v4212 = vadd.f32 %v4169, %v4211
  %v4213 = vpop.f32.mrb[0].mxu0
  %v4214 = vadd.f32 %v4171, %v4213
  %4215 = vdwg.mxu0
  %4216 = vmatprep.subr.bf16.mxu0 %v2724
  %4217 = vmatpush1.bf16.msra.mxu0 %v2723
  %4218 = vmatprep.subr.bf16.mxu0 %v2732
  %4219 = vmatpush1.bf16.msra.mxu0 %v2731
  %4220 = vmatprep.subr.bf16.mxu0 %v2740
  %4221 = vmatpush1.bf16.msra.mxu0 %v2739
  %4222 = vmatprep.subr.bf16.mxu0 %v2748
  %4223 = vmatpush1.bf16.msra.mxu0 %v2747
  %4224 = vmatprep.subr.bf16.mxu0 %v2756
  %4225 = vmatpush1.bf16.msra.mxu0 %v2755
  %4226 = vmatprep.subr.bf16.mxu0 %v2764
  %4227 = vmatpush1.bf16.msra.mxu0 %v2763
  %4228 = vmatprep.subr.bf16.mxu0 %v2772
  %4229 = vmatpush1.bf16.msra.mxu0 %v2771
  %4230 = vmatprep.subr.bf16.mxu0 %v2780
  %4231 = vmatpush1.bf16.msra.mxu0 %v2779
  %4232 = vmatprep.subr.bf16.mxu0 %v2788
  %4233 = vmatpush1.bf16.msra.mxu0 %v2787
  %4234 = vmatprep.subr.bf16.mxu0 %v2796
  %4235 = vmatpush1.bf16.msra.mxu0 %v2795
  %4236 = vmatprep.subr.bf16.mxu0 %v2804
  %4237 = vmatpush1.bf16.msra.mxu0 %v2803
  %4238 = vmatprep.subr.bf16.mxu0 %v2812
  %4239 = vmatpush1.bf16.msra.mxu0 %v2811
  %4240 = vmatprep.subr.bf16.mxu0 %v2820
  %4241 = vmatpush1.bf16.msra.mxu0 %v2819
  %4242 = vmatprep.subr.bf16.mxu0 %v2828
  %4243 = vmatpush1.bf16.msra.mxu0 %v2827
  %4244 = vmatprep.subr.bf16.mxu0 %v2836
  %4245 = vmatpush1.bf16.msra.mxu0 %v2835
  %4246 = vmatprep.subr.bf16.mxu0 %v2844
  %4247 = vmatpush1.bf16.msra.mxu0 %v2843
  %4248 = vmatprep.mubr.bf16.mxu0 %v782
  %4249 = vmatmul.mubr.bf16.gmra.mrb[0].mxu0 %v781
  %v4250 = vpop.f32.mrb[0].mxu0
  %v4251 = vadd.f32 %v722, %v4250
  %v4252 = vpop.f32.mrb[0].mxu0
  %v4253 = vadd.f32 %v726, %v4252
  %v4254 = vpop.f32.mrb[0].mxu0
  %v4255 = vadd.f32 %v722, %v4254
  %v4256 = vpop.f32.mrb[0].mxu0
  %v4257 = vadd.f32 %v726, %v4256
  %4258 = vdwg.mxu0
  %4259 = vmatprep.subr.bf16.mxu0 %v2852
  %4260 = vmatpush1.bf16.msra.mxu0 %v2851
  %4261 = vmatprep.subr.bf16.mxu0 %v2860
  %4262 = vmatpush1.bf16.msra.mxu0 %v2859
  %4263 = vmatprep.subr.bf16.mxu0 %v2868
  %4264 = vmatpush1.bf16.msra.mxu0 %v2867
  %4265 = vmatprep.subr.bf16.mxu0 %v2876
  %4266 = vmatpush1.bf16.msra.mxu0 %v2875
  %4267 = vmatprep.subr.bf16.mxu0 %v2884
  %4268 = vmatpush1.bf16.msra.mxu0 %v2883
  %4269 = vmatprep.subr.bf16.mxu0 %v2892
  %4270 = vmatpush1.bf16.msra.mxu0 %v2891
  %4271 = vmatprep.subr.bf16.mxu0 %v2900
  %4272 = vmatpush1.bf16.msra.mxu0 %v2899
  %4273 = vmatprep.subr.bf16.mxu0 %v2908
  %4274 = vmatpush1.bf16.msra.mxu0 %v2907
  %4275 = vmatprep.subr.bf16.mxu0 %v2916
  %4276 = vmatpush1.bf16.msra.mxu0 %v2915
  %4277 = vmatprep.subr.bf16.mxu0 %v2924
  %4278 = vmatpush1.bf16.msra.mxu0 %v2923
  %4279 = vmatprep.subr.bf16.mxu0 %v2932
  %4280 = vmatpush1.bf16.msra.mxu0 %v2931
  %4281 = vmatprep.subr.bf16.mxu0 %v2940
  %4282 = vmatpush1.bf16.msra.mxu0 %v2939
  %4283 = vmatprep.subr.bf16.mxu0 %v2948
  %4284 = vmatpush1.bf16.msra.mxu0 %v2947
  %4285 = vmatprep.subr.bf16.mxu0 %v2956
  %4286 = vmatpush1.bf16.msra.mxu0 %v2955
  %4287 = vmatprep.subr.bf16.mxu0 %v2964
  %4288 = vmatpush1.bf16.msra.mxu0 %v2963
  %4289 = vmatprep.subr.bf16.mxu0 %v2972
  %4290 = vmatpush1.bf16.msra.mxu0 %v2971
  %4291 = vmatprep.mubr.bf16.mxu0 %v784
  %4292 = vmatmul.mubr.bf16.gmra.mrb[0].mxu0 %v783
  %v4293 = vpop.f32.mrb[0].mxu0
  %v4294 = vadd.f32 %v4251, %v4293
  %v4295 = vpop.f32.mrb[0].mxu0
  %v4296 = vadd.f32 %v4253, %v4295
  %v4297 = vpop.f32.mrb[0].mxu0
  %v4298 = vadd.f32 %v4255, %v4297
  %v4299 = vpop.f32.mrb[0].mxu0
  %v4300 = vadd.f32 %v4257, %v4299
  %4301 = vdwg.mxu0
  %4302 = vmatprep.subr.bf16.mxu0 %v2980
  %4303 = vmatpush1.bf16.msra.mxu0 %v2979
  %4304 = vmatprep.subr.bf16.mxu0 %v2988
  %4305 = vmatpush1.bf16.msra.mxu0 %v2987
  %4306 = vmatprep.subr.bf16.mxu0 %v2996
  %4307 = vmatpush1.bf16.msra.mxu0 %v2995
  %4308 = vmatprep.subr.bf16.mxu0 %v3004
  %4309 = vmatpush1.bf16.msra.mxu0 %v3003
  %4310 = vmatprep.subr.bf16.mxu0 %v3012
  %4311 = vmatpush1.bf16.msra.mxu0 %v3011
  %4312 = vmatprep.subr.bf16.mxu0 %v3020
  %4313 = vmatpush1.bf16.msra.mxu0 %v3019
  %4314 = vmatprep.subr.bf16.mxu0 %v3028
  %4315 = vmatpush1.bf16.msra.mxu0 %v3027
  %4316 = vmatprep.subr.bf16.mxu0 %v3036
  %4317 = vmatpush1.bf16.msra.mxu0 %v3035
  %4318 = vmatprep.subr.bf16.mxu0 %v3044
  %4319 = vmatpush1.bf16.msra.mxu0 %v3043
  %4320 = vmatprep.subr.bf16.mxu0 %v3052
  %4321 = vmatpush1.bf16.msra.mxu0 %v3051
  %4322 = vmatprep.subr.bf16.mxu0 %v3060
  %4323 = vmatpush1.bf16.msra.mxu0 %v3059
  %4324 = vmatprep.subr.bf16.mxu0 %v3068
  %4325 = vmatpush1.bf16.msra.mxu0 %v3067
  %4326 = vmatprep.subr.bf16.mxu0 %v3076
  %4327 = vmatpush1.bf16.msra.mxu0 %v3075
  %4328 = vmatprep.subr.bf16.mxu0 %v3084
  %4329 = vmatpush1.bf16.msra.mxu0 %v3083
  %4330 = vmatprep.subr.bf16.mxu0 %v3092
  %4331 = vmatpush1.bf16.msra.mxu0 %v3091
  %4332 = vmatprep.subr.bf16.mxu0 %v3100
  %4333 = vmatpush1.bf16.msra.mxu0 %v3099
  %4334 = vmatprep.mubr.bf16.mxu0 %v786
  %4335 = vmatmul.mubr.bf16.gmra.mrb[0].mxu0 %v785
  %v4336 = vpop.f32.mrb[0].mxu0
  %v4337 = vadd.f32 %v4294, %v4336
  %v4338 = vpop.f32.mrb[0].mxu0
  %v4339 = vadd.f32 %v4296, %v4338
  %v4340 = vpop.f32.mrb[0].mxu0
  %v4341 = vadd.f32 %v4298, %v4340
  %v4342 = vpop.f32.mrb[0].mxu0
  %v4343 = vadd.f32 %v4300, %v4342
  %4344 = vdwg.mxu0
  %4345 = vmatprep.subr.bf16.mxu0 %v3108
  %4346 = vmatpush1.bf16.msra.mxu0 %v3107
  %4347 = vmatprep.subr.bf16.mxu0 %v3116
  %4348 = vmatpush1.bf16.msra.mxu0 %v3115
  %4349 = vmatprep.subr.bf16.mxu0 %v3124
  %4350 = vmatpush1.bf16.msra.mxu0 %v3123
  %4351 = vmatprep.subr.bf16.mxu0 %v3132
  %4352 = vmatpush1.bf16.msra.mxu0 %v3131
  %4353 = vmatprep.subr.bf16.mxu0 %v3140
  %4354 = vmatpush1.bf16.msra.mxu0 %v3139
  %4355 = vmatprep.subr.bf16.mxu0 %v3148
  %4356 = vmatpush1.bf16.msra.mxu0 %v3147
  %4357 = vmatprep.subr.bf16.mxu0 %v3156
  %4358 = vmatpush1.bf16.msra.mxu0 %v3155
  %4359 = vmatprep.subr.bf16.mxu0 %v3164
  %4360 = vmatpush1.bf16.msra.mxu0 %v3163
  %4361 = vmatprep.subr.bf16.mxu0 %v3172
  %4362 = vmatpush1.bf16.msra.mxu0 %v3171
  %4363 = vmatprep.subr.bf16.mxu0 %v3180
  %4364 = vmatpush1.bf16.msra.mxu0 %v3179
  %4365 = vmatprep.subr.bf16.mxu0 %v3188
  %4366 = vmatpush1.bf16.msra.mxu0 %v3187
  %4367 = vmatprep.subr.bf16.mxu0 %v3196
  %4368 = vmatpush1.bf16.msra.mxu0 %v3195
  %4369 = vmatprep.subr.bf16.mxu0 %v3204
  %4370 = vmatpush1.bf16.msra.mxu0 %v3203
  %4371 = vmatprep.subr.bf16.mxu0 %v3212
  %4372 = vmatpush1.bf16.msra.mxu0 %v3211
  %4373 = vmatprep.subr.bf16.mxu0 %v3220
  %4374 = vmatpush1.bf16.msra.mxu0 %v3219
  %4375 = vmatprep.subr.bf16.mxu0 %v3228
  %4376 = vmatpush1.bf16.msra.mxu0 %v3227
  %4377 = vmatprep.mubr.bf16.mxu0 %v788
  %4378 = vmatmul.mubr.bf16.gmra.mrb[0].mxu0 %v787
  %v4379 = vpop.f32.mrb[0].mxu0
  %v4380 = vadd.f32 %v4337, %v4379
  %v4381 = vpop.f32.mrb[0].mxu0
  %v4382 = vadd.f32 %v4339, %v4381
  %v4383 = vpop.f32.mrb[0].mxu0
  %v4384 = vadd.f32 %v4341, %v4383
  %v4385 = vpop.f32.mrb[0].mxu0
  %v4386 = vadd.f32 %v4343, %v4385
  %4387 = vdwg.mxu0
  %4388 = vmatprep.subr.bf16.mxu0 %v3236
  %4389 = vmatpush1.bf16.msra.mxu0 %v3235
  %4390 = vmatprep.subr.bf16.mxu0 %v3244
  %4391 = vmatpush1.bf16.msra.mxu0 %v3243
  %4392 = vmatprep.subr.bf16.mxu0 %v3252
  %4393 = vmatpush1.bf16.msra.mxu0 %v3251
  %4394 = vmatprep.subr.bf16.mxu0 %v3260
  %4395 = vmatpush1.bf16.msra.mxu0 %v3259
  %4396 = vmatprep.subr.bf16.mxu0 %v3268
  %4397 = vmatpush1.bf16.msra.mxu0 %v3267
  %4398 = vmatprep.subr.bf16.mxu0 %v3276
  %4399 = vmatpush1.bf16.msra.mxu0 %v3275
  %4400 = vmatprep.subr.bf16.mxu0 %v3284
  %4401 = vmatpush1.bf16.msra.mxu0 %v3283
  %4402 = vmatprep.subr.bf16.mxu0 %v3292
  %4403 = vmatpush1.bf16.msra.mxu0 %v3291
  %4404 = vmatprep.subr.bf16.mxu0 %v3300
  %4405 = vmatpush1.bf16.msra.mxu0 %v3299
  %4406 = vmatprep.subr.bf16.mxu0 %v3308
  %4407 = vmatpush1.bf16.msra.mxu0 %v3307
  %4408 = vmatprep.subr.bf16.mxu0 %v3316
  %4409 = vmatpush1.bf16.msra.mxu0 %v3315
  %4410 = vmatprep.subr.bf16.mxu0 %v3324
  %4411 = vmatpush1.bf16.msra.mxu0 %v3323
  %4412 = vmatprep.subr.bf16.mxu0 %v3332
  %4413 = vmatpush1.bf16.msra.mxu0 %v3331
  %4414 = vmatprep.subr.bf16.mxu0 %v3340
  %4415 = vmatpush1.bf16.msra.mxu0 %v3339
  %4416 = vmatprep.subr.bf16.mxu0 %v3348
  %4417 = vmatpush1.bf16.msra.mxu0 %v3347
  %4418 = vmatprep.subr.bf16.mxu0 %v3356
  %4419 = vmatpush1.bf16.msra.mxu0 %v3355
  %4420 = vmatprep.mubr.bf16.mxu0 %v790
  %4421 = vmatmul.mubr.bf16.gmra.mrb[0].mxu0 %v789
  %v4422 = vpop.f32.mrb[0].mxu0
  %v4423 = vadd.f32 %v4380, %v4422
  %v4424 = vpop.f32.mrb[0].mxu0
  %v4425 = vadd.f32 %v4382, %v4424
  %v4426 = vpop.f32.mrb[0].mxu0
  %v4427 = vadd.f32 %v4384, %v4426
  %v4428 = vpop.f32.mrb[0].mxu0
  %v4429 = vadd.f32 %v4386, %v4428
  %4430 = vdwg.mxu0
  %4431 = vmatprep.subr.bf16.mxu0 %v2726
  %4432 = vmatpush1.bf16.msra.mxu0 %v2725
  %4433 = vmatprep.subr.bf16.mxu0 %v2734
  %4434 = vmatpush1.bf16.msra.mxu0 %v2733
  %4435 = vmatprep.subr.bf16.mxu0 %v2742
  %4436 = vmatpush1.bf16.msra.mxu0 %v2741
  %4437 = vmatprep.subr.bf16.mxu0 %v2750
  %4438 = vmatpush1.bf16.msra.mxu0 %v2749
  %4439 = vmatprep.subr.bf16.mxu0 %v2758
  %4440 = vmatpush1.bf16.msra.mxu0 %v2757
  %4441 = vmatprep.subr.bf16.mxu0 %v2766
  %4442 = vmatpush1.bf16.msra.mxu0 %v2765
  %4443 = vmatprep.subr.bf16.mxu0 %v2774
  %4444 = vmatpush1.bf16.msra.mxu0 %v2773
  %4445 = vmatprep.subr.bf16.mxu0 %v2782
  %4446 = vmatpush1.bf16.msra.mxu0 %v2781
  %4447 = vmatprep.subr.bf16.mxu0 %v2790
  %4448 = vmatpush1.bf16.msra.mxu0 %v2789
  %4449 = vmatprep.subr.bf16.mxu0 %v2798
  %4450 = vmatpush1.bf16.msra.mxu0 %v2797
  %4451 = vmatprep.subr.bf16.mxu0 %v2806
  %4452 = vmatpush1.bf16.msra.mxu0 %v2805
  %4453 = vmatprep.subr.bf16.mxu0 %v2814
  %4454 = vmatpush1.bf16.msra.mxu0 %v2813
  %4455 = vmatprep.subr.bf16.mxu0 %v2822
  %4456 = vmatpush1.bf16.msra.mxu0 %v2821
  %4457 = vmatprep.subr.bf16.mxu0 %v2830
  %4458 = vmatpush1.bf16.msra.mxu0 %v2829
  %4459 = vmatprep.subr.bf16.mxu0 %v2838
  %4460 = vmatpush1.bf16.msra.mxu0 %v2837
  %4461 = vmatprep.subr.bf16.mxu0 %v2846
  %4462 = vmatpush1.bf16.msra.mxu0 %v2845
  %4463 = vmatprep.mubr.bf16.mxu0 %v782
  %4464 = vmatmul.mubr.bf16.gmra.mrb[0].mxu0 %v781
  %v4465 = vpop.f32.mrb[0].mxu0
  %v4466 = vadd.f32 %v730, %v4465
  %v4467 = vpop.f32.mrb[0].mxu0
  %v4468 = vadd.f32 %v734, %v4467
  %v4469 = vpop.f32.mrb[0].mxu0
  %v4470 = vadd.f32 %v730, %v4469
  %v4471 = vpop.f32.mrb[0].mxu0
  %v4472 = vadd.f32 %v734, %v4471
  %4473 = vdwg.mxu0
  %4474 = vmatprep.subr.bf16.mxu0 %v2854
  %4475 = vmatpush1.bf16.msra.mxu0 %v2853
  %4476 = vmatprep.subr.bf16.mxu0 %v2862
  %4477 = vmatpush1.bf16.msra.mxu0 %v2861
  %4478 = vmatprep.subr.bf16.mxu0 %v2870
  %4479 = vmatpush1.bf16.msra.mxu0 %v2869
  %4480 = vmatprep.subr.bf16.mxu0 %v2878
  %4481 = vmatpush1.bf16.msra.mxu0 %v2877
  %4482 = vmatprep.subr.bf16.mxu0 %v2886
  %4483 = vmatpush1.bf16.msra.mxu0 %v2885
  %4484 = vmatprep.subr.bf16.mxu0 %v2894
  %4485 = vmatpush1.bf16.msra.mxu0 %v2893
  %4486 = vmatprep.subr.bf16.mxu0 %v2902
  %4487 = vmatpush1.bf16.msra.mxu0 %v2901
  %4488 = vmatprep.subr.bf16.mxu0 %v2910
  %4489 = vmatpush1.bf16.msra.mxu0 %v2909
  %4490 = vmatprep.subr.bf16.mxu0 %v2918
  %4491 = vmatpush1.bf16.msra.mxu0 %v2917
  %4492 = vmatprep.subr.bf16.mxu0 %v2926
  %4493 = vmatpush1.bf16.msra.mxu0 %v2925
  %4494 = vmatprep.subr.bf16.mxu0 %v2934
  %4495 = vmatpush1.bf16.msra.mxu0 %v2933
  %4496 = vmatprep.subr.bf16.mxu0 %v2942
  %4497 = vmatpush1.bf16.msra.mxu0 %v2941
  %4498 = vmatprep.subr.bf16.mxu0 %v2950
  %4499 = vmatpush1.bf16.msra.mxu0 %v2949
  %4500 = vmatprep.subr.bf16.mxu0 %v2958
  %4501 = vmatpush1.bf16.msra.mxu0 %v2957
  %4502 = vmatprep.subr.bf16.mxu0 %v2966
  %4503 = vmatpush1.bf16.msra.mxu0 %v2965
  %4504 = vmatprep.subr.bf16.mxu0 %v2974
  %4505 = vmatpush1.bf16.msra.mxu0 %v2973
  %4506 = vmatprep.mubr.bf16.mxu0 %v784
  %4507 = vmatmul.mubr.bf16.gmra.mrb[0].mxu0 %v783
  %v4508 = vpop.f32.mrb[0].mxu0
  %v4509 = vadd.f32 %v4466, %v4508
  %v4510 = vpop.f32.mrb[0].mxu0
  %v4511 = vadd.f32 %v4468, %v4510
  %v4512 = vpop.f32.mrb[0].mxu0
  %v4513 = vadd.f32 %v4470, %v4512
  %v4514 = vpop.f32.mrb[0].mxu0
  %v4515 = vadd.f32 %v4472, %v4514
  %4516 = vdwg.mxu0
  %4517 = vmatprep.subr.bf16.mxu0 %v2982
  %4518 = vmatpush1.bf16.msra.mxu0 %v2981
  %4519 = vmatprep.subr.bf16.mxu0 %v2990
  %4520 = vmatpush1.bf16.msra.mxu0 %v2989
  %4521 = vmatprep.subr.bf16.mxu0 %v2998
  %4522 = vmatpush1.bf16.msra.mxu0 %v2997
  %4523 = vmatprep.subr.bf16.mxu0 %v3006
  %4524 = vmatpush1.bf16.msra.mxu0 %v3005
  %4525 = vmatprep.subr.bf16.mxu0 %v3014
  %4526 = vmatpush1.bf16.msra.mxu0 %v3013
  %4527 = vmatprep.subr.bf16.mxu0 %v3022
  %4528 = vmatpush1.bf16.msra.mxu0 %v3021
  %4529 = vmatprep.subr.bf16.mxu0 %v3030
  %4530 = vmatpush1.bf16.msra.mxu0 %v3029
  %4531 = vmatprep.subr.bf16.mxu0 %v3038
  %4532 = vmatpush1.bf16.msra.mxu0 %v3037
  %4533 = vmatprep.subr.bf16.mxu0 %v3046
  %4534 = vmatpush1.bf16.msra.mxu0 %v3045
  %4535 = vmatprep.subr.bf16.mxu0 %v3054
  %4536 = vmatpush1.bf16.msra.mxu0 %v3053
  %4537 = vmatprep.subr.bf16.mxu0 %v3062
  %4538 = vmatpush1.bf16.msra.mxu0 %v3061
  %4539 = vmatprep.subr.bf16.mxu0 %v3070
  %4540 = vmatpush1.bf16.msra.mxu0 %v3069
  %4541 = vmatprep.subr.bf16.mxu0 %v3078
  %4542 = vmatpush1.bf16.msra.mxu0 %v3077
  %4543 = vmatprep.subr.bf16.mxu0 %v3086
  %4544 = vmatpush1.bf16.msra.mxu0 %v3085
  %4545 = vmatprep.subr.bf16.mxu0 %v3094
  %4546 = vmatpush1.bf16.msra.mxu0 %v3093
  %4547 = vmatprep.subr.bf16.mxu0 %v3102
  %4548 = vmatpush1.bf16.msra.mxu0 %v3101
  %4549 = vmatprep.mubr.bf16.mxu0 %v786
  %4550 = vmatmul.mubr.bf16.gmra.mrb[0].mxu0 %v785
  %v4551 = vpop.f32.mrb[0].mxu0
  %v4552 = vadd.f32 %v4509, %v4551
  %v4553 = vpop.f32.mrb[0].mxu0
  %v4554 = vadd.f32 %v4511, %v4553
  %v4555 = vpop.f32.mrb[0].mxu0
  %v4556 = vadd.f32 %v4513, %v4555
  %v4557 = vpop.f32.mrb[0].mxu0
  %v4558 = vadd.f32 %v4515, %v4557
  %4559 = vdwg.mxu0
  %4560 = vmatprep.subr.bf16.mxu0 %v3110
  %4561 = vmatpush1.bf16.msra.mxu0 %v3109
  %4562 = vmatprep.subr.bf16.mxu0 %v3118
  %4563 = vmatpush1.bf16.msra.mxu0 %v3117
  %4564 = vmatprep.subr.bf16.mxu0 %v3126
  %4565 = vmatpush1.bf16.msra.mxu0 %v3125
  %4566 = vmatprep.subr.bf16.mxu0 %v3134
  %4567 = vmatpush1.bf16.msra.mxu0 %v3133
  %4568 = vmatprep.subr.bf16.mxu0 %v3142
  %4569 = vmatpush1.bf16.msra.mxu0 %v3141
  %4570 = vmatprep.subr.bf16.mxu0 %v3150
  %4571 = vmatpush1.bf16.msra.mxu0 %v3149
  %4572 = vmatprep.subr.bf16.mxu0 %v3158
  %4573 = vmatpush1.bf16.msra.mxu0 %v3157
  %4574 = vmatprep.subr.bf16.mxu0 %v3166
  %4575 = vmatpush1.bf16.msra.mxu0 %v3165
  %4576 = vmatprep.subr.bf16.mxu0 %v3174
  %4577 = vmatpush1.bf16.msra.mxu0 %v3173
  %4578 = vmatprep.subr.bf16.mxu0 %v3182
  %4579 = vmatpush1.bf16.msra.mxu0 %v3181
  %4580 = vmatprep.subr.bf16.mxu0 %v3190
  %4581 = vmatpush1.bf16.msra.mxu0 %v3189
  %4582 = vmatprep.subr.bf16.mxu0 %v3198
  %4583 = vmatpush1.bf16.msra.mxu0 %v3197
  %4584 = vmatprep.subr.bf16.mxu0 %v3206
  %4585 = vmatpush1.bf16.msra.mxu0 %v3205
  %4586 = vmatprep.subr.bf16.mxu0 %v3214
  %4587 = vmatpush1.bf16.msra.mxu0 %v3213
  %4588 = vmatprep.subr.bf16.mxu0 %v3222
  %4589 = vmatpush1.bf16.msra.mxu0 %v3221
  %4590 = vmatprep.subr.bf16.mxu0 %v3230
  %4591 = vmatpush1.bf16.msra.mxu0 %v3229
  %4592 = vmatprep.mubr.bf16.mxu0 %v788
  %4593 = vmatmul.mubr.bf16.gmra.mrb[0].mxu0 %v787
  %v4594 = vpop.f32.mrb[0].mxu0
  %v4595 = vadd.f32 %v4552, %v4594
  %v4596 = vpop.f32.mrb[0].mxu0
  %v4597 = vadd.f32 %v4554, %v4596
  %v4598 = vpop.f32.mrb[0].mxu0
  %v4599 = vadd.f32 %v4556, %v4598
  %v4600 = vpop.f32.mrb[0].mxu0
  %v4601 = vadd.f32 %v4558, %v4600
  %4602 = vdwg.mxu0
  %4603 = vmatprep.subr.bf16.mxu0 %v3238
  %4604 = vmatpush1.bf16.msra.mxu0 %v3237
  %4605 = vmatprep.subr.bf16.mxu0 %v3246
  %4606 = vmatpush1.bf16.msra.mxu0 %v3245
  %4607 = vmatprep.subr.bf16.mxu0 %v3254
  %4608 = vmatpush1.bf16.msra.mxu0 %v3253
  %4609 = vmatprep.subr.bf16.mxu0 %v3262
  %4610 = vmatpush1.bf16.msra.mxu0 %v3261
  %4611 = vmatprep.subr.bf16.mxu0 %v3270
  %4612 = vmatpush1.bf16.msra.mxu0 %v3269
  %4613 = vmatprep.subr.bf16.mxu0 %v3278
  %4614 = vmatpush1.bf16.msra.mxu0 %v3277
  %4615 = vmatprep.subr.bf16.mxu0 %v3286
  %4616 = vmatpush1.bf16.msra.mxu0 %v3285
  %4617 = vmatprep.subr.bf16.mxu0 %v3294
  %4618 = vmatpush1.bf16.msra.mxu0 %v3293
  %4619 = vmatprep.subr.bf16.mxu0 %v3302
  %4620 = vmatpush1.bf16.msra.mxu0 %v3301
  %4621 = vmatprep.subr.bf16.mxu0 %v3310
  %4622 = vmatpush1.bf16.msra.mxu0 %v3309
  %4623 = vmatprep.subr.bf16.mxu0 %v3318
  %4624 = vmatpush1.bf16.msra.mxu0 %v3317
  %4625 = vmatprep.subr.bf16.mxu0 %v3326
  %4626 = vmatpush1.bf16.msra.mxu0 %v3325
  %4627 = vmatprep.subr.bf16.mxu0 %v3334
  %4628 = vmatpush1.bf16.msra.mxu0 %v3333
  %4629 = vmatprep.subr.bf16.mxu0 %v3342
  %4630 = vmatpush1.bf16.msra.mxu0 %v3341
  %4631 = vmatprep.subr.bf16.mxu0 %v3350
  %4632 = vmatpush1.bf16.msra.mxu0 %v3349
  %4633 = vmatprep.subr.bf16.mxu0 %v3358
  %4634 = vmatpush1.bf16.msra.mxu0 %v3357
  %4635 = vmatprep.mubr.bf16.mxu0 %v790
  %4636 = vmatmul.mubr.bf16.gmra.mrb[0].mxu0 %v789
  %v4637 = vpop.f32.mrb[0].mxu0
  %v4638 = vadd.f32 %v4595, %v4637
  %v4639 = vpop.f32.mrb[0].mxu0
  %v4640 = vadd.f32 %v4597, %v4639
  %v4641 = vpop.f32.mrb[0].mxu0
  %v4642 = vadd.f32 %v4599, %v4641
  %v4643 = vpop.f32.mrb[0].mxu0
  %v4644 = vadd.f32 %v4601, %v4643
  %4645 = vdwg.mxu0
  %4646 = vmatprep.subr.bf16.mxu0 %v2728
  %4647 = vmatpush1.bf16.msra.mxu0 %v2727
  %4648 = vmatprep.subr.bf16.mxu0 %v2736
  %4649 = vmatpush1.bf16.msra.mxu0 %v2735
  %4650 = vmatprep.subr.bf16.mxu0 %v2744
  %4651 = vmatpush1.bf16.msra.mxu0 %v2743
  %4652 = vmatprep.subr.bf16.mxu0 %v2752
  %4653 = vmatpush1.bf16.msra.mxu0 %v2751
  %4654 = vmatprep.subr.bf16.mxu0 %v2760
  %4655 = vmatpush1.bf16.msra.mxu0 %v2759
  %4656 = vmatprep.subr.bf16.mxu0 %v2768
  %4657 = vmatpush1.bf16.msra.mxu0 %v2767
  %4658 = vmatprep.subr.bf16.mxu0 %v2776
  %4659 = vmatpush1.bf16.msra.mxu0 %v2775
  %4660 = vmatprep.subr.bf16.mxu0 %v2784
  %4661 = vmatpush1.bf16.msra.mxu0 %v2783
  %4662 = vmatprep.subr.bf16.mxu0 %v2792
  %4663 = vmatpush1.bf16.msra.mxu0 %v2791
  %4664 = vmatprep.subr.bf16.mxu0 %v2800
  %4665 = vmatpush1.bf16.msra.mxu0 %v2799
  %4666 = vmatprep.subr.bf16.mxu0 %v2808
  %4667 = vmatpush1.bf16.msra.mxu0 %v2807
  %4668 = vmatprep.subr.bf16.mxu0 %v2816
  %4669 = vmatpush1.bf16.msra.mxu0 %v2815
  %4670 = vmatprep.subr.bf16.mxu0 %v2824
  %4671 = vmatpush1.bf16.msra.mxu0 %v2823
  %4672 = vmatprep.subr.bf16.mxu0 %v2832
  %4673 = vmatpush1.bf16.msra.mxu0 %v2831
  %4674 = vmatprep.subr.bf16.mxu0 %v2840
  %4675 = vmatpush1.bf16.msra.mxu0 %v2839
  %4676 = vmatprep.subr.bf16.mxu0 %v2848
  %4677 = vmatpush1.bf16.msra.mxu0 %v2847
  %4678 = vmatprep.mubr.bf16.mxu0 %v782
  %4679 = vmatmul.mubr.bf16.gmra.mrb[0].mxu0 %v781
  %v4680 = vpop.f32.mrb[0].mxu0
  %v4681 = vadd.f32 %v738, %v4680
  %v4682 = vpop.f32.mrb[0].mxu0
  %v4683 = vadd.f32 %v742, %v4682
  %v4684 = vpop.f32.mrb[0].mxu0
  %v4685 = vadd.f32 %v738, %v4684
  %v4686 = vpop.f32.mrb[0].mxu0
  %v4687 = vadd.f32 %v742, %v4686
  %4688 = vdwg.mxu0
  %4689 = vmatprep.subr.bf16.mxu0 %v2856
  %4690 = vmatpush1.bf16.msra.mxu0 %v2855
  %4691 = vmatprep.subr.bf16.mxu0 %v2864
  %4692 = vmatpush1.bf16.msra.mxu0 %v2863
  %4693 = vmatprep.subr.bf16.mxu0 %v2872
  %4694 = vmatpush1.bf16.msra.mxu0 %v2871
  %4695 = vmatprep.subr.bf16.mxu0 %v2880
  %4696 = vmatpush1.bf16.msra.mxu0 %v2879
  %4697 = vmatprep.subr.bf16.mxu0 %v2888
  %4698 = vmatpush1.bf16.msra.mxu0 %v2887
  %4699 = vmatprep.subr.bf16.mxu0 %v2896
  %4700 = vmatpush1.bf16.msra.mxu0 %v2895
  %4701 = vmatprep.subr.bf16.mxu0 %v2904
  %4702 = vmatpush1.bf16.msra.mxu0 %v2903
  %4703 = vmatprep.subr.bf16.mxu0 %v2912
  %4704 = vmatpush1.bf16.msra.mxu0 %v2911
  %4705 = vmatprep.subr.bf16.mxu0 %v2920
  %4706 = vmatpush1.bf16.msra.mxu0 %v2919
  %4707 = vmatprep.subr.bf16.mxu0 %v2928
  %4708 = vmatpush1.bf16.msra.mxu0 %v2927
  %4709 = vmatprep.subr.bf16.mxu0 %v2936
  %4710 = vmatpush1.bf16.msra.mxu0 %v2935
  %4711 = vmatprep.subr.bf16.mxu0 %v2944
  %4712 = vmatpush1.bf16.msra.mxu0 %v2943
  %4713 = vmatprep.subr.bf16.mxu0 %v2952
  %4714 = vmatpush1.bf16.msra.mxu0 %v2951
  %4715 = vmatprep.subr.bf16.mxu0 %v2960
  %4716 = vmatpush1.bf16.msra.mxu0 %v2959
  %4717 = vmatprep.subr.bf16.mxu0 %v2968
  %4718 = vmatpush1.bf16.msra.mxu0 %v2967
  %4719 = vmatprep.subr.bf16.mxu0 %v2976
  %4720 = vmatpush1.bf16.msra.mxu0 %v2975
  %4721 = vmatprep.mubr.bf16.mxu0 %v784
  %4722 = vmatmul.mubr.bf16.gmra.mrb[0].mxu0 %v783
  %v4723 = vpop.f32.mrb[0].mxu0
  %v4724 = vadd.f32 %v4681, %v4723
  %v4725 = vpop.f32.mrb[0].mxu0
  %v4726 = vadd.f32 %v4683, %v4725
  %v4727 = vpop.f32.mrb[0].mxu0
  %v4728 = vadd.f32 %v4685, %v4727
  %v4729 = vpop.f32.mrb[0].mxu0
  %v4730 = vadd.f32 %v4687, %v4729
  %4731 = vdwg.mxu0
  %4732 = vmatprep.subr.bf16.mxu0 %v2984
  %4733 = vmatpush1.bf16.msra.mxu0 %v2983
  %4734 = vmatprep.subr.bf16.mxu0 %v2992
  %4735 = vmatpush1.bf16.msra.mxu0 %v2991
  %4736 = vmatprep.subr.bf16.mxu0 %v3000
  %4737 = vmatpush1.bf16.msra.mxu0 %v2999
  %4738 = vmatprep.subr.bf16.mxu0 %v3008
  %4739 = vmatpush1.bf16.msra.mxu0 %v3007
  %4740 = vmatprep.subr.bf16.mxu0 %v3016
  %4741 = vmatpush1.bf16.msra.mxu0 %v3015
  %4742 = vmatprep.subr.bf16.mxu0 %v3024
  %4743 = vmatpush1.bf16.msra.mxu0 %v3023
  %4744 = vmatprep.subr.bf16.mxu0 %v3032
  %4745 = vmatpush1.bf16.msra.mxu0 %v3031
  %4746 = vmatprep.subr.bf16.mxu0 %v3040
  %4747 = vmatpush1.bf16.msra.mxu0 %v3039
  %4748 = vmatprep.subr.bf16.mxu0 %v3048
  %4749 = vmatpush1.bf16.msra.mxu0 %v3047
  %4750 = vmatprep.subr.bf16.mxu0 %v3056
  %4751 = vmatpush1.bf16.msra.mxu0 %v3055
  %4752 = vmatprep.subr.bf16.mxu0 %v3064
  %4753 = vmatpush1.bf16.msra.mxu0 %v3063
  %4754 = vmatprep.subr.bf16.mxu0 %v3072
  %4755 = vmatpush1.bf16.msra.mxu0 %v3071
  %4756 = vmatprep.subr.bf16.mxu0 %v3080
  %4757 = vmatpush1.bf16.msra.mxu0 %v3079
  %4758 = vmatprep.subr.bf16.mxu0 %v3088
  %4759 = vmatpush1.bf16.msra.mxu0 %v3087
  %4760 = vmatprep.subr.bf16.mxu0 %v3096
  %4761 = vmatpush1.bf16.msra.mxu0 %v3095
  %4762 = vmatprep.subr.bf16.mxu0 %v3104
  %4763 = vmatpush1.bf16.msra.mxu0 %v3103
  %4764 = vmatprep.mubr.bf16.mxu0 %v786
  %4765 = vmatmul.mubr.bf16.gmra.mrb[0].mxu0 %v785
  %v4766 = vpop.f32.mrb[0].mxu0
  %v4767 = vadd.f32 %v4724, %v4766
  %v4768 = vpop.f32.mrb[0].mxu0
  %v4769 = vadd.f32 %v4726, %v4768
  %v4770 = vpop.f32.mrb[0].mxu0
  %v4771 = vadd.f32 %v4728, %v4770
  %v4772 = vpop.f32.mrb[0].mxu0
  %v4773 = vadd.f32 %v4730, %v4772
  %4774 = vdwg.mxu0
  %4775 = vmatprep.subr.bf16.mxu0 %v3112
  %4776 = vmatpush1.bf16.msra.mxu0 %v3111
  %4777 = vmatprep.subr.bf16.mxu0 %v3120
  %4778 = vmatpush1.bf16.msra.mxu0 %v3119
  %4779 = vmatprep.subr.bf16.mxu0 %v3128
  %4780 = vmatpush1.bf16.msra.mxu0 %v3127
  %4781 = vmatprep.subr.bf16.mxu0 %v3136
  %4782 = vmatpush1.bf16.msra.mxu0 %v3135
  %4783 = vmatprep.subr.bf16.mxu0 %v3144
  %4784 = vmatpush1.bf16.msra.mxu0 %v3143
  %4785 = vmatprep.subr.bf16.mxu0 %v3152
  %4786 = vmatpush1.bf16.msra.mxu0 %v3151
  %4787 = vmatprep.subr.bf16.mxu0 %v3160
  %4788 = vmatpush1.bf16.msra.mxu0 %v3159
  %4789 = vmatprep.subr.bf16.mxu0 %v3168
  %4790 = vmatpush1.bf16.msra.mxu0 %v3167
  %4791 = vmatprep.subr.bf16.mxu0 %v3176
  %4792 = vmatpush1.bf16.msra.mxu0 %v3175
  %4793 = vmatprep.subr.bf16.mxu0 %v3184
  %4794 = vmatpush1.bf16.msra.mxu0 %v3183
  %4795 = vmatprep.subr.bf16.mxu0 %v3192
  %4796 = vmatpush1.bf16.msra.mxu0 %v3191
  %4797 = vmatprep.subr.bf16.mxu0 %v3200
  %4798 = vmatpush1.bf16.msra.mxu0 %v3199
  %4799 = vmatprep.subr.bf16.mxu0 %v3208
  %4800 = vmatpush1.bf16.msra.mxu0 %v3207
  %4801 = vmatprep.subr.bf16.mxu0 %v3216
  %4802 = vmatpush1.bf16.msra.mxu0 %v3215
  %4803 = vmatprep.subr.bf16.mxu0 %v3224
  %4804 = vmatpush1.bf16.msra.mxu0 %v3223
  %4805 = vmatprep.subr.bf16.mxu0 %v3232
  %4806 = vmatpush1.bf16.msra.mxu0 %v3231
  %4807 = vmatprep.mubr.bf16.mxu0 %v788
  %4808 = vmatmul.mubr.bf16.gmra.mrb[0].mxu0 %v787
  %v4809 = vpop.f32.mrb[0].mxu0
  %v4810 = vadd.f32 %v4767, %v4809
  %v4811 = vpop.f32.mrb[0].mxu0
  %v4812 = vadd.f32 %v4769, %v4811
  %v4813 = vpop.f32.mrb[0].mxu0
  %v4814 = vadd.f32 %v4771, %v4813
  %v4815 = vpop.f32.mrb[0].mxu0
  %v4816 = vadd.f32 %v4773, %v4815
  %4817 = vdwg.mxu0
  %4818 = vmatprep.subr.bf16.mxu0 %v3240
  %4819 = vmatpush1.bf16.msra.mxu0 %v3239
  %4820 = vmatprep.subr.bf16.mxu0 %v3248
  %4821 = vmatpush1.bf16.msra.mxu0 %v3247
  %4822 = vmatprep.subr.bf16.mxu0 %v3256
  %4823 = vmatpush1.bf16.msra.mxu0 %v3255
  %4824 = vmatprep.subr.bf16.mxu0 %v3264
  %4825 = vmatpush1.bf16.msra.mxu0 %v3263
  %4826 = vmatprep.subr.bf16.mxu0 %v3272
  %4827 = vmatpush1.bf16.msra.mxu0 %v3271
  %4828 = vmatprep.subr.bf16.mxu0 %v3280
  %4829 = vmatpush1.bf16.msra.mxu0 %v3279
  %4830 = vmatprep.subr.bf16.mxu0 %v3288
  %4831 = vmatpush1.bf16.msra.mxu0 %v3287
  %4832 = vmatprep.subr.bf16.mxu0 %v3296
  %4833 = vmatpush1.bf16.msra.mxu0 %v3295
  %4834 = vmatprep.subr.bf16.mxu0 %v3304
  %4835 = vmatpush1.bf16.msra.mxu0 %v3303
  %4836 = vmatprep.subr.bf16.mxu0 %v3312
  %4837 = vmatpush1.bf16.msra.mxu0 %v3311
  %4838 = vmatprep.subr.bf16.mxu0 %v3320
  %4839 = vmatpush1.bf16.msra.mxu0 %v3319
  %4840 = vmatprep.subr.bf16.mxu0 %v3328
  %4841 = vmatpush1.bf16.msra.mxu0 %v3327
  %4842 = vmatprep.subr.bf16.mxu0 %v3336
  %4843 = vmatpush1.bf16.msra.mxu0 %v3335
  %4844 = vmatprep.subr.bf16.mxu0 %v3344
  %4845 = vmatpush1.bf16.msra.mxu0 %v3343
  %4846 = vmatprep.subr.bf16.mxu0 %v3352
  %4847 = vmatpush1.bf16.msra.mxu0 %v3351
  %4848 = vmatprep.subr.bf16.mxu0 %v3360
  %4849 = vmatpush1.bf16.msra.mxu0 %v3359
  %4850 = vmatprep.mubr.bf16.mxu0 %v790
  %4851 = vmatmul.mubr.bf16.gmra.mrb[0].mxu0 %v789
  %v4852 = vpop.f32.mrb[0].mxu0
  %v4853 = vadd.f32 %v4810, %v4852
  %v4854 = vpop.f32.mrb[0].mxu0
  %v4855 = vadd.f32 %v4812, %v4854
  %v4856 = vpop.f32.mrb[0].mxu0
  %v4857 = vadd.f32 %v4814, %v4856
  %v4858 = vpop.f32.mrb[0].mxu0
  %v4859 = vadd.f32 %v4816, %v4858
  %4860 = vdwg.mxu0
  %v4861 = vmax.f32 %v4208, 0.0
  %v4862 = vmax.f32 %v4210, 0.0
  %v4863 = vmax.f32 %v4423, 0.0
  %v4864 = vmax.f32 %v4425, 0.0
  %v4865 = vmax.f32 %v4638, 0.0
  %v4866 = vmax.f32 %v4640, 0.0
  %v4867 = vmax.f32 %v4853, 0.0
  %v4868 = vmax.f32 %v4855, 0.0
  %v4869 = vmax.f32 %v4212, 0.0
  %v4870 = vmax.f32 %v4214, 0.0
  %v4871 = vmax.f32 %v4427, 0.0
  %v4872 = vmax.f32 %v4429, 0.0
  %v4873 = vmax.f32 %v4642, 0.0
  %v4874 = vmax.f32 %v4644, 0.0
  %v4875 = vmax.f32 %v4857, 0.0
  %v4876 = vmax.f32 %v4859, 0.0
  %v4877 = vpack.c.bf16 %v4869, %v4861
  %v4878 = vpack.c.bf16 %v4870, %v4862
  %v4879 = vpack.c.bf16 %v4871, %v4863
  %v4880 = vpack.c.bf16 %v4872, %v4864
  %v4881 = vpack.c.bf16 %v4873, %v4865
  %v4882 = vpack.c.bf16 %v4874, %v4866
  %v4883 = vpack.c.bf16 %v4875, %v4867
  %v4884 = vpack.c.bf16 %v4876, %v4868
  %v4885 = vld [vmem:[%s3] sm:$0xff]
  %v4886 = vld [vmem:[%s3 + $0x8] sm:$0xff]
  %v4887 = vld [vmem:[%s3 + $0x10] sm:$0xff]
  %v4888 = vld [vmem:[%s3 + $0x18] sm:$0xff]
  %v4889 = vld [vmem:[%s3 + $0x20] sm:$0xff]
  %v4890 = vld [vmem:[%s3 + $0x28] sm:$0xff]
  %v4891 = vld [vmem:[%s3 + $0x30] sm:$0xff]
  %v4892 = vld [vmem:[%s3 + $0x38] sm:$0xff]
  %v4893 = vld [vmem:[%s3 + $0x40] sm:$0xff]
  %v4894 = vld [vmem:[%s3 + $0x48] sm:$0xff]
  %v4895 = vld [vmem:[%s3 + $0x50] sm:$0xff]
  %v4896 = vld [vmem:[%s3 + $0x58] sm:$0xff]
  %v4897 = vld [vmem:[%s3 + $0x60] sm:$0xff]
  %v4898 = vld [vmem:[%s3 + $0x68] sm:$0xff]
  %v4899 = vld [vmem:[%s3 + $0x70] sm:$0xff]
  %v4900 = vld [vmem:[%s3 + $0x78] sm:$0xff]
  %v4901 = vld [vmem:[%s3 + $0x80] sm:$0xff]
  %v4902 = vld [vmem:[%s3 + $0x88] sm:$0xff]
  %v4903 = vld [vmem:[%s3 + $0x90] sm:$0xff]
  %v4904 = vld [vmem:[%s3 + $0x98] sm:$0xff]
  %v4905 = vld [vmem:[%s3 + $0xa0] sm:$0xff]
  %v4906 = vld [vmem:[%s3 + $0xa8] sm:$0xff]
  %v4907 = vld [vmem:[%s3 + $0xb0] sm:$0xff]
  %v4908 = vld [vmem:[%s3 + $0xb8] sm:$0xff]
  %v4909 = vld [vmem:[%s3 + $0xc0] sm:$0xff]
  %v4910 = vld [vmem:[%s3 + $0xc8] sm:$0xff]
  %v4911 = vld [vmem:[%s3 + $0xd0] sm:$0xff]
  %v4912 = vld [vmem:[%s3 + $0xd8] sm:$0xff]
  %v4913 = vld [vmem:[%s3 + $0xe0] sm:$0xff]
  %v4914 = vld [vmem:[%s3 + $0xe8] sm:$0xff]
  %v4915 = vld [vmem:[%s3 + $0xf0] sm:$0xff]
  %v4916 = vld [vmem:[%s3 + $0xf8] sm:$0xff]
  %v4917 = vld [vmem:[%s3 + $0x100] sm:$0xff]
  %v4918 = vld [vmem:[%s3 + $0x108] sm:$0xff]
  %v4919 = vld [vmem:[%s3 + $0x110] sm:$0xff]
  %v4920 = vld [vmem:[%s3 + $0x118] sm:$0xff]
  %v4921 = vld [vmem:[%s3 + $0x120] sm:$0xff]
  %v4922 = vld [vmem:[%s3 + $0x128] sm:$0xff]
  %v4923 = vld [vmem:[%s3 + $0x130] sm:$0xff]
  %v4924 = vld [vmem:[%s3 + $0x138] sm:$0xff]
  %v4925 = vld [vmem:[%s3 + $0x140] sm:$0xff]
  %v4926 = vld [vmem:[%s3 + $0x148] sm:$0xff]
  %v4927 = vld [vmem:[%s3 + $0x150] sm:$0xff]
  %v4928 = vld [vmem:[%s3 + $0x158] sm:$0xff]
  %v4929 = vld [vmem:[%s3 + $0x160] sm:$0xff]
  %v4930 = vld [vmem:[%s3 + $0x168] sm:$0xff]
  %v4931 = vld [vmem:[%s3 + $0x170] sm:$0xff]
  %v4932 = vld [vmem:[%s3 + $0x178] sm:$0xff]
  %v4933 = vld [vmem:[%s3 + $0x180] sm:$0xff]
  %v4934 = vld [vmem:[%s3 + $0x188] sm:$0xff]
  %v4935 = vld [vmem:[%s3 + $0x190] sm:$0xff]
  %v4936 = vld [vmem:[%s3 + $0x198] sm:$0xff]
  %v4937 = vld [vmem:[%s3 + $0x1a0] sm:$0xff]
  %v4938 = vld [vmem:[%s3 + $0x1a8] sm:$0xff]
  %v4939 = vld [vmem:[%s3 + $0x1b0] sm:$0xff]
  %v4940 = vld [vmem:[%s3 + $0x1b8] sm:$0xff]
  %v4941 = vld [vmem:[%s3 + $0x1c0] sm:$0xff]
  %v4942 = vld [vmem:[%s3 + $0x1c8] sm:$0xff]
  %v4943 = vld [vmem:[%s3 + $0x1d0] sm:$0xff]
  %v4944 = vld [vmem:[%s3 + $0x1d8] sm:$0xff]
  %v4945 = vld [vmem:[%s3 + $0x1e0] sm:$0xff]
  %v4946 = vld [vmem:[%s3 + $0x1e8] sm:$0xff]
  %v4947 = vld [vmem:[%s3 + $0x1f0] sm:$0xff]
  %v4948 = vld [vmem:[%s3 + $0x1f8] sm:$0xff]
  %v4949 = vld [vmem:[%s3 + $0x200] sm:$0xff]
  %v4950 = vld [vmem:[%s3 + $0x208] sm:$0xff]
  %v4951 = vld [vmem:[%s3 + $0x210] sm:$0xff]
  %v4952 = vld [vmem:[%s3 + $0x218] sm:$0xff]
  %v4953 = vld [vmem:[%s3 + $0x220] sm:$0xff]
  %v4954 = vld [vmem:[%s3 + $0x228] sm:$0xff]
  %v4955 = vld [vmem:[%s3 + $0x230] sm:$0xff]
  %v4956 = vld [vmem:[%s3 + $0x238] sm:$0xff]
  %v4957 = vld [vmem:[%s3 + $0x240] sm:$0xff]
  %v4958 = vld [vmem:[%s3 + $0x248] sm:$0xff]
  %v4959 = vld [vmem:[%s3 + $0x250] sm:$0xff]
  %v4960 = vld [vmem:[%s3 + $0x258] sm:$0xff]
  %v4961 = vld [vmem:[%s3 + $0x260] sm:$0xff]
  %v4962 = vld [vmem:[%s3 + $0x268] sm:$0xff]
  %v4963 = vld [vmem:[%s3 + $0x270] sm:$0xff]
  %v4964 = vld [vmem:[%s3 + $0x278] sm:$0xff]
  %v4965 = vld [vmem:[%s3 + $0x280] sm:$0xff]
  %v4966 = vld [vmem:[%s3 + $0x288] sm:$0xff]
  %v4967 = vld [vmem:[%s3 + $0x290] sm:$0xff]
  %v4968 = vld [vmem:[%s3 + $0x298] sm:$0xff]
  %v4969 = vld [vmem:[%s3 + $0x2a0] sm:$0xff]
  %v4970 = vld [vmem:[%s3 + $0x2a8] sm:$0xff]
  %v4971 = vld [vmem:[%s3 + $0x2b0] sm:$0xff]
  %v4972 = vld [vmem:[%s3 + $0x2b8] sm:$0xff]
  %v4973 = vld [vmem:[%s3 + $0x2c0] sm:$0xff]
  %v4974 = vld [vmem:[%s3 + $0x2c8] sm:$0xff]
  %v4975 = vld [vmem:[%s3 + $0x2d0] sm:$0xff]
  %v4976 = vld [vmem:[%s3 + $0x2d8] sm:$0xff]
  %v4977 = vld [vmem:[%s3 + $0x2e0] sm:$0xff]
  %v4978 = vld [vmem:[%s3 + $0x2e8] sm:$0xff]
  %v4979 = vld [vmem:[%s3 + $0x2f0] sm:$0xff]
  %v4980 = vld [vmem:[%s3 + $0x2f8] sm:$0xff]
  %v4981 = vld [vmem:[%s3 + $0x300] sm:$0xff]
  %v4982 = vld [vmem:[%s3 + $0x308] sm:$0xff]
  %v4983 = vld [vmem:[%s3 + $0x310] sm:$0xff]
  %v4984 = vld [vmem:[%s3 + $0x318] sm:$0xff]
  %v4985 = vld [vmem:[%s3 + $0x320] sm:$0xff]
  %v4986 = vld [vmem:[%s3 + $0x328] sm:$0xff]
  %v4987 = vld [vmem:[%s3 + $0x330] sm:$0xff]
  %v4988 = vld [vmem:[%s3 + $0x338] sm:$0xff]
  %v4989 = vld [vmem:[%s3 + $0x340] sm:$0xff]
  %v4990 = vld [vmem:[%s3 + $0x348] sm:$0xff]
  %v4991 = vld [vmem:[%s3 + $0x350] sm:$0xff]
  %v4992 = vld [vmem:[%s3 + $0x358] sm:$0xff]
  %v4993 = vld [vmem:[%s3 + $0x360] sm:$0xff]
  %v4994 = vld [vmem:[%s3 + $0x368] sm:$0xff]
  %v4995 = vld [vmem:[%s3 + $0x370] sm:$0xff]
  %v4996 = vld [vmem:[%s3 + $0x378] sm:$0xff]
  %v4997 = vld [vmem:[%s3 + $0x380] sm:$0xff]
  %v4998 = vld [vmem:[%s3 + $0x388] sm:$0xff]
  %v4999 = vld [vmem:[%s3 + $0x390] sm:$0xff]
  %v5000 = vld [vmem:[%s3 + $0x398] sm:$0xff]
  %v5001 = vld [vmem:[%s3 + $0x3a0] sm:$0xff]
  %v5002 = vld [vmem:[%s3 + $0x3a8] sm:$0xff]
  %v5003 = vld [vmem:[%s3 + $0x3b0] sm:$0xff]
  %v5004 = vld [vmem:[%s3 + $0x3b8] sm:$0xff]
  %v5005 = vld [vmem:[%s3 + $0x3c0] sm:$0xff]
  %v5006 = vld [vmem:[%s3 + $0x3c8] sm:$0xff]
  %v5007 = vld [vmem:[%s3 + $0x3d0] sm:$0xff]
  %v5008 = vld [vmem:[%s3 + $0x3d8] sm:$0xff]
  %v5009 = vld [vmem:[%s3 + $0x3e0] sm:$0xff]
  %v5010 = vld [vmem:[%s3 + $0x3e8] sm:$0xff]
  %v5011 = vld [vmem:[%s3 + $0x3f0] sm:$0xff]
  %v5012 = vld [vmem:[%s3 + $0x3f8] sm:$0xff]
  %v5013 = vld [vmem:[%s3 + $0x400] sm:$0xff]
  %v5014 = vld [vmem:[%s3 + $0x408] sm:$0xff]
  %v5015 = vld [vmem:[%s3 + $0x410] sm:$0xff]
  %v5016 = vld [vmem:[%s3 + $0x418] sm:$0xff]
  %v5017 = vld [vmem:[%s3 + $0x420] sm:$0xff]
  %v5018 = vld [vmem:[%s3 + $0x428] sm:$0xff]
  %v5019 = vld [vmem:[%s3 + $0x430] sm:$0xff]
  %v5020 = vld [vmem:[%s3 + $0x438] sm:$0xff]
  %v5021 = vld [vmem:[%s3 + $0x440] sm:$0xff]
  %v5022 = vld [vmem:[%s3 + $0x448] sm:$0xff]
  %v5023 = vld [vmem:[%s3 + $0x450] sm:$0xff]
  %v5024 = vld [vmem:[%s3 + $0x458] sm:$0xff]
  %v5025 = vld [vmem:[%s3 + $0x460] sm:$0xff]
  %v5026 = vld [vmem:[%s3 + $0x468] sm:$0xff]
  %v5027 = vld [vmem:[%s3 + $0x470] sm:$0xff]
  %v5028 = vld [vmem:[%s3 + $0x478] sm:$0xff]
  %v5029 = vld [vmem:[%s3 + $0x480] sm:$0xff]
  %v5030 = vld [vmem:[%s3 + $0x488] sm:$0xff]
  %v5031 = vld [vmem:[%s3 + $0x490] sm:$0xff]
  %v5032 = vld [vmem:[%s3 + $0x498] sm:$0xff]
  %v5033 = vld [vmem:[%s3 + $0x4a0] sm:$0xff]
  %v5034 = vld [vmem:[%s3 + $0x4a8] sm:$0xff]
  %v5035 = vld [vmem:[%s3 + $0x4b0] sm:$0xff]
  %v5036 = vld [vmem:[%s3 + $0x4b8] sm:$0xff]
  %v5037 = vld [vmem:[%s3 + $0x4c0] sm:$0xff]
  %v5038 = vld [vmem:[%s3 + $0x4c8] sm:$0xff]
  %v5039 = vld [vmem:[%s3 + $0x4d0] sm:$0xff]
  %v5040 = vld [vmem:[%s3 + $0x4d8] sm:$0xff]
  %v5041 = vld [vmem:[%s3 + $0x4e0] sm:$0xff]
  %v5042 = vld [vmem:[%s3 + $0x4e8] sm:$0xff]
  %v5043 = vld [vmem:[%s3 + $0x4f0] sm:$0xff]
  %v5044 = vld [vmem:[%s3 + $0x4f8] sm:$0xff]
  %v5045 = vld [vmem:[%s3 + $0x500] sm:$0xff]
  %v5046 = vld [vmem:[%s3 + $0x508] sm:$0xff]
  %v5047 = vld [vmem:[%s3 + $0x510] sm:$0xff]
  %v5048 = vld [vmem:[%s3 + $0x518] sm:$0xff]
  %v5049 = vld [vmem:[%s3 + $0x520] sm:$0xff]
  %v5050 = vld [vmem:[%s3 + $0x528] sm:$0xff]
  %v5051 = vld [vmem:[%s3 + $0x530] sm:$0xff]
  %v5052 = vld [vmem:[%s3 + $0x538] sm:$0xff]
  %v5053 = vld [vmem:[%s3 + $0x540] sm:$0xff]
  %v5054 = vld [vmem:[%s3 + $0x548] sm:$0xff]
  %v5055 = vld [vmem:[%s3 + $0x550] sm:$0xff]
  %v5056 = vld [vmem:[%s3 + $0x558] sm:$0xff]
  %v5057 = vld [vmem:[%s3 + $0x560] sm:$0xff]
  %v5058 = vld [vmem:[%s3 + $0x568] sm:$0xff]
  %v5059 = vld [vmem:[%s3 + $0x570] sm:$0xff]
  %v5060 = vld [vmem:[%s3 + $0x578] sm:$0xff]
  %v5061 = vld [vmem:[%s3 + $0x580] sm:$0xff]
  %v5062 = vld [vmem:[%s3 + $0x588] sm:$0xff]
  %v5063 = vld [vmem:[%s3 + $0x590] sm:$0xff]
  %v5064 = vld [vmem:[%s3 + $0x598] sm:$0xff]
  %v5065 = vld [vmem:[%s3 + $0x5a0] sm:$0xff]
  %v5066 = vld [vmem:[%s3 + $0x5a8] sm:$0xff]
  %v5067 = vld [vmem:[%s3 + $0x5b0] sm:$0xff]
  %v5068 = vld [vmem:[%s3 + $0x5b8] sm:$0xff]
  %v5069 = vld [vmem:[%s3 + $0x5c0] sm:$0xff]
  %v5070 = vld [vmem:[%s3 + $0x5c8] sm:$0xff]
  %v5071 = vld [vmem:[%s3 + $0x5d0] sm:$0xff]
  %v5072 = vld [vmem:[%s3 + $0x5d8] sm:$0xff]
  %v5073 = vld [vmem:[%s3 + $0x5e0] sm:$0xff]
  %v5074 = vld [vmem:[%s3 + $0x5e8] sm:$0xff]
  %v5075 = vld [vmem:[%s3 + $0x5f0] sm:$0xff]
  %v5076 = vld [vmem:[%s3 + $0x5f8] sm:$0xff]
  %v5077 = vld [vmem:[%s3 + $0x600] sm:$0xff]
  %v5078 = vld [vmem:[%s3 + $0x608] sm:$0xff]
  %v5079 = vld [vmem:[%s3 + $0x610] sm:$0xff]
  %v5080 = vld [vmem:[%s3 + $0x618] sm:$0xff]
  %v5081 = vld [vmem:[%s3 + $0x620] sm:$0xff]
  %v5082 = vld [vmem:[%s3 + $0x628] sm:$0xff]
  %v5083 = vld [vmem:[%s3 + $0x630] sm:$0xff]
  %v5084 = vld [vmem:[%s3 + $0x638] sm:$0xff]
  %v5085 = vld [vmem:[%s3 + $0x640] sm:$0xff]
  %v5086 = vld [vmem:[%s3 + $0x648] sm:$0xff]
  %v5087 = vld [vmem:[%s3 + $0x650] sm:$0xff]
  %v5088 = vld [vmem:[%s3 + $0x658] sm:$0xff]
  %v5089 = vld [vmem:[%s3 + $0x660] sm:$0xff]
  %v5090 = vld [vmem:[%s3 + $0x668] sm:$0xff]
  %v5091 = vld [vmem:[%s3 + $0x670] sm:$0xff]
  %v5092 = vld [vmem:[%s3 + $0x678] sm:$0xff]
  %v5093 = vld [vmem:[%s3 + $0x680] sm:$0xff]
  %v5094 = vld [vmem:[%s3 + $0x688] sm:$0xff]
  %v5095 = vld [vmem:[%s3 + $0x690] sm:$0xff]
  %v5096 = vld [vmem:[%s3 + $0x698] sm:$0xff]
  %v5097 = vld [vmem:[%s3 + $0x6a0] sm:$0xff]
  %v5098 = vld [vmem:[%s3 + $0x6a8] sm:$0xff]
  %v5099 = vld [vmem:[%s3 + $0x6b0] sm:$0xff]
  %v5100 = vld [vmem:[%s3 + $0x6b8] sm:$0xff]
  %v5101 = vld [vmem:[%s3 + $0x6c0] sm:$0xff]
  %v5102 = vld [vmem:[%s3 + $0x6c8] sm:$0xff]
  %v5103 = vld [vmem:[%s3 + $0x6d0] sm:$0xff]
  %v5104 = vld [vmem:[%s3 + $0x6d8] sm:$0xff]
  %v5105 = vld [vmem:[%s3 + $0x6e0] sm:$0xff]
  %v5106 = vld [vmem:[%s3 + $0x6e8] sm:$0xff]
  %v5107 = vld [vmem:[%s3 + $0x6f0] sm:$0xff]
  %v5108 = vld [vmem:[%s3 + $0x6f8] sm:$0xff]
  %v5109 = vld [vmem:[%s3 + $0x700] sm:$0xff]
  %v5110 = vld [vmem:[%s3 + $0x708] sm:$0xff]
  %v5111 = vld [vmem:[%s3 + $0x710] sm:$0xff]
  %v5112 = vld [vmem:[%s3 + $0x718] sm:$0xff]
  %v5113 = vld [vmem:[%s3 + $0x720] sm:$0xff]
  %v5114 = vld [vmem:[%s3 + $0x728] sm:$0xff]
  %v5115 = vld [vmem:[%s3 + $0x730] sm:$0xff]
  %v5116 = vld [vmem:[%s3 + $0x738] sm:$0xff]
  %v5117 = vld [vmem:[%s3 + $0x740] sm:$0xff]
  %v5118 = vld [vmem:[%s3 + $0x748] sm:$0xff]
  %v5119 = vld [vmem:[%s3 + $0x750] sm:$0xff]
  %v5120 = vld [vmem:[%s3 + $0x758] sm:$0xff]
  %v5121 = vld [vmem:[%s3 + $0x760] sm:$0xff]
  %v5122 = vld [vmem:[%s3 + $0x768] sm:$0xff]
  %v5123 = vld [vmem:[%s3 + $0x770] sm:$0xff]
  %v5124 = vld [vmem:[%s3 + $0x778] sm:$0xff]
  %v5125 = vld [vmem:[%s3 + $0x780] sm:$0xff]
  %v5126 = vld [vmem:[%s3 + $0x788] sm:$0xff]
  %v5127 = vld [vmem:[%s3 + $0x790] sm:$0xff]
  %v5128 = vld [vmem:[%s3 + $0x798] sm:$0xff]
  %v5129 = vld [vmem:[%s3 + $0x7a0] sm:$0xff]
  %v5130 = vld [vmem:[%s3 + $0x7a8] sm:$0xff]
  %v5131 = vld [vmem:[%s3 + $0x7b0] sm:$0xff]
  %v5132 = vld [vmem:[%s3 + $0x7b8] sm:$0xff]
  %v5133 = vld [vmem:[%s3 + $0x7c0] sm:$0xff]
  %v5134 = vld [vmem:[%s3 + $0x7c8] sm:$0xff]
  %v5135 = vld [vmem:[%s3 + $0x7d0] sm:$0xff]
  %v5136 = vld [vmem:[%s3 + $0x7d8] sm:$0xff]
  %v5137 = vld [vmem:[%s3 + $0x7e0] sm:$0xff]
  %v5138 = vld [vmem:[%s3 + $0x7e8] sm:$0xff]
  %v5139 = vld [vmem:[%s3 + $0x7f0] sm:$0xff]
  %v5140 = vld [vmem:[%s3 + $0x7f8] sm:$0xff]
  %v5141 = vld [vmem:[%s4] sm:$0xf]
  %v5143 = vlaneseq
  %v5144 = vshrl.u32 %v5143, 7
  %v5145 = vsub.s32 0, %v5144
  %v5146 = vrot.slane %v5141, %v5145
  %v5147 = vlaneseq
  %v5148 = vshrl.u32 %v5147, 7
  %v5149 = vsub.s32 1, %v5148
  %v5150 = vrot.slane %v5141, %v5149
  %v5151 = vlaneseq
  %v5152 = vshrl.u32 %v5151, 7
  %v5153 = vsub.s32 2, %v5152
  %v5154 = vrot.slane %v5141, %v5153
  %v5155 = vlaneseq
  %v5156 = vshrl.u32 %v5155, 7
  %v5157 = vsub.s32 3, %v5156
  %v5158 = vrot.slane %v5141, %v5157
  %v5419 = vunpack.c.l.b16 %v4885
  %v5420 = vunpack.c.h.b16 %v4885
  %v5421 = vunpack.c.l.b16 %v4886
  %v5422 = vunpack.c.h.b16 %v4886
  %v5423 = vunpack.c.l.b16 %v4887
  %v5424 = vunpack.c.h.b16 %v4887
  %v5425 = vunpack.c.l.b16 %v4888
  %v5426 = vunpack.c.h.b16 %v4888
  %v5427 = vunpack.c.l.b16 %v4889
  %v5428 = vunpack.c.h.b16 %v4889
  %v5429 = vunpack.c.l.b16 %v4890
  %v5430 = vunpack.c.h.b16 %v4890
  %v5431 = vunpack.c.l.b16 %v4891
  %v5432 = vunpack.c.h.b16 %v4891
  %v5433 = vunpack.c.l.b16 %v4892
  %v5434 = vunpack.c.h.b16 %v4892
  %v5435 = vunpack.c.l.b16 %v4893
  %v5436 = vunpack.c.h.b16 %v4893
  %v5437 = vunpack.c.l.b16 %v4894
  %v5438 = vunpack.c.h.b16 %v4894
  %v5439 = vunpack.c.l.b16 %v4895
  %v5440 = vunpack.c.h.b16 %v4895
  %v5441 = vunpack.c.l.b16 %v4896
  %v5442 = vunpack.c.h.b16 %v4896
  %v5443 = vunpack.c.l.b16 %v4897
  %v5444 = vunpack.c.h.b16 %v4897
  %v5445 = vunpack.c.l.b16 %v4898
  %v5446 = vunpack.c.h.b16 %v4898
  %v5447 = vunpack.c.l.b16 %v4899
  %v5448 = vunpack.c.h.b16 %v4899
  %v5449 = vunpack.c.l.b16 %v4900
  %v5450 = vunpack.c.h.b16 %v4900
  %v5451 = vunpack.c.l.b16 %v4901
  %v5452 = vunpack.c.h.b16 %v4901
  %v5453 = vunpack.c.l.b16 %v4902
  %v5454 = vunpack.c.h.b16 %v4902
  %v5455 = vunpack.c.l.b16 %v4903
  %v5456 = vunpack.c.h.b16 %v4903
  %v5457 = vunpack.c.l.b16 %v4904
  %v5458 = vunpack.c.h.b16 %v4904
  %v5459 = vunpack.c.l.b16 %v4905
  %v5460 = vunpack.c.h.b16 %v4905
  %v5461 = vunpack.c.l.b16 %v4906
  %v5462 = vunpack.c.h.b16 %v4906
  %v5463 = vunpack.c.l.b16 %v4907
  %v5464 = vunpack.c.h.b16 %v4907
  %v5465 = vunpack.c.l.b16 %v4908
  %v5466 = vunpack.c.h.b16 %v4908
  %v5467 = vunpack.c.l.b16 %v4909
  %v5468 = vunpack.c.h.b16 %v4909
  %v5469 = vunpack.c.l.b16 %v4910
  %v5470 = vunpack.c.h.b16 %v4910
  %v5471 = vunpack.c.l.b16 %v4911
  %v5472 = vunpack.c.h.b16 %v4911
  %v5473 = vunpack.c.l.b16 %v4912
  %v5474 = vunpack.c.h.b16 %v4912
  %v5475 = vunpack.c.l.b16 %v4913
  %v5476 = vunpack.c.h.b16 %v4913
  %v5477 = vunpack.c.l.b16 %v4914
  %v5478 = vunpack.c.h.b16 %v4914
  %v5479 = vunpack.c.l.b16 %v4915
  %v5480 = vunpack.c.h.b16 %v4915
  %v5481 = vunpack.c.l.b16 %v4916
  %v5482 = vunpack.c.h.b16 %v4916
  %v5483 = vunpack.c.l.b16 %v4917
  %v5484 = vunpack.c.h.b16 %v4917
  %v5485 = vunpack.c.l.b16 %v4918
  %v5486 = vunpack.c.h.b16 %v4918
  %v5487 = vunpack.c.l.b16 %v4919
  %v5488 = vunpack.c.h.b16 %v4919
  %v5489 = vunpack.c.l.b16 %v4920
  %v5490 = vunpack.c.h.b16 %v4920
  %v5491 = vunpack.c.l.b16 %v4921
  %v5492 = vunpack.c.h.b16 %v4921
  %v5493 = vunpack.c.l.b16 %v4922
  %v5494 = vunpack.c.h.b16 %v4922
  %v5495 = vunpack.c.l.b16 %v4923
  %v5496 = vunpack.c.h.b16 %v4923
  %v5497 = vunpack.c.l.b16 %v4924
  %v5498 = vunpack.c.h.b16 %v4924
  %v5499 = vunpack.c.l.b16 %v4925
  %v5500 = vunpack.c.h.b16 %v4925
  %v5501 = vunpack.c.l.b16 %v4926
  %v5502 = vunpack.c.h.b16 %v4926
  %v5503 = vunpack.c.l.b16 %v4927
  %v5504 = vunpack.c.h.b16 %v4927
  %v5505 = vunpack.c.l.b16 %v4928
  %v5506 = vunpack.c.h.b16 %v4928
  %v5507 = vunpack.c.l.b16 %v4929
  %v5508 = vunpack.c.h.b16 %v4929
  %v5509 = vunpack.c.l.b16 %v4930
  %v5510 = vunpack.c.h.b16 %v4930
  %v5511 = vunpack.c.l.b16 %v4931
  %v5512 = vunpack.c.h.b16 %v4931
  %v5513 = vunpack.c.l.b16 %v4932
  %v5514 = vunpack.c.h.b16 %v4932
  %v5515 = vunpack.c.l.b16 %v4933
  %v5516 = vunpack.c.h.b16 %v4933
  %v5517 = vunpack.c.l.b16 %v4934
  %v5518 = vunpack.c.h.b16 %v4934
  %v5519 = vunpack.c.l.b16 %v4935
  %v5520 = vunpack.c.h.b16 %v4935
  %v5521 = vunpack.c.l.b16 %v4936
  %v5522 = vunpack.c.h.b16 %v4936
  %v5523 = vunpack.c.l.b16 %v4937
  %v5524 = vunpack.c.h.b16 %v4937
  %v5525 = vunpack.c.l.b16 %v4938
  %v5526 = vunpack.c.h.b16 %v4938
  %v5527 = vunpack.c.l.b16 %v4939
  %v5528 = vunpack.c.h.b16 %v4939
  %v5529 = vunpack.c.l.b16 %v4940
  %v5530 = vunpack.c.h.b16 %v4940
  %v5531 = vunpack.c.l.b16 %v4941
  %v5532 = vunpack.c.h.b16 %v4941
  %v5533 = vunpack.c.l.b16 %v4942
  %v5534 = vunpack.c.h.b16 %v4942
  %v5535 = vunpack.c.l.b16 %v4943
  %v5536 = vunpack.c.h.b16 %v4943
  %v5537 = vunpack.c.l.b16 %v4944
  %v5538 = vunpack.c.h.b16 %v4944
  %v5539 = vunpack.c.l.b16 %v4945
  %v5540 = vunpack.c.h.b16 %v4945
  %v5541 = vunpack.c.l.b16 %v4946
  %v5542 = vunpack.c.h.b16 %v4946
  %v5543 = vunpack.c.l.b16 %v4947
  %v5544 = vunpack.c.h.b16 %v4947
  %v5545 = vunpack.c.l.b16 %v4948
  %v5546 = vunpack.c.h.b16 %v4948
  %v5547 = vunpack.c.l.b16 %v4949
  %v5548 = vunpack.c.h.b16 %v4949
  %v5549 = vunpack.c.l.b16 %v4950
  %v5550 = vunpack.c.h.b16 %v4950
  %v5551 = vunpack.c.l.b16 %v4951
  %v5552 = vunpack.c.h.b16 %v4951
  %v5553 = vunpack.c.l.b16 %v4952
  %v5554 = vunpack.c.h.b16 %v4952
  %v5555 = vunpack.c.l.b16 %v4953
  %v5556 = vunpack.c.h.b16 %v4953
  %v5557 = vunpack.c.l.b16 %v4954
  %v5558 = vunpack.c.h.b16 %v4954
  %v5559 = vunpack.c.l.b16 %v4955
  %v5560 = vunpack.c.h.b16 %v4955
  %v5561 = vunpack.c.l.b16 %v4956
  %v5562 = vunpack.c.h.b16 %v4956
  %v5563 = vunpack.c.l.b16 %v4957
  %v5564 = vunpack.c.h.b16 %v4957
  %v5565 = vunpack.c.l.b16 %v4958
  %v5566 = vunpack.c.h.b16 %v4958
  %v5567 = vunpack.c.l.b16 %v4959
  %v5568 = vunpack.c.h.b16 %v4959
  %v5569 = vunpack.c.l.b16 %v4960
  %v5570 = vunpack.c.h.b16 %v4960
  %v5571 = vunpack.c.l.b16 %v4961
  %v5572 = vunpack.c.h.b16 %v4961
  %v5573 = vunpack.c.l.b16 %v4962
  %v5574 = vunpack.c.h.b16 %v4962
  %v5575 = vunpack.c.l.b16 %v4963
  %v5576 = vunpack.c.h.b16 %v4963
  %v5577 = vunpack.c.l.b16 %v4964
  %v5578 = vunpack.c.h.b16 %v4964
  %v5579 = vunpack.c.l.b16 %v4965
  %v5580 = vunpack.c.h.b16 %v4965
  %v5581 = vunpack.c.l.b16 %v4966
  %v5582 = vunpack.c.h.b16 %v4966
  %v5583 = vunpack.c.l.b16 %v4967
  %v5584 = vunpack.c.h.b16 %v4967
  %v5585 = vunpack.c.l.b16 %v4968
  %v5586 = vunpack.c.h.b16 %v4968
  %v5587 = vunpack.c.l.b16 %v4969
  %v5588 = vunpack.c.h.b16 %v4969
  %v5589 = vunpack.c.l.b16 %v4970
  %v5590 = vunpack.c.h.b16 %v4970
  %v5591 = vunpack.c.l.b16 %v4971
  %v5592 = vunpack.c.h.b16 %v4971
  %v5593 = vunpack.c.l.b16 %v4972
  %v5594 = vunpack.c.h.b16 %v4972
  %v5595 = vunpack.c.l.b16 %v4973
  %v5596 = vunpack.c.h.b16 %v4973
  %v5597 = vunpack.c.l.b16 %v4974
  %v5598 = vunpack.c.h.b16 %v4974
  %v5599 = vunpack.c.l.b16 %v4975
  %v5600 = vunpack.c.h.b16 %v4975
  %v5601 = vunpack.c.l.b16 %v4976
  %v5602 = vunpack.c.h.b16 %v4976
  %v5603 = vunpack.c.l.b16 %v4977
  %v5604 = vunpack.c.h.b16 %v4977
  %v5605 = vunpack.c.l.b16 %v4978
  %v5606 = vunpack.c.h.b16 %v4978
  %v5607 = vunpack.c.l.b16 %v4979
  %v5608 = vunpack.c.h.b16 %v4979
  %v5609 = vunpack.c.l.b16 %v4980
  %v5610 = vunpack.c.h.b16 %v4980
  %v5611 = vunpack.c.l.b16 %v4981
  %v5612 = vunpack.c.h.b16 %v4981
  %v5613 = vunpack.c.l.b16 %v4982
  %v5614 = vunpack.c.h.b16 %v4982
  %v5615 = vunpack.c.l.b16 %v4983
  %v5616 = vunpack.c.h.b16 %v4983
  %v5617 = vunpack.c.l.b16 %v4984
  %v5618 = vunpack.c.h.b16 %v4984
  %v5619 = vunpack.c.l.b16 %v4985
  %v5620 = vunpack.c.h.b16 %v4985
  %v5621 = vunpack.c.l.b16 %v4986
  %v5622 = vunpack.c.h.b16 %v4986
  %v5623 = vunpack.c.l.b16 %v4987
  %v5624 = vunpack.c.h.b16 %v4987
  %v5625 = vunpack.c.l.b16 %v4988
  %v5626 = vunpack.c.h.b16 %v4988
  %v5627 = vunpack.c.l.b16 %v4989
  %v5628 = vunpack.c.h.b16 %v4989
  %v5629 = vunpack.c.l.b16 %v4990
  %v5630 = vunpack.c.h.b16 %v4990
  %v5631 = vunpack.c.l.b16 %v4991
  %v5632 = vunpack.c.h.b16 %v4991
  %v5633 = vunpack.c.l.b16 %v4992
  %v5634 = vunpack.c.h.b16 %v4992
  %v5635 = vunpack.c.l.b16 %v4993
  %v5636 = vunpack.c.h.b16 %v4993
  %v5637 = vunpack.c.l.b16 %v4994
  %v5638 = vunpack.c.h.b16 %v4994
  %v5639 = vunpack.c.l.b16 %v4995
  %v5640 = vunpack.c.h.b16 %v4995
  %v5641 = vunpack.c.l.b16 %v4996
  %v5642 = vunpack.c.h.b16 %v4996
  %v5643 = vunpack.c.l.b16 %v4997
  %v5644 = vunpack.c.h.b16 %v4997
  %v5645 = vunpack.c.l.b16 %v4998
  %v5646 = vunpack.c.h.b16 %v4998
  %v5647 = vunpack.c.l.b16 %v4999
  %v5648 = vunpack.c.h.b16 %v4999
  %v5649 = vunpack.c.l.b16 %v5000
  %v5650 = vunpack.c.h.b16 %v5000
  %v5651 = vunpack.c.l.b16 %v5001
  %v5652 = vunpack.c.h.b16 %v5001
  %v5653 = vunpack.c.l.b16 %v5002
  %v5654 = vunpack.c.h.b16 %v5002
  %v5655 = vunpack.c.l.b16 %v5003
  %v5656 = vunpack.c.h.b16 %v5003
  %v5657 = vunpack.c.l.b16 %v5004
  %v5658 = vunpack.c.h.b16 %v5004
  %v5659 = vunpack.c.l.b16 %v5005
  %v5660 = vunpack.c.h.b16 %v5005
  %v5661 = vunpack.c.l.b16 %v5006
  %v5662 = vunpack.c.h.b16 %v5006
  %v5663 = vunpack.c.l.b16 %v5007
  %v5664 = vunpack.c.h.b16 %v5007
  %v5665 = vunpack.c.l.b16 %v5008
  %v5666 = vunpack.c.h.b16 %v5008
  %v5667 = vunpack.c.l.b16 %v5009
  %v5668 = vunpack.c.h.b16 %v5009
  %v5669 = vunpack.c.l.b16 %v5010
  %v5670 = vunpack.c.h.b16 %v5010
  %v5671 = vunpack.c.l.b16 %v5011
  %v5672 = vunpack.c.h.b16 %v5011
  %v5673 = vunpack.c.l.b16 %v5012
  %v5674 = vunpack.c.h.b16 %v5012
  %v5675 = vunpack.c.l.b16 %v5013
  %v5676 = vunpack.c.h.b16 %v5013
  %v5677 = vunpack.c.l.b16 %v5014
  %v5678 = vunpack.c.h.b16 %v5014
  %v5679 = vunpack.c.l.b16 %v5015
  %v5680 = vunpack.c.h.b16 %v5015
  %v5681 = vunpack.c.l.b16 %v5016
  %v5682 = vunpack.c.h.b16 %v5016
  %v5683 = vunpack.c.l.b16 %v5017
  %v5684 = vunpack.c.h.b16 %v5017
  %v5685 = vunpack.c.l.b16 %v5018
  %v5686 = vunpack.c.h.b16 %v5018
  %v5687 = vunpack.c.l.b16 %v5019
  %v5688 = vunpack.c.h.b16 %v5019
  %v5689 = vunpack.c.l.b16 %v5020
  %v5690 = vunpack.c.h.b16 %v5020
  %v5691 = vunpack.c.l.b16 %v5021
  %v5692 = vunpack.c.h.b16 %v5021
  %v5693 = vunpack.c.l.b16 %v5022
  %v5694 = vunpack.c.h.b16 %v5022
  %v5695 = vunpack.c.l.b16 %v5023
  %v5696 = vunpack.c.h.b16 %v5023
  %v5697 = vunpack.c.l.b16 %v5024
  %v5698 = vunpack.c.h.b16 %v5024
  %v5699 = vunpack.c.l.b16 %v5025
  %v5700 = vunpack.c.h.b16 %v5025
  %v5701 = vunpack.c.l.b16 %v5026
  %v5702 = vunpack.c.h.b16 %v5026
  %v5703 = vunpack.c.l.b16 %v5027
  %v5704 = vunpack.c.h.b16 %v5027
  %v5705 = vunpack.c.l.b16 %v5028
  %v5706 = vunpack.c.h.b16 %v5028
  %v5707 = vunpack.c.l.b16 %v5029
  %v5708 = vunpack.c.h.b16 %v5029
  %v5709 = vunpack.c.l.b16 %v5030
  %v5710 = vunpack.c.h.b16 %v5030
  %v5711 = vunpack.c.l.b16 %v5031
  %v5712 = vunpack.c.h.b16 %v5031
  %v5713 = vunpack.c.l.b16 %v5032
  %v5714 = vunpack.c.h.b16 %v5032
  %v5715 = vunpack.c.l.b16 %v5033
  %v5716 = vunpack.c.h.b16 %v5033
  %v5717 = vunpack.c.l.b16 %v5034
  %v5718 = vunpack.c.h.b16 %v5034
  %v5719 = vunpack.c.l.b16 %v5035
  %v5720 = vunpack.c.h.b16 %v5035
  %v5721 = vunpack.c.l.b16 %v5036
  %v5722 = vunpack.c.h.b16 %v5036
  %v5723 = vunpack.c.l.b16 %v5037
  %v5724 = vunpack.c.h.b16 %v5037
  %v5725 = vunpack.c.l.b16 %v5038
  %v5726 = vunpack.c.h.b16 %v5038
  %v5727 = vunpack.c.l.b16 %v5039
  %v5728 = vunpack.c.h.b16 %v5039
  %v5729 = vunpack.c.l.b16 %v5040
  %v5730 = vunpack.c.h.b16 %v5040
  %v5731 = vunpack.c.l.b16 %v5041
  %v5732 = vunpack.c.h.b16 %v5041
  %v5733 = vunpack.c.l.b16 %v5042
  %v5734 = vunpack.c.h.b16 %v5042
  %v5735 = vunpack.c.l.b16 %v5043
  %v5736 = vunpack.c.h.b16 %v5043
  %v5737 = vunpack.c.l.b16 %v5044
  %v5738 = vunpack.c.h.b16 %v5044
  %v5739 = vunpack.c.l.b16 %v5045
  %v5740 = vunpack.c.h.b16 %v5045
  %v5741 = vunpack.c.l.b16 %v5046
  %v5742 = vunpack.c.h.b16 %v5046
  %v5743 = vunpack.c.l.b16 %v5047
  %v5744 = vunpack.c.h.b16 %v5047
  %v5745 = vunpack.c.l.b16 %v5048
  %v5746 = vunpack.c.h.b16 %v5048
  %v5747 = vunpack.c.l.b16 %v5049
  %v5748 = vunpack.c.h.b16 %v5049
  %v5749 = vunpack.c.l.b16 %v5050
  %v5750 = vunpack.c.h.b16 %v5050
  %v5751 = vunpack.c.l.b16 %v5051
  %v5752 = vunpack.c.h.b16 %v5051
  %v5753 = vunpack.c.l.b16 %v5052
  %v5754 = vunpack.c.h.b16 %v5052
  %v5755 = vunpack.c.l.b16 %v5053
  %v5756 = vunpack.c.h.b16 %v5053
  %v5757 = vunpack.c.l.b16 %v5054
  %v5758 = vunpack.c.h.b16 %v5054
  %v5759 = vunpack.c.l.b16 %v5055
  %v5760 = vunpack.c.h.b16 %v5055
  %v5761 = vunpack.c.l.b16 %v5056
  %v5762 = vunpack.c.h.b16 %v5056
  %v5763 = vunpack.c.l.b16 %v5057
  %v5764 = vunpack.c.h.b16 %v5057
  %v5765 = vunpack.c.l.b16 %v5058
  %v5766 = vunpack.c.h.b16 %v5058
  %v5767 = vunpack.c.l.b16 %v5059
  %v5768 = vunpack.c.h.b16 %v5059
  %v5769 = vunpack.c.l.b16 %v5060
  %v5770 = vunpack.c.h.b16 %v5060
  %v5771 = vunpack.c.l.b16 %v5061
  %v5772 = vunpack.c.h.b16 %v5061
  %v5773 = vunpack.c.l.b16 %v5062
  %v5774 = vunpack.c.h.b16 %v5062
  %v5775 = vunpack.c.l.b16 %v5063
  %v5776 = vunpack.c.h.b16 %v5063
  %v5777 = vunpack.c.l.b16 %v5064
  %v5778 = vunpack.c.h.b16 %v5064
  %v5779 = vunpack.c.l.b16 %v5065
  %v5780 = vunpack.c.h.b16 %v5065
  %v5781 = vunpack.c.l.b16 %v5066
  %v5782 = vunpack.c.h.b16 %v5066
  %v5783 = vunpack.c.l.b16 %v5067
  %v5784 = vunpack.c.h.b16 %v5067
  %v5785 = vunpack.c.l.b16 %v5068
  %v5786 = vunpack.c.h.b16 %v5068
  %v5787 = vunpack.c.l.b16 %v5069
  %v5788 = vunpack.c.h.b16 %v5069
  %v5789 = vunpack.c.l.b16 %v5070
  %v5790 = vunpack.c.h.b16 %v5070
  %v5791 = vunpack.c.l.b16 %v5071
  %v5792 = vunpack.c.h.b16 %v5071
  %v5793 = vunpack.c.l.b16 %v5072
  %v5794 = vunpack.c.h.b16 %v5072
  %v5795 = vunpack.c.l.b16 %v5073
  %v5796 = vunpack.c.h.b16 %v5073
  %v5797 = vunpack.c.l.b16 %v5074
  %v5798 = vunpack.c.h.b16 %v5074
  %v5799 = vunpack.c.l.b16 %v5075
  %v5800 = vunpack.c.h.b16 %v5075
  %v5801 = vunpack.c.l.b16 %v5076
  %v5802 = vunpack.c.h.b16 %v5076
  %v5803 = vunpack.c.l.b16 %v5077
  %v5804 = vunpack.c.h.b16 %v5077
  %v5805 = vunpack.c.l.b16 %v5078
  %v5806 = vunpack.c.h.b16 %v5078
  %v5807 = vunpack.c.l.b16 %v5079
  %v5808 = vunpack.c.h.b16 %v5079
  %v5809 = vunpack.c.l.b16 %v5080
  %v5810 = vunpack.c.h.b16 %v5080
  %v5811 = vunpack.c.l.b16 %v5081
  %v5812 = vunpack.c.h.b16 %v5081
  %v5813 = vunpack.c.l.b16 %v5082
  %v5814 = vunpack.c.h.b16 %v5082
  %v5815 = vunpack.c.l.b16 %v5083
  %v5816 = vunpack.c.h.b16 %v5083
  %v5817 = vunpack.c.l.b16 %v5084
  %v5818 = vunpack.c.h.b16 %v5084
  %v5819 = vunpack.c.l.b16 %v5085
  %v5820 = vunpack.c.h.b16 %v5085
  %v5821 = vunpack.c.l.b16 %v5086
  %v5822 = vunpack.c.h.b16 %v5086
  %v5823 = vunpack.c.l.b16 %v5087
  %v5824 = vunpack.c.h.b16 %v5087
  %v5825 = vunpack.c.l.b16 %v5088
  %v5826 = vunpack.c.h.b16 %v5088
  %v5827 = vunpack.c.l.b16 %v5089
  %v5828 = vunpack.c.h.b16 %v5089
  %v5829 = vunpack.c.l.b16 %v5090
  %v5830 = vunpack.c.h.b16 %v5090
  %v5831 = vunpack.c.l.b16 %v5091
  %v5832 = vunpack.c.h.b16 %v5091
  %v5833 = vunpack.c.l.b16 %v5092
  %v5834 = vunpack.c.h.b16 %v5092
  %v5835 = vunpack.c.l.b16 %v5093
  %v5836 = vunpack.c.h.b16 %v5093
  %v5837 = vunpack.c.l.b16 %v5094
  %v5838 = vunpack.c.h.b16 %v5094
  %v5839 = vunpack.c.l.b16 %v5095
  %v5840 = vunpack.c.h.b16 %v5095
  %v5841 = vunpack.c.l.b16 %v5096
  %v5842 = vunpack.c.h.b16 %v5096
  %v5843 = vunpack.c.l.b16 %v5097
  %v5844 = vunpack.c.h.b16 %v5097
  %v5845 = vunpack.c.l.b16 %v5098
  %v5846 = vunpack.c.h.b16 %v5098
  %v5847 = vunpack.c.l.b16 %v5099
  %v5848 = vunpack.c.h.b16 %v5099
  %v5849 = vunpack.c.l.b16 %v5100
  %v5850 = vunpack.c.h.b16 %v5100
  %v5851 = vunpack.c.l.b16 %v5101
  %v5852 = vunpack.c.h.b16 %v5101
  %v5853 = vunpack.c.l.b16 %v5102
  %v5854 = vunpack.c.h.b16 %v5102
  %v5855 = vunpack.c.l.b16 %v5103
  %v5856 = vunpack.c.h.b16 %v5103
  %v5857 = vunpack.c.l.b16 %v5104
  %v5858 = vunpack.c.h.b16 %v5104
  %v5859 = vunpack.c.l.b16 %v5105
  %v5860 = vunpack.c.h.b16 %v5105
  %v5861 = vunpack.c.l.b16 %v5106
  %v5862 = vunpack.c.h.b16 %v5106
  %v5863 = vunpack.c.l.b16 %v5107
  %v5864 = vunpack.c.h.b16 %v5107
  %v5865 = vunpack.c.l.b16 %v5108
  %v5866 = vunpack.c.h.b16 %v5108
  %v5867 = vunpack.c.l.b16 %v5109
  %v5868 = vunpack.c.h.b16 %v5109
  %v5869 = vunpack.c.l.b16 %v5110
  %v5870 = vunpack.c.h.b16 %v5110
  %v5871 = vunpack.c.l.b16 %v5111
  %v5872 = vunpack.c.h.b16 %v5111
  %v5873 = vunpack.c.l.b16 %v5112
  %v5874 = vunpack.c.h.b16 %v5112
  %v5875 = vunpack.c.l.b16 %v5113
  %v5876 = vunpack.c.h.b16 %v5113
  %v5877 = vunpack.c.l.b16 %v5114
  %v5878 = vunpack.c.h.b16 %v5114
  %v5879 = vunpack.c.l.b16 %v5115
  %v5880 = vunpack.c.h.b16 %v5115
  %v5881 = vunpack.c.l.b16 %v5116
  %v5882 = vunpack.c.h.b16 %v5116
  %v5883 = vunpack.c.l.b16 %v5117
  %v5884 = vunpack.c.h.b16 %v5117
  %v5885 = vunpack.c.l.b16 %v5118
  %v5886 = vunpack.c.h.b16 %v5118
  %v5887 = vunpack.c.l.b16 %v5119
  %v5888 = vunpack.c.h.b16 %v5119
  %v5889 = vunpack.c.l.b16 %v5120
  %v5890 = vunpack.c.h.b16 %v5120
  %v5891 = vunpack.c.l.b16 %v5121
  %v5892 = vunpack.c.h.b16 %v5121
  %v5893 = vunpack.c.l.b16 %v5122
  %v5894 = vunpack.c.h.b16 %v5122
  %v5895 = vunpack.c.l.b16 %v5123
  %v5896 = vunpack.c.h.b16 %v5123
  %v5897 = vunpack.c.l.b16 %v5124
  %v5898 = vunpack.c.h.b16 %v5124
  %v5899 = vunpack.c.l.b16 %v5125
  %v5900 = vunpack.c.h.b16 %v5125
  %v5901 = vunpack.c.l.b16 %v5126
  %v5902 = vunpack.c.h.b16 %v5126
  %v5903 = vunpack.c.l.b16 %v5127
  %v5904 = vunpack.c.h.b16 %v5127
  %v5905 = vunpack.c.l.b16 %v5128
  %v5906 = vunpack.c.h.b16 %v5128
  %v5907 = vunpack.c.l.b16 %v5129
  %v5908 = vunpack.c.h.b16 %v5129
  %v5909 = vunpack.c.l.b16 %v5130
  %v5910 = vunpack.c.h.b16 %v5130
  %v5911 = vunpack.c.l.b16 %v5131
  %v5912 = vunpack.c.h.b16 %v5131
  %v5913 = vunpack.c.l.b16 %v5132
  %v5914 = vunpack.c.h.b16 %v5132
  %v5915 = vunpack.c.l.b16 %v5133
  %v5916 = vunpack.c.h.b16 %v5133
  %v5917 = vunpack.c.l.b16 %v5134
  %v5918 = vunpack.c.h.b16 %v5134
  %v5919 = vunpack.c.l.b16 %v5135
  %v5920 = vunpack.c.h.b16 %v5135
  %v5921 = vunpack.c.l.b16 %v5136
  %v5922 = vunpack.c.h.b16 %v5136
  %v5923 = vunpack.c.l.b16 %v5137
  %v5924 = vunpack.c.h.b16 %v5137
  %v5925 = vunpack.c.l.b16 %v5138
  %v5926 = vunpack.c.h.b16 %v5138
  %v5927 = vunpack.c.l.b16 %v5139
  %v5928 = vunpack.c.h.b16 %v5139
  %v5929 = vunpack.c.l.b16 %v5140
  %v5930 = vunpack.c.h.b16 %v5140
  %v5931 = vpack.c.b16 %v5423, %v5419
  %v5932 = vpack.c.b16 %v5424, %v5420
  %v5933 = vpack.c.b16 %v5425, %v5421
  %v5934 = vpack.c.b16 %v5426, %v5422
  %v5935 = vpack.c.b16 %v5431, %v5427
  %v5936 = vpack.c.b16 %v5432, %v5428
  %v5937 = vpack.c.b16 %v5433, %v5429
  %v5938 = vpack.c.b16 %v5434, %v5430
  %v5939 = vpack.c.b16 %v5439, %v5435
  %v5940 = vpack.c.b16 %v5440, %v5436
  %v5941 = vpack.c.b16 %v5441, %v5437
  %v5942 = vpack.c.b16 %v5442, %v5438
  %v5943 = vpack.c.b16 %v5447, %v5443
  %v5944 = vpack.c.b16 %v5448, %v5444
  %v5945 = vpack.c.b16 %v5449, %v5445
  %v5946 = vpack.c.b16 %v5450, %v5446
  %v5947 = vpack.c.b16 %v5455, %v5451
  %v5948 = vpack.c.b16 %v5456, %v5452
  %v5949 = vpack.c.b16 %v5457, %v5453
  %v5950 = vpack.c.b16 %v5458, %v5454
  %v5951 = vpack.c.b16 %v5463, %v5459
  %v5952 = vpack.c.b16 %v5464, %v5460
  %v5953 = vpack.c.b16 %v5465, %v5461
  %v5954 = vpack.c.b16 %v5466, %v5462
  %v5955 = vpack.c.b16 %v5471, %v5467
  %v5956 = vpack.c.b16 %v5472, %v5468
  %v5957 = vpack.c.b16 %v5473, %v5469
  %v5958 = vpack.c.b16 %v5474, %v5470
  %v5959 = vpack.c.b16 %v5479, %v5475
  %v5960 = vpack.c.b16 %v5480, %v5476
  %v5961 = vpack.c.b16 %v5481, %v5477
  %v5962 = vpack.c.b16 %v5482, %v5478
  %v5963 = vpack.c.b16 %v5487, %v5483
  %v5964 = vpack.c.b16 %v5488, %v5484
  %v5965 = vpack.c.b16 %v5489, %v5485
  %v5966 = vpack.c.b16 %v5490, %v5486
  %v5967 = vpack.c.b16 %v5495, %v5491
  %v5968 = vpack.c.b16 %v5496, %v5492
  %v5969 = vpack.c.b16 %v5497, %v5493
  %v5970 = vpack.c.b16 %v5498, %v5494
  %v5971 = vpack.c.b16 %v5503, %v5499
  %v5972 = vpack.c.b16 %v5504, %v5500
  %v5973 = vpack.c.b16 %v5505, %v5501
  %v5974 = vpack.c.b16 %v5506, %v5502
  %v5975 = vpack.c.b16 %v5511, %v5507
  %v5976 = vpack.c.b16 %v5512, %v5508
  %v5977 = vpack.c.b16 %v5513, %v5509
  %v5978 = vpack.c.b16 %v5514, %v5510
  %v5979 = vpack.c.b16 %v5519, %v5515
  %v5980 = vpack.c.b16 %v5520, %v5516
  %v5981 = vpack.c.b16 %v5521, %v5517
  %v5982 = vpack.c.b16 %v5522, %v5518
  %v5983 = vpack.c.b16 %v5527, %v5523
  %v5984 = vpack.c.b16 %v5528, %v5524
  %v5985 = vpack.c.b16 %v5529, %v5525
  %v5986 = vpack.c.b16 %v5530, %v5526
  %v5987 = vpack.c.b16 %v5535, %v5531
  %v5988 = vpack.c.b16 %v5536, %v5532
  %v5989 = vpack.c.b16 %v5537, %v5533
  %v5990 = vpack.c.b16 %v5538, %v5534
  %v5991 = vpack.c.b16 %v5543, %v5539
  %v5992 = vpack.c.b16 %v5544, %v5540
  %v5993 = vpack.c.b16 %v5545, %v5541
  %v5994 = vpack.c.b16 %v5546, %v5542
  %v5995 = vpack.c.b16 %v5551, %v5547
  %v5996 = vpack.c.b16 %v5552, %v5548
  %v5997 = vpack.c.b16 %v5553, %v5549
  %v5998 = vpack.c.b16 %v5554, %v5550
  %v5999 = vpack.c.b16 %v5559, %v5555
  %v6000 = vpack.c.b16 %v5560, %v5556
  %v6001 = vpack.c.b16 %v5561, %v5557
  %v6002 = vpack.c.b16 %v5562, %v5558
  %v6003 = vpack.c.b16 %v5567, %v5563
  %v6004 = vpack.c.b16 %v5568, %v5564
  %v6005 = vpack.c.b16 %v5569, %v5565
  %v6006 = vpack.c.b16 %v5570, %v5566
  %v6007 = vpack.c.b16 %v5575, %v5571
  %v6008 = vpack.c.b16 %v5576, %v5572
  %v6009 = vpack.c.b16 %v5577, %v5573
  %v6010 = vpack.c.b16 %v5578, %v5574
  %v6011 = vpack.c.b16 %v5583, %v5579
  %v6012 = vpack.c.b16 %v5584, %v5580
  %v6013 = vpack.c.b16 %v5585, %v5581
  %v6014 = vpack.c.b16 %v5586, %v5582
  %v6015 = vpack.c.b16 %v5591, %v5587
  %v6016 = vpack.c.b16 %v5592, %v5588
  %v6017 = vpack.c.b16 %v5593, %v5589
  %v6018 = vpack.c.b16 %v5594, %v5590
  %v6019 = vpack.c.b16 %v5599, %v5595
  %v6020 = vpack.c.b16 %v5600, %v5596
  %v6021 = vpack.c.b16 %v5601, %v5597
  %v6022 = vpack.c.b16 %v5602, %v5598
  %v6023 = vpack.c.b16 %v5607, %v5603
  %v6024 = vpack.c.b16 %v5608, %v5604
  %v6025 = vpack.c.b16 %v5609, %v5605
  %v6026 = vpack.c.b16 %v5610, %v5606
  %v6027 = vpack.c.b16 %v5615, %v5611
  %v6028 = vpack.c.b16 %v5616, %v5612
  %v6029 = vpack.c.b16 %v5617, %v5613
  %v6030 = vpack.c.b16 %v5618, %v5614
  %v6031 = vpack.c.b16 %v5623, %v5619
  %v6032 = vpack.c.b16 %v5624, %v5620
  %v6033 = vpack.c.b16 %v5625, %v5621
  %v6034 = vpack.c.b16 %v5626, %v5622
  %v6035 = vpack.c.b16 %v5631, %v5627
  %v6036 = vpack.c.b16 %v5632, %v5628
  %v6037 = vpack.c.b16 %v5633, %v5629
  %v6038 = vpack.c.b16 %v5634, %v5630
  %v6039 = vpack.c.b16 %v5639, %v5635
  %v6040 = vpack.c.b16 %v5640, %v5636
  %v6041 = vpack.c.b16 %v5641, %v5637
  %v6042 = vpack.c.b16 %v5642, %v5638
  %v6043 = vpack.c.b16 %v5647, %v5643
  %v6044 = vpack.c.b16 %v5648, %v5644
  %v6045 = vpack.c.b16 %v5649, %v5645
  %v6046 = vpack.c.b16 %v5650, %v5646
  %v6047 = vpack.c.b16 %v5655, %v5651
  %v6048 = vpack.c.b16 %v5656, %v5652
  %v6049 = vpack.c.b16 %v5657, %v5653
  %v6050 = vpack.c.b16 %v5658, %v5654
  %v6051 = vpack.c.b16 %v5663, %v5659
  %v6052 = vpack.c.b16 %v5664, %v5660
  %v6053 = vpack.c.b16 %v5665, %v5661
  %v6054 = vpack.c.b16 %v5666, %v5662
  %v6055 = vpack.c.b16 %v5671, %v5667
  %v6056 = vpack.c.b16 %v5672, %v5668
  %v6057 = vpack.c.b16 %v5673, %v5669
  %v6058 = vpack.c.b16 %v5674, %v5670
  %v6059 = vpack.c.b16 %v5679, %v5675
  %v6060 = vpack.c.b16 %v5680, %v5676
  %v6061 = vpack.c.b16 %v5681, %v5677
  %v6062 = vpack.c.b16 %v5682, %v5678
  %v6063 = vpack.c.b16 %v5687, %v5683
  %v6064 = vpack.c.b16 %v5688, %v5684
  %v6065 = vpack.c.b16 %v5689, %v5685
  %v6066 = vpack.c.b16 %v5690, %v5686
  %v6067 = vpack.c.b16 %v5695, %v5691
  %v6068 = vpack.c.b16 %v5696, %v5692
  %v6069 = vpack.c.b16 %v5697, %v5693
  %v6070 = vpack.c.b16 %v5698, %v5694
  %v6071 = vpack.c.b16 %v5703, %v5699
  %v6072 = vpack.c.b16 %v5704, %v5700
  %v6073 = vpack.c.b16 %v5705, %v5701
  %v6074 = vpack.c.b16 %v5706, %v5702
  %v6075 = vpack.c.b16 %v5711, %v5707
  %v6076 = vpack.c.b16 %v5712, %v5708
  %v6077 = vpack.c.b16 %v5713, %v5709
  %v6078 = vpack.c.b16 %v5714, %v5710
  %v6079 = vpack.c.b16 %v5719, %v5715
  %v6080 = vpack.c.b16 %v5720, %v5716
  %v6081 = vpack.c.b16 %v5721, %v5717
  %v6082 = vpack.c.b16 %v5722, %v5718
  %v6083 = vpack.c.b16 %v5727, %v5723
  %v6084 = vpack.c.b16 %v5728, %v5724
  %v6085 = vpack.c.b16 %v5729, %v5725
  %v6086 = vpack.c.b16 %v5730, %v5726
  %v6087 = vpack.c.b16 %v5735, %v5731
  %v6088 = vpack.c.b16 %v5736, %v5732
  %v6089 = vpack.c.b16 %v5737, %v5733
  %v6090 = vpack.c.b16 %v5738, %v5734
  %v6091 = vpack.c.b16 %v5743, %v5739
  %v6092 = vpack.c.b16 %v5744, %v5740
  %v6093 = vpack.c.b16 %v5745, %v5741
  %v6094 = vpack.c.b16 %v5746, %v5742
  %v6095 = vpack.c.b16 %v5751, %v5747
  %v6096 = vpack.c.b16 %v5752, %v5748
  %v6097 = vpack.c.b16 %v5753, %v5749
  %v6098 = vpack.c.b16 %v5754, %v5750
  %v6099 = vpack.c.b16 %v5759, %v5755
  %v6100 = vpack.c.b16 %v5760, %v5756
  %v6101 = vpack.c.b16 %v5761, %v5757
  %v6102 = vpack.c.b16 %v5762, %v5758
  %v6103 = vpack.c.b16 %v5767, %v5763
  %v6104 = vpack.c.b16 %v5768, %v5764
  %v6105 = vpack.c.b16 %v5769, %v5765
  %v6106 = vpack.c.b16 %v5770, %v5766
  %v6107 = vpack.c.b16 %v5775, %v5771
  %v6108 = vpack.c.b16 %v5776, %v5772
  %v6109 = vpack.c.b16 %v5777, %v5773
  %v6110 = vpack.c.b16 %v5778, %v5774
  %v6111 = vpack.c.b16 %v5783, %v5779
  %v6112 = vpack.c.b16 %v5784, %v5780
  %v6113 = vpack.c.b16 %v5785, %v5781
  %v6114 = vpack.c.b16 %v5786, %v5782
  %v6115 = vpack.c.b16 %v5791, %v5787
  %v6116 = vpack.c.b16 %v5792, %v5788
  %v6117 = vpack.c.b16 %v5793, %v5789
  %v6118 = vpack.c.b16 %v5794, %v5790
  %v6119 = vpack.c.b16 %v5799, %v5795
  %v6120 = vpack.c.b16 %v5800, %v5796
  %v6121 = vpack.c.b16 %v5801, %v5797
  %v6122 = vpack.c.b16 %v5802, %v5798
  %v6123 = vpack.c.b16 %v5807, %v5803
  %v6124 = vpack.c.b16 %v5808, %v5804
  %v6125 = vpack.c.b16 %v5809, %v5805
  %v6126 = vpack.c.b16 %v5810, %v5806
  %v6127 = vpack.c.b16 %v5815, %v5811
  %v6128 = vpack.c.b16 %v5816, %v5812
  %v6129 = vpack.c.b16 %v5817, %v5813
  %v6130 = vpack.c.b16 %v5818, %v5814
  %v6131 = vpack.c.b16 %v5823, %v5819
  %v6132 = vpack.c.b16 %v5824, %v5820
  %v6133 = vpack.c.b16 %v5825, %v5821
  %v6134 = vpack.c.b16 %v5826, %v5822
  %v6135 = vpack.c.b16 %v5831, %v5827
  %v6136 = vpack.c.b16 %v5832, %v5828
  %v6137 = vpack.c.b16 %v5833, %v5829
  %v6138 = vpack.c.b16 %v5834, %v5830
  %v6139 = vpack.c.b16 %v5839, %v5835
  %v6140 = vpack.c.b16 %v5840, %v5836
  %v6141 = vpack.c.b16 %v5841, %v5837
  %v6142 = vpack.c.b16 %v5842, %v5838
  %v6143 = vpack.c.b16 %v5847, %v5843
  %v6144 = vpack.c.b16 %v5848, %v5844
  %v6145 = vpack.c.b16 %v5849, %v5845
  %v6146 = vpack.c.b16 %v5850, %v5846
  %v6147 = vpack.c.b16 %v5855, %v5851
  %v6148 = vpack.c.b16 %v5856, %v5852
  %v6149 = vpack.c.b16 %v5857, %v5853
  %v6150 = vpack.c.b16 %v5858, %v5854
  %v6151 = vpack.c.b16 %v5863, %v5859
  %v6152 = vpack.c.b16 %v5864, %v5860
  %v6153 = vpack.c.b16 %v5865, %v5861
  %v6154 = vpack.c.b16 %v5866, %v5862
  %v6155 = vpack.c.b16 %v5871, %v5867
  %v6156 = vpack.c.b16 %v5872, %v5868
  %v6157 = vpack.c.b16 %v5873, %v5869
  %v6158 = vpack.c.b16 %v5874, %v5870
  %v6159 = vpack.c.b16 %v5879, %v5875
  %v6160 = vpack.c.b16 %v5880, %v5876
  %v6161 = vpack.c.b16 %v5881, %v5877
  %v6162 = vpack.c.b16 %v5882, %v5878
  %v6163 = vpack.c.b16 %v5887, %v5883
  %v6164 = vpack.c.b16 %v5888, %v5884
  %v6165 = vpack.c.b16 %v5889, %v5885
  %v6166 = vpack.c.b16 %v5890, %v5886
  %v6167 = vpack.c.b16 %v5895, %v5891
  %v6168 = vpack.c.b16 %v5896, %v5892
  %v6169 = vpack.c.b16 %v5897, %v5893
  %v6170 = vpack.c.b16 %v5898, %v5894
  %v6171 = vpack.c.b16 %v5903, %v5899
  %v6172 = vpack.c.b16 %v5904, %v5900
  %v6173 = vpack.c.b16 %v5905, %v5901
  %v6174 = vpack.c.b16 %v5906, %v5902
  %v6175 = vpack.c.b16 %v5911, %v5907
  %v6176 = vpack.c.b16 %v5912, %v5908
  %v6177 = vpack.c.b16 %v5913, %v5909
  %v6178 = vpack.c.b16 %v5914, %v5910
  %v6179 = vpack.c.b16 %v5919, %v5915
  %v6180 = vpack.c.b16 %v5920, %v5916
  %v6181 = vpack.c.b16 %v5921, %v5917
  %v6182 = vpack.c.b16 %v5922, %v5918
  %v6183 = vpack.c.b16 %v5927, %v5923
  %v6184 = vpack.c.b16 %v5928, %v5924
  %v6185 = vpack.c.b16 %v5929, %v5925
  %v6186 = vpack.c.b16 %v5930, %v5926
  %6443 = vmatprep.subr.bf16.mxu0 %v5932
  %6444 = vmatpush1.bf16.msra.mxu0 %v5931
  %6445 = vmatprep.subr.bf16.mxu0 %v5936
  %6446 = vmatpush1.bf16.msra.mxu0 %v5935
  %6447 = vmatprep.subr.bf16.mxu0 %v5940
  %6448 = vmatpush1.bf16.msra.mxu0 %v5939
  %6449 = vmatprep.subr.bf16.mxu0 %v5944
  %6450 = vmatpush1.bf16.msra.mxu0 %v5943
  %6451 = vmatprep.subr.bf16.mxu0 %v5948
  %6452 = vmatpush1.bf16.msra.mxu0 %v5947
  %6453 = vmatprep.subr.bf16.mxu0 %v5952
  %6454 = vmatpush1.bf16.msra.mxu0 %v5951
  %6455 = vmatprep.subr.bf16.mxu0 %v5956
  %6456 = vmatpush1.bf16.msra.mxu0 %v5955
  %6457 = vmatprep.subr.bf16.mxu0 %v5960
  %6458 = vmatpush1.bf16.msra.mxu0 %v5959
  %6459 = vmatprep.subr.bf16.mxu0 %v5964
  %6460 = vmatpush1.bf16.msra.mxu0 %v5963
  %6461 = vmatprep.subr.bf16.mxu0 %v5968
  %6462 = vmatpush1.bf16.msra.mxu0 %v5967
  %6463 = vmatprep.subr.bf16.mxu0 %v5972
  %6464 = vmatpush1.bf16.msra.mxu0 %v5971
  %6465 = vmatprep.subr.bf16.mxu0 %v5976
  %6466 = vmatpush1.bf16.msra.mxu0 %v5975
  %6467 = vmatprep.subr.bf16.mxu0 %v5980
  %6468 = vmatpush1.bf16.msra.mxu0 %v5979
  %6469 = vmatprep.subr.bf16.mxu0 %v5984
  %6470 = vmatpush1.bf16.msra.mxu0 %v5983
  %6471 = vmatprep.subr.bf16.mxu0 %v5988
  %6472 = vmatpush1.bf16.msra.mxu0 %v5987
  %6473 = vmatprep.subr.bf16.mxu0 %v5992
  %6474 = vmatpush1.bf16.msra.mxu0 %v5991
  %6475 = vmatprep.mubr.bf16.mxu0 %v4878
  %6476 = vmatmul.mubr.bf16.gmra.mrb[0].mxu0 %v4877
  %v6477 = vpop.f32.mrb[0].mxu0
  %v6478 = vadd.f32 %v5146, %v6477
  %v6479 = vpop.f32.mrb[0].mxu0
  %v6480 = vadd.f32 %v5150, %v6479
  %v6481 = vpop.f32.mrb[0].mxu0
  %v6482 = vadd.f32 %v5146, %v6481
  %v6483 = vpop.f32.mrb[0].mxu0
  %v6484 = vadd.f32 %v5150, %v6483
  %6485 = vdwg.mxu0
  %6486 = vmatprep.subr.bf16.mxu0 %v5996
  %6487 = vmatpush1.bf16.msra.mxu0 %v5995
  %6488 = vmatprep.subr.bf16.mxu0 %v6000
  %6489 = vmatpush1.bf16.msra.mxu0 %v5999
  %6490 = vmatprep.subr.bf16.mxu0 %v6004
  %6491 = vmatpush1.bf16.msra.mxu0 %v6003
  %6492 = vmatprep.subr.bf16.mxu0 %v6008
  %6493 = vmatpush1.bf16.msra.mxu0 %v6007
  %6494 = vmatprep.subr.bf16.mxu0 %v6012
  %6495 = vmatpush1.bf16.msra.mxu0 %v6011
  %6496 = vmatprep.subr.bf16.mxu0 %v6016
  %6497 = vmatpush1.bf16.msra.mxu0 %v6015
  %6498 = vmatprep.subr.bf16.mxu0 %v6020
  %6499 = vmatpush1.bf16.msra.mxu0 %v6019
  %6500 = vmatprep.subr.bf16.mxu0 %v6024
  %6501 = vmatpush1.bf16.msra.mxu0 %v6023
  %6502 = vmatprep.subr.bf16.mxu0 %v6028
  %6503 = vmatpush1.bf16.msra.mxu0 %v6027
  %6504 = vmatprep.subr.bf16.mxu0 %v6032
  %6505 = vmatpush1.bf16.msra.mxu0 %v6031
  %6506 = vmatprep.subr.bf16.mxu0 %v6036
  %6507 = vmatpush1.bf16.msra.mxu0 %v6035
  %6508 = vmatprep.subr.bf16.mxu0 %v6040
  %6509 = vmatpush1.bf16.msra.mxu0 %v6039
  %6510 = vmatprep.subr.bf16.mxu0 %v6044
  %6511 = vmatpush1.bf16.msra.mxu0 %v6043
  %6512 = vmatprep.subr.bf16.mxu0 %v6048
  %6513 = vmatpush1.bf16.msra.mxu0 %v6047
  %6514 = vmatprep.subr.bf16.mxu0 %v6052
  %6515 = vmatpush1.bf16.msra.mxu0 %v6051
  %6516 = vmatprep.subr.bf16.mxu0 %v6056
  %6517 = vmatpush1.bf16.msra.mxu0 %v6055
  %6518 = vmatprep.mubr.bf16.mxu0 %v4880
  %6519 = vmatmul.mubr.bf16.gmra.mrb[0].mxu0 %v4879
  %v6520 = vpop.f32.mrb[0].mxu0
  %v6521 = vadd.f32 %v6478, %v6520
  %v6522 = vpop.f32.mrb[0].mxu0
  %v6523 = vadd.f32 %v6480, %v6522
  %v6524 = vpop.f32.mrb[0].mxu0
  %v6525 = vadd.f32 %v6482, %v6524
  %v6526 = vpop.f32.mrb[0].mxu0
  %v6527 = vadd.f32 %v6484, %v6526
  %6528 = vdwg.mxu0
  %6529 = vmatprep.subr.bf16.mxu0 %v6060
  %6530 = vmatpush1.bf16.msra.mxu0 %v6059
  %6531 = vmatprep.subr.bf16.mxu0 %v6064
  %6532 = vmatpush1.bf16.msra.mxu0 %v6063
  %6533 = vmatprep.subr.bf16.mxu0 %v6068
  %6534 = vmatpush1.bf16.msra.mxu0 %v6067
  %6535 = vmatprep.subr.bf16.mxu0 %v6072
  %6536 = vmatpush1.bf16.msra.mxu0 %v6071
  %6537 = vmatprep.subr.bf16.mxu0 %v6076
  %6538 = vmatpush1.bf16.msra.mxu0 %v6075
  %6539 = vmatprep.subr.bf16.mxu0 %v6080
  %6540 = vmatpush1.bf16.msra.mxu0 %v6079
  %6541 = vmatprep.subr.bf16.mxu0 %v6084
  %6542 = vmatpush1.bf16.msra.mxu0 %v6083
  %6543 = vmatprep.subr.bf16.mxu0 %v6088
  %6544 = vmatpush1.bf16.msra.mxu0 %v6087
  %6545 = vmatprep.subr.bf16.mxu0 %v6092
  %6546 = vmatpush1.bf16.msra.mxu0 %v6091
  %6547 = vmatprep.subr.bf16.mxu0 %v6096
  %6548 = vmatpush1.bf16.msra.mxu0 %v6095
  %6549 = vmatprep.subr.bf16.mxu0 %v6100
  %6550 = vmatpush1.bf16.msra.mxu0 %v6099
  %6551 = vmatprep.subr.bf16.mxu0 %v6104
  %6552 = vmatpush1.bf16.msra.mxu0 %v6103
  %6553 = vmatprep.subr.bf16.mxu0 %v6108
  %6554 = vmatpush1.bf16.msra.mxu0 %v6107
  %6555 = vmatprep.subr.bf16.mxu0 %v6112
  %6556 = vmatpush1.bf16.msra.mxu0 %v6111
  %6557 = vmatprep.subr.bf16.mxu0 %v6116
  %6558 = vmatpush1.bf16.msra.mxu0 %v6115
  %6559 = vmatprep.subr.bf16.mxu0 %v6120
  %6560 = vmatpush1.bf16.msra.mxu0 %v6119
  %6561 = vmatprep.mubr.bf16.mxu0 %v4882
  %6562 = vmatmul.mubr.bf16.gmra.mrb[0].mxu0 %v4881
  %v6563 = vpop.f32.mrb[0].mxu0
  %v6564 = vadd.f32 %v6521, %v6563
  %v6565 = vpop.f32.mrb[0].mxu0
  %v6566 = vadd.f32 %v6523, %v6565
  %v6567 = vpop.f32.mrb[0].mxu0
  %v6568 = vadd.f32 %v6525, %v6567
  %v6569 = vpop.f32.mrb[0].mxu0
  %v6570 = vadd.f32 %v6527, %v6569
  %6571 = vdwg.mxu0
  %6572 = vmatprep.subr.bf16.mxu0 %v6124
  %6573 = vmatpush1.bf16.msra.mxu0 %v6123
  %6574 = vmatprep.subr.bf16.mxu0 %v6128
  %6575 = vmatpush1.bf16.msra.mxu0 %v6127
  %6576 = vmatprep.subr.bf16.mxu0 %v6132
  %6577 = vmatpush1.bf16.msra.mxu0 %v6131
  %6578 = vmatprep.subr.bf16.mxu0 %v6136
  %6579 = vmatpush1.bf16.msra.mxu0 %v6135
  %6580 = vmatprep.subr.bf16.mxu0 %v6140
  %6581 = vmatpush1.bf16.msra.mxu0 %v6139
  %6582 = vmatprep.subr.bf16.mxu0 %v6144
  %6583 = vmatpush1.bf16.msra.mxu0 %v6143
  %6584 = vmatprep.subr.bf16.mxu0 %v6148
  %6585 = vmatpush1.bf16.msra.mxu0 %v6147
  %6586 = vmatprep.subr.bf16.mxu0 %v6152
  %6587 = vmatpush1.bf16.msra.mxu0 %v6151
  %6588 = vmatprep.subr.bf16.mxu0 %v6156
  %6589 = vmatpush1.bf16.msra.mxu0 %v6155
  %6590 = vmatprep.subr.bf16.mxu0 %v6160
  %6591 = vmatpush1.bf16.msra.mxu0 %v6159
  %6592 = vmatprep.subr.bf16.mxu0 %v6164
  %6593 = vmatpush1.bf16.msra.mxu0 %v6163
  %6594 = vmatprep.subr.bf16.mxu0 %v6168
  %6595 = vmatpush1.bf16.msra.mxu0 %v6167
  %6596 = vmatprep.subr.bf16.mxu0 %v6172
  %6597 = vmatpush1.bf16.msra.mxu0 %v6171
  %6598 = vmatprep.subr.bf16.mxu0 %v6176
  %6599 = vmatpush1.bf16.msra.mxu0 %v6175
  %6600 = vmatprep.subr.bf16.mxu0 %v6180
  %6601 = vmatpush1.bf16.msra.mxu0 %v6179
  %6602 = vmatprep.subr.bf16.mxu0 %v6184
  %6603 = vmatpush1.bf16.msra.mxu0 %v6183
  %6604 = vmatprep.mubr.bf16.mxu0 %v4884
  %6605 = vmatmul.mubr.bf16.gmra.mrb[0].mxu0 %v4883
  %v6606 = vpop.f32.mrb[0].mxu0
  %v6607 = vadd.f32 %v6564, %v6606
  %v6608 = vpop.f32.mrb[0].mxu0
  %v6609 = vadd.f32 %v6566, %v6608
  %v6610 = vpop.f32.mrb[0].mxu0
  %v6611 = vadd.f32 %v6568, %v6610
  %v6612 = vpop.f32.mrb[0].mxu0
  %v6613 = vadd.f32 %v6570, %v6612
  %6614 = vdwg.mxu0
  %6615 = vmatprep.subr.bf16.mxu0 %v5934
  %6616 = vmatpush1.bf16.msra.mxu0 %v5933
  %6617 = vmatprep.subr.bf16.mxu0 %v5938
  %6618 = vmatpush1.bf16.msra.mxu0 %v5937
  %6619 = vmatprep.subr.bf16.mxu0 %v5942
  %6620 = vmatpush1.bf16.msra.mxu0 %v5941
  %6621 = vmatprep.subr.bf16.mxu0 %v5946
  %6622 = vmatpush1.bf16.msra.mxu0 %v5945
  %6623 = vmatprep.subr.bf16.mxu0 %v5950
  %6624 = vmatpush1.bf16.msra.mxu0 %v5949
  %6625 = vmatprep.subr.bf16.mxu0 %v5954
  %6626 = vmatpush1.bf16.msra.mxu0 %v5953
  %6627 = vmatprep.subr.bf16.mxu0 %v5958
  %6628 = vmatpush1.bf16.msra.mxu0 %v5957
  %6629 = vmatprep.subr.bf16.mxu0 %v5962
  %6630 = vmatpush1.bf16.msra.mxu0 %v5961
  %6631 = vmatprep.subr.bf16.mxu0 %v5966
  %6632 = vmatpush1.bf16.msra.mxu0 %v5965
  %6633 = vmatprep.subr.bf16.mxu0 %v5970
  %6634 = vmatpush1.bf16.msra.mxu0 %v5969
  %6635 = vmatprep.subr.bf16.mxu0 %v5974
  %6636 = vmatpush1.bf16.msra.mxu0 %v5973
  %6637 = vmatprep.subr.bf16.mxu0 %v5978
  %6638 = vmatpush1.bf16.msra.mxu0 %v5977
  %6639 = vmatprep.subr.bf16.mxu0 %v5982
  %6640 = vmatpush1.bf16.msra.mxu0 %v5981
  %6641 = vmatprep.subr.bf16.mxu0 %v5986
  %6642 = vmatpush1.bf16.msra.mxu0 %v5985
  %6643 = vmatprep.subr.bf16.mxu0 %v5990
  %6644 = vmatpush1.bf16.msra.mxu0 %v5989
  %6645 = vmatprep.subr.bf16.mxu0 %v5994
  %6646 = vmatpush1.bf16.msra.mxu0 %v5993
  %6647 = vmatprep.mubr.bf16.mxu0 %v4878
  %6648 = vmatmul.mubr.bf16.gmra.mrb[0].mxu0 %v4877
  %v6649 = vpop.f32.mrb[0].mxu0
  %v6650 = vadd.f32 %v5154, %v6649
  %v6651 = vpop.f32.mrb[0].mxu0
  %v6652 = vadd.f32 %v5158, %v6651
  %v6653 = vpop.f32.mrb[0].mxu0
  %v6654 = vadd.f32 %v5154, %v6653
  %v6655 = vpop.f32.mrb[0].mxu0
  %v6656 = vadd.f32 %v5158, %v6655
  %6657 = vdwg.mxu0
  %6658 = vmatprep.subr.bf16.mxu0 %v5998
  %6659 = vmatpush1.bf16.msra.mxu0 %v5997
  %6660 = vmatprep.subr.bf16.mxu0 %v6002
  %6661 = vmatpush1.bf16.msra.mxu0 %v6001
  %6662 = vmatprep.subr.bf16.mxu0 %v6006
  %6663 = vmatpush1.bf16.msra.mxu0 %v6005
  %6664 = vmatprep.subr.bf16.mxu0 %v6010
  %6665 = vmatpush1.bf16.msra.mxu0 %v6009
  %6666 = vmatprep.subr.bf16.mxu0 %v6014
  %6667 = vmatpush1.bf16.msra.mxu0 %v6013
  %6668 = vmatprep.subr.bf16.mxu0 %v6018
  %6669 = vmatpush1.bf16.msra.mxu0 %v6017
  %6670 = vmatprep.subr.bf16.mxu0 %v6022
  %6671 = vmatpush1.bf16.msra.mxu0 %v6021
  %6672 = vmatprep.subr.bf16.mxu0 %v6026
  %6673 = vmatpush1.bf16.msra.mxu0 %v6025
  %6674 = vmatprep.subr.bf16.mxu0 %v6030
  %6675 = vmatpush1.bf16.msra.mxu0 %v6029
  %6676 = vmatprep.subr.bf16.mxu0 %v6034
  %6677 = vmatpush1.bf16.msra.mxu0 %v6033
  %6678 = vmatprep.subr.bf16.mxu0 %v6038
  %6679 = vmatpush1.bf16.msra.mxu0 %v6037
  %6680 = vmatprep.subr.bf16.mxu0 %v6042
  %6681 = vmatpush1.bf16.msra.mxu0 %v6041
  %6682 = vmatprep.subr.bf16.mxu0 %v6046
  %6683 = vmatpush1.bf16.msra.mxu0 %v6045
  %6684 = vmatprep.subr.bf16.mxu0 %v6050
  %6685 = vmatpush1.bf16.msra.mxu0 %v6049
  %6686 = vmatprep.subr.bf16.mxu0 %v6054
  %6687 = vmatpush1.bf16.msra.mxu0 %v6053
  %6688 = vmatprep.subr.bf16.mxu0 %v6058
  %6689 = vmatpush1.bf16.msra.mxu0 %v6057
  %6690 = vmatprep.mubr.bf16.mxu0 %v4880
  %6691 = vmatmul.mubr.bf16.gmra.mrb[0].mxu0 %v4879
  %v6692 = vpop.f32.mrb[0].mxu0
  %v6693 = vadd.f32 %v6650, %v6692
  %v6694 = vpop.f32.mrb[0].mxu0
  %v6695 = vadd.f32 %v6652, %v6694
  %v6696 = vpop.f32.mrb[0].mxu0
  %v6697 = vadd.f32 %v6654, %v6696
  %v6698 = vpop.f32.mrb[0].mxu0
  %v6699 = vadd.f32 %v6656, %v6698
  %6700 = vdwg.mxu0
  %6701 = vmatprep.subr.bf16.mxu0 %v6062
  %6702 = vmatpush1.bf16.msra.mxu0 %v6061
  %6703 = vmatprep.subr.bf16.mxu0 %v6066
  %6704 = vmatpush1.bf16.msra.mxu0 %v6065
  %6705 = vmatprep.subr.bf16.mxu0 %v6070
  %6706 = vmatpush1.bf16.msra.mxu0 %v6069
  %6707 = vmatprep.subr.bf16.mxu0 %v6074
  %6708 = vmatpush1.bf16.msra.mxu0 %v6073
  %6709 = vmatprep.subr.bf16.mxu0 %v6078
  %6710 = vmatpush1.bf16.msra.mxu0 %v6077
  %6711 = vmatprep.subr.bf16.mxu0 %v6082
  %6712 = vmatpush1.bf16.msra.mxu0 %v6081
  %6713 = vmatprep.subr.bf16.mxu0 %v6086
  %6714 = vmatpush1.bf16.msra.mxu0 %v6085
  %6715 = vmatprep.subr.bf16.mxu0 %v6090
  %6716 = vmatpush1.bf16.msra.mxu0 %v6089
  %6717 = vmatprep.subr.bf16.mxu0 %v6094
  %6718 = vmatpush1.bf16.msra.mxu0 %v6093
  %6719 = vmatprep.subr.bf16.mxu0 %v6098
  %6720 = vmatpush1.bf16.msra.mxu0 %v6097
  %6721 = vmatprep.subr.bf16.mxu0 %v6102
  %6722 = vmatpush1.bf16.msra.mxu0 %v6101
  %6723 = vmatprep.subr.bf16.mxu0 %v6106
  %6724 = vmatpush1.bf16.msra.mxu0 %v6105
  %6725 = vmatprep.subr.bf16.mxu0 %v6110
  %6726 = vmatpush1.bf16.msra.mxu0 %v6109
  %6727 = vmatprep.subr.bf16.mxu0 %v6114
  %6728 = vmatpush1.bf16.msra.mxu0 %v6113
  %6729 = vmatprep.subr.bf16.mxu0 %v6118
  %6730 = vmatpush1.bf16.msra.mxu0 %v6117
  %6731 = vmatprep.subr.bf16.mxu0 %v6122
  %6732 = vmatpush1.bf16.msra.mxu0 %v6121
  %6733 = vmatprep.mubr.bf16.mxu0 %v4882
  %6734 = vmatmul.mubr.bf16.gmra.mrb[0].mxu0 %v4881
  %v6735 = vpop.f32.mrb[0].mxu0
  %v6736 = vadd.f32 %v6693, %v6735
  %v6737 = vpop.f32.mrb[0].mxu0
  %v6738 = vadd.f32 %v6695, %v6737
  %v6739 = vpop.f32.mrb[0].mxu0
  %v6740 = vadd.f32 %v6697, %v6739
  %v6741 = vpop.f32.mrb[0].mxu0
  %v6742 = vadd.f32 %v6699, %v6741
  %6743 = vdwg.mxu0
  %6744 = vmatprep.subr.bf16.mxu0 %v6126
  %6745 = vmatpush1.bf16.msra.mxu0 %v6125
  %6746 = vmatprep.subr.bf16.mxu0 %v6130
  %6747 = vmatpush1.bf16.msra.mxu0 %v6129
  %6748 = vmatprep.subr.bf16.mxu0 %v6134
  %6749 = vmatpush1.bf16.msra.mxu0 %v6133
  %6750 = vmatprep.subr.bf16.mxu0 %v6138
  %6751 = vmatpush1.bf16.msra.mxu0 %v6137
  %6752 = vmatprep.subr.bf16.mxu0 %v6142
  %6753 = vmatpush1.bf16.msra.mxu0 %v6141
  %6754 = vmatprep.subr.bf16.mxu0 %v6146
  %6755 = vmatpush1.bf16.msra.mxu0 %v6145
  %6756 = vmatprep.subr.bf16.mxu0 %v6150
  %6757 = vmatpush1.bf16.msra.mxu0 %v6149
  %6758 = vmatprep.subr.bf16.mxu0 %v6154
  %6759 = vmatpush1.bf16.msra.mxu0 %v6153
  %6760 = vmatprep.subr.bf16.mxu0 %v6158
  %6761 = vmatpush1.bf16.msra.mxu0 %v6157
  %6762 = vmatprep.subr.bf16.mxu0 %v6162
  %6763 = vmatpush1.bf16.msra.mxu0 %v6161
  %6764 = vmatprep.subr.bf16.mxu0 %v6166
  %6765 = vmatpush1.bf16.msra.mxu0 %v6165
  %6766 = vmatprep.subr.bf16.mxu0 %v6170
  %6767 = vmatpush1.bf16.msra.mxu0 %v6169
  %6768 = vmatprep.subr.bf16.mxu0 %v6174
  %6769 = vmatpush1.bf16.msra.mxu0 %v6173
  %6770 = vmatprep.subr.bf16.mxu0 %v6178
  %6771 = vmatpush1.bf16.msra.mxu0 %v6177
  %6772 = vmatprep.subr.bf16.mxu0 %v6182
  %6773 = vmatpush1.bf16.msra.mxu0 %v6181
  %6774 = vmatprep.subr.bf16.mxu0 %v6186
  %6775 = vmatpush1.bf16.msra.mxu0 %v6185
  %6776 = vmatprep.mubr.bf16.mxu0 %v4884
  %6777 = vmatmul.mubr.bf16.gmra.mrb[0].mxu0 %v4883
  %v6778 = vpop.f32.mrb[0].mxu0
  %v6779 = vadd.f32 %v6736, %v6778
  %v6780 = vpop.f32.mrb[0].mxu0
  %v6781 = vadd.f32 %v6738, %v6780
  %v6782 = vpop.f32.mrb[0].mxu0
  %v6783 = vadd.f32 %v6740, %v6782
  %v6784 = vpop.f32.mrb[0].mxu0
  %v6785 = vadd.f32 %v6742, %v6784
  %6786 = vdwg.mxu0
  %v6787 = vmax.f32 %v6607, 0.0
  %v6788 = vmax.f32 %v6609, 0.0
  %v6789 = vmax.f32 %v6779, 0.0
  %v6790 = vmax.f32 %v6781, 0.0
  %v6791 = vmax.f32 %v6611, 0.0
  %v6792 = vmax.f32 %v6613, 0.0
  %v6793 = vmax.f32 %v6783, 0.0
  %v6794 = vmax.f32 %v6785, 0.0
  %v6795 = vpack.c.bf16 %v6791, %v6787
  %v6796 = vpack.c.bf16 %v6792, %v6788
  %v6797 = vpack.c.bf16 %v6793, %v6789
  %v6798 = vpack.c.bf16 %v6794, %v6790
  %v6799 = vld [vmem:[%s5] sm:$0xf]
  %v6800 = vld [vmem:[%s5 + $0x4] sm:$0xf]
  %v6801 = vld [vmem:[%s5 + $0x8] sm:$0xf]
  %v6802 = vld [vmem:[%s5 + $0xc] sm:$0xf]
  %v6803 = vld [vmem:[%s5 + $0x10] sm:$0xf]
  %v6804 = vld [vmem:[%s5 + $0x14] sm:$0xf]
  %v6805 = vld [vmem:[%s5 + $0x18] sm:$0xf]
  %v6806 = vld [vmem:[%s5 + $0x1c] sm:$0xf]
  %v6807 = vld [vmem:[%s5 + $0x20] sm:$0xf]
  %v6808 = vld [vmem:[%s5 + $0x24] sm:$0xf]
  %v6809 = vld [vmem:[%s5 + $0x28] sm:$0xf]
  %v6810 = vld [vmem:[%s5 + $0x2c] sm:$0xf]
  %v6811 = vld [vmem:[%s5 + $0x30] sm:$0xf]
  %v6812 = vld [vmem:[%s5 + $0x34] sm:$0xf]
  %v6813 = vld [vmem:[%s5 + $0x38] sm:$0xf]
  %v6814 = vld [vmem:[%s5 + $0x3c] sm:$0xf]
  %v6815 = vld [vmem:[%s5 + $0x40] sm:$0xf]
  %v6816 = vld [vmem:[%s5 + $0x44] sm:$0xf]
  %v6817 = vld [vmem:[%s5 + $0x48] sm:$0xf]
  %v6818 = vld [vmem:[%s5 + $0x4c] sm:$0xf]
  %v6819 = vld [vmem:[%s5 + $0x50] sm:$0xf]
  %v6820 = vld [vmem:[%s5 + $0x54] sm:$0xf]
  %v6821 = vld [vmem:[%s5 + $0x58] sm:$0xf]
  %v6822 = vld [vmem:[%s5 + $0x5c] sm:$0xf]
  %v6823 = vld [vmem:[%s5 + $0x60] sm:$0xf]
  %v6824 = vld [vmem:[%s5 + $0x64] sm:$0xf]
  %v6825 = vld [vmem:[%s5 + $0x68] sm:$0xf]
  %v6826 = vld [vmem:[%s5 + $0x6c] sm:$0xf]
  %v6827 = vld [vmem:[%s5 + $0x70] sm:$0xf]
  %v6828 = vld [vmem:[%s5 + $0x74] sm:$0xf]
  %v6829 = vld [vmem:[%s5 + $0x78] sm:$0xf]
  %v6830 = vld [vmem:[%s5 + $0x7c] sm:$0xf]
  %v6831 = vld [vmem:[%s5 + $0x80] sm:$0xf]
  %v6832 = vld [vmem:[%s5 + $0x84] sm:$0xf]
  %v6833 = vld [vmem:[%s5 + $0x88] sm:$0xf]
  %v6834 = vld [vmem:[%s5 + $0x8c] sm:$0xf]
  %v6835 = vld [vmem:[%s5 + $0x90] sm:$0xf]
  %v6836 = vld [vmem:[%s5 + $0x94] sm:$0xf]
  %v6837 = vld [vmem:[%s5 + $0x98] sm:$0xf]
  %v6838 = vld [vmem:[%s5 + $0x9c] sm:$0xf]
  %v6839 = vld [vmem:[%s5 + $0xa0] sm:$0xf]
  %v6840 = vld [vmem:[%s5 + $0xa4] sm:$0xf]
  %v6841 = vld [vmem:[%s5 + $0xa8] sm:$0xf]
  %v6842 = vld [vmem:[%s5 + $0xac] sm:$0xf]
  %v6843 = vld [vmem:[%s5 + $0xb0] sm:$0xf]
  %v6844 = vld [vmem:[%s5 + $0xb4] sm:$0xf]
  %v6845 = vld [vmem:[%s5 + $0xb8] sm:$0xf]
  %v6846 = vld [vmem:[%s5 + $0xbc] sm:$0xf]
  %v6847 = vld [vmem:[%s5 + $0xc0] sm:$0xf]
  %v6848 = vld [vmem:[%s5 + $0xc4] sm:$0xf]
  %v6849 = vld [vmem:[%s5 + $0xc8] sm:$0xf]
  %v6850 = vld [vmem:[%s5 + $0xcc] sm:$0xf]
  %v6851 = vld [vmem:[%s5 + $0xd0] sm:$0xf]
  %v6852 = vld [vmem:[%s5 + $0xd4] sm:$0xf]
  %v6853 = vld [vmem:[%s5 + $0xd8] sm:$0xf]
  %v6854 = vld [vmem:[%s5 + $0xdc] sm:$0xf]
  %v6855 = vld [vmem:[%s5 + $0xe0] sm:$0xf]
  %v6856 = vld [vmem:[%s5 + $0xe4] sm:$0xf]
  %v6857 = vld [vmem:[%s5 + $0xe8] sm:$0xf]
  %v6858 = vld [vmem:[%s5 + $0xec] sm:$0xf]
  %v6859 = vld [vmem:[%s5 + $0xf0] sm:$0xf]
  %v6860 = vld [vmem:[%s5 + $0xf4] sm:$0xf]
  %v6861 = vld [vmem:[%s5 + $0xf8] sm:$0xf]
  %v6862 = vld [vmem:[%s5 + $0xfc] sm:$0xf]
  %v6863 = vld [vmem:[%s6] sm:$0x1]
  %v6865 = vlaneseq
  %v6866 = vshrl.u32 %v6865, 7
  %v6867 = vsub.s32 0, %v6866
  %v6868 = vrot.slane %v6863, %v6867
  %v6934 = vunpack.c.l.b16 %v6799
  %v6935 = vunpack.c.l.b16 %v6800
  %v6936 = vunpack.c.l.b16 %v6801
  %v6937 = vunpack.c.l.b16 %v6802
  %v6938 = vunpack.c.l.b16 %v6803
  %v6939 = vunpack.c.l.b16 %v6804
  %v6940 = vunpack.c.l.b16 %v6805
  %v6941 = vunpack.c.l.b16 %v6806
  %v6942 = vunpack.c.l.b16 %v6807
  %v6943 = vunpack.c.l.b16 %v6808
  %v6944 = vunpack.c.l.b16 %v6809
  %v6945 = vunpack.c.l.b16 %v6810
  %v6946 = vunpack.c.l.b16 %v6811
  %v6947 = vunpack.c.l.b16 %v6812
  %v6948 = vunpack.c.l.b16 %v6813
  %v6949 = vunpack.c.l.b16 %v6814
  %v6950 = vunpack.c.l.b16 %v6815
  %v6951 = vunpack.c.l.b16 %v6816
  %v6952 = vunpack.c.l.b16 %v6817
  %v6953 = vunpack.c.l.b16 %v6818
  %v6954 = vunpack.c.l.b16 %v6819
  %v6955 = vunpack.c.l.b16 %v6820
  %v6956 = vunpack.c.l.b16 %v6821
  %v6957 = vunpack.c.l.b16 %v6822
  %v6958 = vunpack.c.l.b16 %v6823
  %v6959 = vunpack.c.l.b16 %v6824
  %v6960 = vunpack.c.l.b16 %v6825
  %v6961 = vunpack.c.l.b16 %v6826
  %v6962 = vunpack.c.l.b16 %v6827
  %v6963 = vunpack.c.l.b16 %v6828
  %v6964 = vunpack.c.l.b16 %v6829
  %v6965 = vunpack.c.l.b16 %v6830
  %v6966 = vunpack.c.l.b16 %v6831
  %v6967 = vunpack.c.l.b16 %v6832
  %v6968 = vunpack.c.l.b16 %v6833
  %v6969 = vunpack.c.l.b16 %v6834
  %v6970 = vunpack.c.l.b16 %v6835
  %v6971 = vunpack.c.l.b16 %v6836
  %v6972 = vunpack.c.l.b16 %v6837
  %v6973 = vunpack.c.l.b16 %v6838
  %v6974 = vunpack.c.l.b16 %v6839
  %v6975 = vunpack.c.l.b16 %v6840
  %v6976 = vunpack.c.l.b16 %v6841
  %v6977 = vunpack.c.l.b16 %v6842
  %v6978 = vunpack.c.l.b16 %v6843
  %v6979 = vunpack.c.l.b16 %v6844
  %v6980 = vunpack.c.l.b16 %v6845
  %v6981 = vunpack.c.l.b16 %v6846
  %v6982 = vunpack.c.l.b16 %v6847
  %v6983 = vunpack.c.l.b16 %v6848
  %v6984 = vunpack.c.l.b16 %v6849
  %v6985 = vunpack.c.l.b16 %v6850
  %v6986 = vunpack.c.l.b16 %v6851
  %v6987 = vunpack.c.l.b16 %v6852
  %v6988 = vunpack.c.l.b16 %v6853
  %v6989 = vunpack.c.l.b16 %v6854
  %v6990 = vunpack.c.l.b16 %v6855
  %v6991 = vunpack.c.l.b16 %v6856
  %v6992 = vunpack.c.l.b16 %v6857
  %v6993 = vunpack.c.l.b16 %v6858
  %v6994 = vunpack.c.l.b16 %v6859
  %v6995 = vunpack.c.l.b16 %v6860
  %v6996 = vunpack.c.l.b16 %v6861
  %v6997 = vunpack.c.l.b16 %v6862
  %v6998 = vpack.c.b16 %v6935, %v6934
  %v6999 = vpack.c.b16 %v6937, %v6936
  %v7000 = vpack.c.b16 %v6939, %v6938
  %v7001 = vpack.c.b16 %v6941, %v6940
  %v7002 = vpack.c.b16 %v6943, %v6942
  %v7003 = vpack.c.b16 %v6945, %v6944
  %v7004 = vpack.c.b16 %v6947, %v6946
  %v7005 = vpack.c.b16 %v6949, %v6948
  %v7006 = vpack.c.b16 %v6951, %v6950
  %v7007 = vpack.c.b16 %v6953, %v6952
  %v7008 = vpack.c.b16 %v6955, %v6954
  %v7009 = vpack.c.b16 %v6957, %v6956
  %v7010 = vpack.c.b16 %v6959, %v6958
  %v7011 = vpack.c.b16 %v6961, %v6960
  %v7012 = vpack.c.b16 %v6963, %v6962
  %v7013 = vpack.c.b16 %v6965, %v6964
  %v7014 = vpack.c.b16 %v6967, %v6966
  %v7015 = vpack.c.b16 %v6969, %v6968
  %v7016 = vpack.c.b16 %v6971, %v6970
  %v7017 = vpack.c.b16 %v6973, %v6972
  %v7018 = vpack.c.b16 %v6975, %v6974
  %v7019 = vpack.c.b16 %v6977, %v6976
  %v7020 = vpack.c.b16 %v6979, %v6978
  %v7021 = vpack.c.b16 %v6981, %v6980
  %v7022 = vpack.c.b16 %v6983, %v6982
  %v7023 = vpack.c.b16 %v6985, %v6984
  %v7024 = vpack.c.b16 %v6987, %v6986
  %v7025 = vpack.c.b16 %v6989, %v6988
  %v7026 = vpack.c.b16 %v6991, %v6990
  %v7027 = vpack.c.b16 %v6993, %v6992
  %v7028 = vpack.c.b16 %v6995, %v6994
  %v7029 = vpack.c.b16 %v6997, %v6996
  %7062 = vmatprep.subr.bf16.mxu0 0
  %7063 = vmatpush1.bf16.msra.mxu0 %v6998
  %7064 = vmatprep.subr.bf16.mxu0 0
  %7065 = vmatpush1.bf16.msra.mxu0 %v6999
  %7066 = vmatprep.subr.bf16.mxu0 0
  %7067 = vmatpush1.bf16.msra.mxu0 %v7000
  %7068 = vmatprep.subr.bf16.mxu0 0
  %7069 = vmatpush1.bf16.msra.mxu0 %v7001
  %7070 = vmatprep.subr.bf16.mxu0 0
  %7071 = vmatpush1.bf16.msra.mxu0 %v7002
  %7072 = vmatprep.subr.bf16.mxu0 0
  %7073 = vmatpush1.bf16.msra.mxu0 %v7003
  %7074 = vmatprep.subr.bf16.mxu0 0
  %7075 = vmatpush1.bf16.msra.mxu0 %v7004
  %7076 = vmatprep.subr.bf16.mxu0 0
  %7077 = vmatpush1.bf16.msra.mxu0 %v7005
  %7078 = vmatprep.subr.bf16.mxu0 0
  %7079 = vmatpush1.bf16.msra.mxu0 %v7006
  %7080 = vmatprep.subr.bf16.mxu0 0
  %7081 = vmatpush1.bf16.msra.mxu0 %v7007
  %7082 = vmatprep.subr.bf16.mxu0 0
  %7083 = vmatpush1.bf16.msra.mxu0 %v7008
  %7084 = vmatprep.subr.bf16.mxu0 0
  %7085 = vmatpush1.bf16.msra.mxu0 %v7009
  %7086 = vmatprep.subr.bf16.mxu0 0
  %7087 = vmatpush1.bf16.msra.mxu0 %v7010
  %7088 = vmatprep.subr.bf16.mxu0 0
  %7089 = vmatpush1.bf16.msra.mxu0 %v7011
  %7090 = vmatprep.subr.bf16.mxu0 0
  %7091 = vmatpush1.bf16.msra.mxu0 %v7012
  %7092 = vmatprep.subr.bf16.mxu0 0
  %7093 = vmatpush1.bf16.msra.mxu0 %v7013
  %7094 = vmatprep.mubr.bf16.mxu0 %v6796
  %7095 = vmatmul.mubr.bf16.gmra.mrb[0].mxu0 %v6795
  %v7096 = vpop.f32.mrb[0].mxu0
  %v7097 = vadd.f32 %v6868, %v7096
  %v7098 = vpop.f32.mrb[0].mxu0
  %v7099 = vpop.f32.mrb[0].mxu0
  %v7100 = vadd.f32 %v6868, %v7099
  %v7101 = vpop.f32.mrb[0].mxu0
  %7102 = vdwg.mxu0
  %7103 = vmatprep.subr.bf16.mxu0 0
  %7104 = vmatpush1.bf16.msra.mxu0 %v7014
  %7105 = vmatprep.subr.bf16.mxu0 0
  %7106 = vmatpush1.bf16.msra.mxu0 %v7015
  %7107 = vmatprep.subr.bf16.mxu0 0
  %7108 = vmatpush1.bf16.msra.mxu0 %v7016
  %7109 = vmatprep.subr.bf16.mxu0 0
  %7110 = vmatpush1.bf16.msra.mxu0 %v7017
  %7111 = vmatprep.subr.bf16.mxu0 0
  %7112 = vmatpush1.bf16.msra.mxu0 %v7018
  %7113 = vmatprep.subr.bf16.mxu0 0
  %7114 = vmatpush1.bf16.msra.mxu0 %v7019
  %7115 = vmatprep.subr.bf16.mxu0 0
  %7116 = vmatpush1.bf16.msra.mxu0 %v7020
  %7117 = vmatprep.subr.bf16.mxu0 0
  %7118 = vmatpush1.bf16.msra.mxu0 %v7021
  %7119 = vmatprep.subr.bf16.mxu0 0
  %7120 = vmatpush1.bf16.msra.mxu0 %v7022
  %7121 = vmatprep.subr.bf16.mxu0 0
  %7122 = vmatpush1.bf16.msra.mxu0 %v7023
  %7123 = vmatprep.subr.bf16.mxu0 0
  %7124 = vmatpush1.bf16.msra.mxu0 %v7024
  %7125 = vmatprep.subr.bf16.mxu0 0
  %7126 = vmatpush1.bf16.msra.mxu0 %v7025
  %7127 = vmatprep.subr.bf16.mxu0 0
  %7128 = vmatpush1.bf16.msra.mxu0 %v7026
  %7129 = vmatprep.subr.bf16.mxu0 0
  %7130 = vmatpush1.bf16.msra.mxu0 %v7027
  %7131 = vmatprep.subr.bf16.mxu0 0
  %7132 = vmatpush1.bf16.msra.mxu0 %v7028
  %7133 = vmatprep.subr.bf16.mxu0 0
  %7134 = vmatpush1.bf16.msra.mxu0 %v7029
  %7135 = vmatprep.mubr.bf16.mxu0 %v6798
  %7136 = vmatmul.mubr.bf16.gmra.mrb[0].mxu0 %v6797
  %v7137 = vpop.f32.mrb[0].mxu0
  %v7138 = vadd.f32 %v7097, %v7137
  %v7139 = vpop.f32.mrb[0].mxu0
  %v7140 = vpop.f32.mrb[0].mxu0
  %v7141 = vadd.f32 %v7100, %v7140
  %v7142 = vpop.f32.mrb[0].mxu0
  %7143 = vdwg.mxu0
  %v7144 = vmax.f32 %v7138, 0.0
  %v7145 = vmax.f32 %v7141, 0.0
  %v7146 = vpack.c.bf16 %v7145, %v7144
  %v7147 = vld [vmem:[%s7] sm:$0xf]
  %v7148 = vld [vmem:[%s7 + $0x4] sm:$0xf]
  %v7149 = vld [vmem:[%s7 + $0x8] sm:$0xf]
  %v7150 = vld [vmem:[%s7 + $0xc] sm:$0xf]
  %v7151 = vld [vmem:[%s7 + $0x10] sm:$0xf]
  %v7152 = vld [vmem:[%s7 + $0x14] sm:$0xf]
  %v7153 = vld [vmem:[%s7 + $0x18] sm:$0xf]
  %v7154 = vld [vmem:[%s7 + $0x1c] sm:$0xf]
  %v7155 = vld [vmem:[%s7 + $0x20] sm:$0xf]
  %v7156 = vld [vmem:[%s7 + $0x24] sm:$0xf]
  %v7157 = vld [vmem:[%s7 + $0x28] sm:$0xf]
  %v7158 = vld [vmem:[%s7 + $0x2c] sm:$0xf]
  %v7159 = vld [vmem:[%s7 + $0x30] sm:$0xf]
  %v7160 = vld [vmem:[%s7 + $0x34] sm:$0xf]
  %v7161 = vld [vmem:[%s7 + $0x38] sm:$0xf]
  %v7162 = vld [vmem:[%s7 + $0x3c] sm:$0xf]
  %v7163 = vld [vmem:[%s8] sm:$0x1]
  %v7165 = vlaneseq
  %v7166 = vshrl.u32 %v7165, 7
  %v7167 = vsub.s32 0, %v7166
  %v7168 = vrot.slane %v7163, %v7167
  %v7186 = vunpack.c.l.b16 %v7147
  %v7187 = vunpack.c.l.b16 %v7148
  %v7188 = vunpack.c.l.b16 %v7149
  %v7189 = vunpack.c.l.b16 %v7150
  %v7190 = vunpack.c.l.b16 %v7151
  %v7191 = vunpack.c.l.b16 %v7152
  %v7192 = vunpack.c.l.b16 %v7153
  %v7193 = vunpack.c.l.b16 %v7154
  %v7194 = vunpack.c.l.b16 %v7155
  %v7195 = vunpack.c.l.b16 %v7156
  %v7196 = vunpack.c.l.b16 %v7157
  %v7197 = vunpack.c.l.b16 %v7158
  %v7198 = vunpack.c.l.b16 %v7159
  %v7199 = vunpack.c.l.b16 %v7160
  %v7200 = vunpack.c.l.b16 %v7161
  %v7201 = vunpack.c.l.b16 %v7162
  %v7202 = vpack.c.b16 %v7187, %v7186
  %v7203 = vpack.c.b16 %v7189, %v7188
  %v7204 = vpack.c.b16 %v7191, %v7190
  %v7205 = vpack.c.b16 %v7193, %v7192
  %v7206 = vpack.c.b16 %v7195, %v7194
  %v7207 = vpack.c.b16 %v7197, %v7196
  %v7208 = vpack.c.b16 %v7199, %v7198
  %v7209 = vpack.c.b16 %v7201, %v7200
  %7218 = vmatprep.subr.bf16.mxu0 0
  %7219 = vmatpush1.bf16.msra.mxu0 %v7202
  %7220 = vmatprep.subr.bf16.mxu0 0
  %7221 = vmatpush1.bf16.msra.mxu0 %v7203
  %7222 = vmatprep.subr.bf16.mxu0 0
  %7223 = vmatpush1.bf16.msra.mxu0 %v7204
  %7224 = vmatprep.subr.bf16.mxu0 0
  %7225 = vmatpush1.bf16.msra.mxu0 %v7205
  %7226 = vmatprep.subr.bf16.mxu0 0
  %7227 = vmatpush1.bf16.msra.mxu0 %v7206
  %7228 = vmatprep.subr.bf16.mxu0 0
  %7229 = vmatpush1.bf16.msra.mxu0 %v7207
  %7230 = vmatprep.subr.bf16.mxu0 0
  %7231 = vmatpush1.bf16.msra.mxu0 %v7208
  %7232 = vmatprep.subr.bf16.mxu0 0
  %7233 = vmatpush1.bf16.msra.mxu0 %v7209
  %7234 = vmatprep.subr.bf16.mxu0 0
  %7235 = vmatpush1.bf16.msra.mxu0 0
  %7236 = vmatprep.subr.bf16.mxu0 0
  %7237 = vmatpush1.bf16.msra.mxu0 0
  %7238 = vmatprep.subr.bf16.mxu0 0
  %7239 = vmatpush1.bf16.msra.mxu0 0
  %7240 = vmatprep.subr.bf16.mxu0 0
  %7241 = vmatpush1.bf16.msra.mxu0 0
  %7242 = vmatprep.subr.bf16.mxu0 0
  %7243 = vmatpush1.bf16.msra.mxu0 0
  %7244 = vmatprep.subr.bf16.mxu0 0
  %7245 = vmatpush1.bf16.msra.mxu0 0
  %7246 = vmatprep.subr.bf16.mxu0 0
  %7247 = vmatpush1.bf16.msra.mxu0 0
  %7248 = vmatprep.subr.bf16.mxu0 0
  %7249 = vmatpush1.bf16.msra.mxu0 0
  %7250 = vmatprep.mubr.bf16.mxu0 0
  %7251 = vmatmul.mubr.bf16.gmra.mrb[0].mxu0 %v7146
  %v7252 = vpop.f32.mrb[0].mxu0
  %v7253 = vadd.f32 %v7168, %v7252
  %v7254 = vpop.f32.mrb[0].mxu0
  %v7255 = vpop.f32.mrb[0].mxu0
  %v7256 = vadd.f32 %v7168, %v7255
  %v7257 = vpop.f32.mrb[0].mxu0
  %7258 = vdwg.mxu0
  %v7259 = vmax.f32 %v7253, 0.0
  %v7260 = vmax.f32 %v7256, 0.0
  %v7261 = vpack.c.bf16 %v7260, %v7259
  %v7262 = vld [vmem:[%s9] sm:$0xf]
  %v7263 = vld [vmem:[%s9 + $0x4] sm:$0xf]
  %v7264 = vld [vmem:[%s9 + $0x8] sm:$0xf]
  %v7265 = vld [vmem:[%s9 + $0xc] sm:$0xf]
  %v7266 = vld [vmem:[%s9 + $0x10] sm:$0xf]
  %v7267 = vld [vmem:[%s9 + $0x14] sm:$0xf]
  %v7268 = vld [vmem:[%s9 + $0x18] sm:$0xf]
  %v7269 = vld [vmem:[%s9 + $0x1c] sm:$0xf]
  %v7270 = vld [vmem:[%s9 + $0x20] sm:$0xf]
  %v7271 = vld [vmem:[%s9 + $0x24] sm:$0xf]
  %v7272 = vld [vmem:[%s9 + $0x28] sm:$0xf]
  %v7273 = vld [vmem:[%s9 + $0x2c] sm:$0xf]
  %v7274 = vld [vmem:[%s9 + $0x30] sm:$0xf]
  %v7275 = vld [vmem:[%s9 + $0x34] sm:$0xf]
  %v7276 = vld [vmem:[%s9 + $0x38] sm:$0xf]
  %v7277 = vld [vmem:[%s9 + $0x3c] sm:$0xf]
  %v7278 = vld [vmem:[%s10] sm:$0x1]
  %v7280 = vlaneseq
  %v7281 = vshrl.u32 %v7280, 7
  %v7282 = vsub.s32 0, %v7281
  %v7283 = vrot.slane %v7278, %v7282
  %v7301 = vunpack.c.l.b16 %v7262
  %v7302 = vunpack.c.l.b16 %v7263
  %v7303 = vunpack.c.l.b16 %v7264
  %v7304 = vunpack.c.l.b16 %v7265
  %v7305 = vunpack.c.l.b16 %v7266
  %v7306 = vunpack.c.l.b16 %v7267
  %v7307 = vunpack.c.l.b16 %v7268
  %v7308 = vunpack.c.l.b16 %v7269
  %v7309 = vunpack.c.l.b16 %v7270
  %v7310 = vunpack.c.l.b16 %v7271
  %v7311 = vunpack.c.l.b16 %v7272
  %v7312 = vunpack.c.l.b16 %v7273
  %v7313 = vunpack.c.l.b16 %v7274
  %v7314 = vunpack.c.l.b16 %v7275
  %v7315 = vunpack.c.l.b16 %v7276
  %v7316 = vunpack.c.l.b16 %v7277
  %v7317 = vpack.c.b16 %v7302, %v7301
  %v7318 = vpack.c.b16 %v7304, %v7303
  %v7319 = vpack.c.b16 %v7306, %v7305
  %v7320 = vpack.c.b16 %v7308, %v7307
  %v7321 = vpack.c.b16 %v7310, %v7309
  %v7322 = vpack.c.b16 %v7312, %v7311
  %v7323 = vpack.c.b16 %v7314, %v7313
  %v7324 = vpack.c.b16 %v7316, %v7315
  %7333 = vmatprep.subr.bf16.mxu0 0
  %7334 = vmatpush1.bf16.msra.mxu0 %v7317
  %7335 = vmatprep.subr.bf16.mxu0 0
  %7336 = vmatpush1.bf16.msra.mxu0 %v7318
  %7337 = vmatprep.subr.bf16.mxu0 0
  %7338 = vmatpush1.bf16.msra.mxu0 %v7319
  %7339 = vmatprep.subr.bf16.mxu0 0
  %7340 = vmatpush1.bf16.msra.mxu0 %v7320
  %7341 = vmatprep.subr.bf16.mxu0 0
  %7342 = vmatpush1.bf16.msra.mxu0 %v7321
  %7343 = vmatprep.subr.bf16.mxu0 0
  %7344 = vmatpush1.bf16.msra.mxu0 %v7322
  %7345 = vmatprep.subr.bf16.mxu0 0
  %7346 = vmatpush1.bf16.msra.mxu0 %v7323
  %7347 = vmatprep.subr.bf16.mxu0 0
  %7348 = vmatpush1.bf16.msra.mxu0 %v7324
  %7349 = vmatprep.subr.bf16.mxu0 0
  %7350 = vmatpush1.bf16.msra.mxu0 0
  %7351 = vmatprep.subr.bf16.mxu0 0
  %7352 = vmatpush1.bf16.msra.mxu0 0
  %7353 = vmatprep.subr.bf16.mxu0 0
  %7354 = vmatpush1.bf16.msra.mxu0 0
  %7355 = vmatprep.subr.bf16.mxu0 0
  %7356 = vmatpush1.bf16.msra.mxu0 0
  %7357 = vmatprep.subr.bf16.mxu0 0
  %7358 = vmatpush1.bf16.msra.mxu0 0
  %7359 = vmatprep.subr.bf16.mxu0 0
  %7360 = vmatpush1.bf16.msra.mxu0 0
  %7361 = vmatprep.subr.bf16.mxu0 0
  %7362 = vmatpush1.bf16.msra.mxu0 0
  %7363 = vmatprep.subr.bf16.mxu0 0
  %7364 = vmatpush1.bf16.msra.mxu0 0
  %7365 = vmatprep.mubr.bf16.mxu0 0
  %7366 = vmatmul.mubr.bf16.gmra.mrb[0].mxu0 %v7261
  %v7367 = vpop.f32.mrb[0].mxu0
  %v7368 = vadd.f32 %v7283, %v7367
  %v7369 = vpop.f32.mrb[0].mxu0
  %v7370 = vpop.f32.mrb[0].mxu0
  %v7371 = vadd.f32 %v7283, %v7370
  %v7372 = vpop.f32.mrb[0].mxu0
  %7373 = vdwg.mxu0
  %v7374 = vxor.u32 %v7368, 2147483648
  %v7375 = vxor.u32 %v7371, 2147483648
  %v7376 = vmul.f32 %v7374, 1.442695
  %v7377 = vpow.pop %v7376
  %v7378 = vmul.f32 %v7375, 1.442695
  %v7379 = vpow.pop %v7378
  %v7380 = vadd.f32 %v7377, 1.0
  %v7381 = vadd.f32 %v7379, 1.0
  %v7382 = vrcp.pop %v7380
  %v7383 = vmul.f32 1.0, %v7382
  %v7384 = vrcp.pop %v7381
  %v7385 = vmul.f32 1.0, %v7384
  %v7386 = vpack.c.bf16 %v7385, %v7383
  %v7388 = vunpack.c.l.b16 %v7386
  %v7389 = vunpack.c.h.b16 %v7386
  %v7390 = vpack.c.b16 %v7388, %v7388
  %v7391 = vpack.c.b16 %v7389, %v7389
  %7394 = vst [vmem:[%s11] sm:$0xf] %v7390
  %7395 = vst [vmem:[%s11 + $0x4] sm:$0xf] %v7391
  // Predicated region
  $region46: #{mlp_forward.1} parent=0 // pred_check
    _
  $region47: #{mlp_forward.1} parent=0 // pred_check_branch
    %7397 = sbr.rel (0) target = $region49
  $region48: #{mlp_forward.1} parent=0 // pred_region
    _
  $region49: #{mlp_forward.1} parent=0 // pred_fallthru
    _
  // Predicated region
  $region50: #{mlp_forward.1} parent=0 // pred_check
    _
  $region51: #{mlp_forward.1} parent=0 // pred_check_branch
    %7399 = sbr.rel (0) target = $region53
  $region52: #{mlp_forward.1} parent=0 // pred_region
    _
  $region53: #{mlp_forward.1} parent=0 // pred_fallthru
    _

</llo_original>
